<compile_context>
chip_gen: v6e
topology: v6e:2x2x1
jax: 0.10.0
libtpu: 0.0.40
codegen_flags: <defaults>
</compile_context>

<pallas_src>
import jax
import jax.numpy as jnp
from jax.experimental import pallas as pl
from jax.experimental.pallas import tpu as pltpu

# ---------------- configuration (small, consistent with the module) ------
B = 2            # batch
IMG = 28         # image spatial size (stand-in for 224)
PATCH = 14       # DINOv2 vitb14 patch size
C = 3            # RGB channels
GRID_P = IMG // PATCH            # 2
NUM_PATCHES = GRID_P * GRID_P    # 4
SEQ = NUM_PATCHES + 1            # +1 CLS token -> 5
SEQP = 8                         # sequence padded to sublane multiple
D = 32           # embed dim (stand-in for 768 == output_size)
HEADS = 4
HEAD_DIM = D // HEADS            # 8
DEPTH = 2
MLP_DIM = 4 * D                  # 128
LN_EPS = 1e-6
PATCH_K = PATCH * PATCH * C      # 588

MEAN = jnp.array([123.675, 116.28, 103.53], dtype=jnp.float32)
STD = jnp.array([58.395, 57.12, 57.375], dtype=jnp.float32)
# hoisted: per-patch-element normalize vectors, channel-fastest (ph, pw, C)
MEAN_VEC = jnp.tile(MEAN, PATCH * PATCH).reshape(1, 1, PATCH_K)
STDINV_VEC = jnp.tile(1.0 / STD, PATCH * PATCH).reshape(1, 1, PATCH_K)


# ---------------- the single fused kernel ---------------------------------
def dinov2_kernel(patches_ref, mean_ref, stdinv_ref, pw_ref, pb_ref,
                  clspos_ref, pospat_ref,
                  ln1g_ref, ln1b_ref, wqkv_ref, bqkv_ref,
                  wproj_ref, bproj_ref, g1_ref,
                  ln2g_ref, ln2b_ref, w1_ref, b1_ref, w2_ref, b2_ref, g2_ref,
                  fing_ref, finb_ref,
                  o_ref, buf_ref):
    f32 = jnp.float32

    def mm(a, w):
        # bf16 MXU matmul with f32 accumulation; weights are already bf16.
        return jnp.einsum("bsk,kd->bsd", a.astype(jnp.bfloat16), w,
                          preferred_element_type=f32)

    def layernorm(v, g, b):
        mu = jnp.mean(v, axis=-1, keepdims=True)
        vc = v - mu
        var = jnp.mean(vc * vc, axis=-1, keepdims=True)
        return vc * jax.lax.rsqrt(var + LN_EPS) * g + b

    # ---- fused Normalize((x - mean) / std) + patch-embed conv as matmul ----
    xp = (patches_ref[...] - mean_ref[...]) * stdinv_ref[...]      # (1,NP,K) f32
    tok = mm(xp, pw_ref[...]) + pb_ref[...]                        # (1,NP,D)

    # ---- assemble [CLS | patch tokens | zero pad] + positional embedding ---
    buf_ref[...] = jnp.zeros_like(buf_ref)
    buf_ref[:, 0:1, :] = clspos_ref[...]                           # CLS + pos[0]
    buf_ref[:, 1:1 + NUM_PATCHES, :] = tok + pospat_ref[...]
    x = buf_ref[...]                                               # (1,SEQP,D) f32

    # key mask for the padded sequence positions (k >= SEQ -> -inf); hoisted
    # out of the depth loop.
    kidx = jax.lax.broadcasted_iota(jnp.int32, (SEQP, SEQP), 1)
    kmask = jnp.where(kidx < SEQ, 0.0, -1e9).astype(f32)           # (SEQP,SEQP)

    scale = 1.0 / (HEAD_DIM ** 0.5)

    for d in range(DEPTH):                       # static unroll over blocks
        # ---------------- attention sub-block ----------------
        xn = layernorm(x, ln1g_ref[d], ln1b_ref[d])
        qkv = mm(xn, wqkv_ref[d]) + bqkv_ref[d]                    # (1,SEQP,3D)
        for h in range(HEADS):
            lo = h * HEAD_DIM                                      # static offsets
            qh = qkv[:, :, lo:lo + HEAD_DIM] * scale               # (1,S,hd)
            kh = qkv[:, :, D + lo:D + lo + HEAD_DIM]
            vh = qkv[:, :, 2 * D + lo:2 * D + lo + HEAD_DIM]
            s = jnp.einsum("bqe,bke->bqk", qh, kh,
                           preferred_element_type=f32) + kmask
            s = s - jnp.max(s, axis=-1, keepdims=True)
            p = jnp.exp(s)
            p = p * pl.reciprocal(jnp.sum(p, axis=-1, keepdims=True),
                                  approx=True)
            oh = jnp.einsum("bqk,bke->bqe", p, vh,
                            preferred_element_type=f32)            # (1,S,hd)
            # merge heads back into lanes of the scratch buffer
            buf_ref[:, :, lo:lo + HEAD_DIM] = oh
        # ONE merged output projection instead of per-head accumulation
        y = mm(buf_ref[...], wproj_ref[d]) + bproj_ref[d]
        x = x + g1_ref[d] * y                                      # LayerScale + res

        # ---------------- MLP sub-block ----------------
        xn2 = layernorm(x, ln2g_ref[d], ln2b_ref[d])
        hmid = mm(xn2, w1_ref[d]) + b1_ref[d]
        # TODO(synk): torch nn.GELU default is exact erf-GELU; tanh approx used here.
        hmid = jax.nn.gelu(hmid, approximate=True)
        y2 = mm(hmid, w2_ref[d]) + b2_ref[d]
        x = x + g2_ref[d] * y2

    # ---- final LayerNorm on the CLS row only; that is the encoder output ---
    o_ref[...] = layernorm(x[:, 0:1, :], fing_ref[...], finb_ref[...])


# ---------------- parameter construction (deterministic, synthetic) ------
def init_params(key):
    def nrm(k, shape, scale=0.02, dtype=jnp.float32):
        return (scale * jax.random.normal(k, shape)).astype(dtype)

    keys = jax.random.split(key, 10)
    bf16 = jnp.bfloat16
    return {
        "patch_w": nrm(keys[0], (PATCH_K, D), dtype=bf16),
        "patch_b": nrm(keys[1], (1, D)),
        "cls": nrm(keys[2], (1, 1, D)),
        "pos": nrm(keys[3], (1, SEQ, D)),
        # per-block weights stacked on a leading DEPTH axis
        "ln1_g": jnp.ones((DEPTH, 1, D), jnp.float32),
        "ln1_b": jnp.zeros((DEPTH, 1, D), jnp.float32),
        "wqkv": nrm(keys[4], (DEPTH, D, 3 * D), dtype=bf16),
        "bqkv": nrm(keys[5], (DEPTH, 1, 3 * D)),
        "wproj": nrm(keys[6], (DEPTH, D, D), dtype=bf16),
        "bproj": nrm(keys[7], (DEPTH, 1, D)),
        "gamma1": jnp.ones((DEPTH, 1, D), jnp.float32),   # LayerScale
        "ln2_g": jnp.ones((DEPTH, 1, D), jnp.float32),
        "ln2_b": jnp.zeros((DEPTH, 1, D), jnp.float32),
        "w1": nrm(keys[8], (DEPTH, D, MLP_DIM), dtype=bf16),
        "b1": jnp.zeros((DEPTH, 1, MLP_DIM), jnp.float32),
        "w2": nrm(keys[9], (DEPTH, MLP_DIM, D), dtype=bf16),
        "b2": jnp.zeros((DEPTH, 1, D), jnp.float32),
        "gamma2": jnp.ones((DEPTH, 1, D), jnp.float32),   # LayerScale
        "final_ln_g": jnp.ones((1, D), jnp.float32),
        "final_ln_b": jnp.zeros((1, D), jnp.float32),
    }


# ---------------- forward pass --------------------------------------------
@jax.jit
def dinov2_forward(rgb_u8, params):
    rgb = rgb_u8.astype(jnp.float32)
    # patchify: (B,H,W,C) -> (B, num_patches, ph*pw*C), row-major (ph,pw,C)
    x = rgb.reshape(B, GRID_P, PATCH, GRID_P, PATCH, C)
    patches = x.transpose(0, 1, 3, 2, 4, 5).reshape(B, NUM_PATCHES, PATCH_K)

    cls_pos = params["cls"] + params["pos"][:, 0:1, :]     # (1,1,D)
    pos_patch = params["pos"][:, 1:, :]                    # (1,NP,D)

    rest = [MEAN_VEC, STDINV_VEC, params["patch_w"], params["patch_b"],
            cls_pos, pos_patch,
            params["ln1_g"], params["ln1_b"], params["wqkv"], params["bqkv"],
            params["wproj"], params["bproj"], params["gamma1"],
            params["ln2_g"], params["ln2_b"], params["w1"], params["b1"],
            params["w2"], params["b2"], params["gamma2"],
            params["final_ln_g"], params["final_ln_b"]]

    # per-batch tile of the patches; all weights are small enough to be passed
    # whole (block == full array) and stay resident in VMEM across the grid.
    in_specs = [pl.BlockSpec((1, NUM_PATCHES, PATCH_K), lambda b: (b, 0, 0))]
    in_specs += [pl.BlockSpec(a.shape, lambda b, n=a.ndim: (0,) * n)
                 for a in rest]

    out = pl.pallas_call(
        dinov2_kernel,
        out_shape=jax.ShapeDtypeStruct((B, 1, D), jnp.float32),
        grid=(B,),
        in_specs=in_specs,
        out_specs=pl.BlockSpec((1, 1, D), lambda b: (b, 0, 0)),
        scratch_shapes=[pltpu.VMEM((1, SEQP, D), jnp.float32)],
        compiler_params=pltpu.CompilerParams(
            dimension_semantics=("parallel",)),   # v7x: batch across 2 TCs
    )(patches, *rest)
    return out[:, 0, :]                                    # (B, D) CLS features


# ---------------- main -----------------------------------------------------
if __name__ == "__main__":
    key = jax.random.PRNGKey(0)
    k_img, k_par = jax.random.split(key)

    rgb = jax.random.randint(k_img, (B, IMG, IMG, C), 0, 256, dtype=jnp.int32)
    rgb = rgb.astype(jnp.uint8)
    # mirror the module's input contract
    assert rgb.dtype == jnp.uint8
    assert rgb.shape[1] == IMG and rgb.shape[2] == IMG

    params = init_params(k_par)
    out = dinov2_forward(rgb, params)
    out = jax.block_until_ready(out)
    assert out.shape == (B, D) and out.dtype == jnp.float32
    assert bool(jnp.all(jnp.isfinite(out)))
    print("KERNEL_OK")
</pallas_src>

<mosaic_0001>
module attributes {stable_mosaic.version = 11 : i64} {
  func.func @dinov2_kernel(%arg0: i32, %arg1: memref<1x4x588xf32, #tpu.memory_space<vmem>>, %arg2: memref<1x1x588xf32, #tpu.memory_space<vmem>>, %arg3: memref<1x1x588xf32, #tpu.memory_space<vmem>>, %arg4: memref<588x32xbf16, #tpu.memory_space<vmem>>, %arg5: memref<1x32xf32, #tpu.memory_space<vmem>>, %arg6: memref<1x1x32xf32, #tpu.memory_space<vmem>>, %arg7: memref<1x4x32xf32, #tpu.memory_space<vmem>>, %arg8: memref<2x1x32xf32, #tpu.memory_space<vmem>>, %arg9: memref<2x1x32xf32, #tpu.memory_space<vmem>>, %arg10: memref<2x32x96xbf16, #tpu.memory_space<vmem>>, %arg11: memref<2x1x96xf32, #tpu.memory_space<vmem>>, %arg12: memref<2x32x32xbf16, #tpu.memory_space<vmem>>, %arg13: memref<2x1x32xf32, #tpu.memory_space<vmem>>, %arg14: memref<2x1x32xf32, #tpu.memory_space<vmem>>, %arg15: memref<2x1x32xf32, #tpu.memory_space<vmem>>, %arg16: memref<2x1x32xf32, #tpu.memory_space<vmem>>, %arg17: memref<2x32x128xbf16, #tpu.memory_space<vmem>>, %arg18: memref<2x1x128xf32, #tpu.memory_space<vmem>>, %arg19: memref<2x128x32xbf16, #tpu.memory_space<vmem>>, %arg20: memref<2x1x32xf32, #tpu.memory_space<vmem>>, %arg21: memref<2x1x32xf32, #tpu.memory_space<vmem>>, %arg22: memref<1x32xf32, #tpu.memory_space<vmem>>, %arg23: memref<1x32xf32, #tpu.memory_space<vmem>>, %arg24: memref<1x1x32xf32, #tpu.memory_space<vmem>>, %arg25: memref<1x8x32xf32, #tpu.memory_space<vmem>>) attributes {dimension_semantics = [#tpu.dimension_semantics<parallel>], iteration_bounds = array<i64: 2>, scalar_prefetch = 0 : i64, scratch_operands = 1 : i64, tpu.core_type = #tpu.core_type<tc>, window_params = [{transform_indices = @transform_0, window_bounds = array<i64: 1, 4, 588>}, {pipeline_mode = #tpu.pipeline_mode<synchronous>, transform_indices = @transform_1, window_bounds = array<i64: 1, 1, 588>}, {pipeline_mode = #tpu.pipeline_mode<synchronous>, transform_indices = @transform_2, window_bounds = array<i64: 1, 1, 588>}, {pipeline_mode = #tpu.pipeline_mode<synchronous>, transform_indices = @transform_3, window_bounds = array<i64: 588, 32>}, {pipeline_mode = #tpu.pipeline_mode<synchronous>, transform_indices = @transform_4, window_bounds = array<i64: 1, 32>}, {pipeline_mode = #tpu.pipeline_mode<synchronous>, transform_indices = @transform_5, window_bounds = array<i64: 1, 1, 32>}, {pipeline_mode = #tpu.pipeline_mode<synchronous>, transform_indices = @transform_6, window_bounds = array<i64: 1, 4, 32>}, {pipeline_mode = #tpu.pipeline_mode<synchronous>, transform_indices = @transform_7, window_bounds = array<i64: 2, 1, 32>}, {pipeline_mode = #tpu.pipeline_mode<synchronous>, transform_indices = @transform_8, window_bounds = array<i64: 2, 1, 32>}, {pipeline_mode = #tpu.pipeline_mode<synchronous>, transform_indices = @transform_9, window_bounds = array<i64: 2, 32, 96>}, {pipeline_mode = #tpu.pipeline_mode<synchronous>, transform_indices = @transform_10, window_bounds = array<i64: 2, 1, 96>}, {pipeline_mode = #tpu.pipeline_mode<synchronous>, transform_indices = @transform_11, window_bounds = array<i64: 2, 32, 32>}, {pipeline_mode = #tpu.pipeline_mode<synchronous>, transform_indices = @transform_12, window_bounds = array<i64: 2, 1, 32>}, {pipeline_mode = #tpu.pipeline_mode<synchronous>, transform_indices = @transform_13, window_bounds = array<i64: 2, 1, 32>}, {pipeline_mode = #tpu.pipeline_mode<synchronous>, transform_indices = @transform_14, window_bounds = array<i64: 2, 1, 32>}, {pipeline_mode = #tpu.pipeline_mode<synchronous>, transform_indices = @transform_15, window_bounds = array<i64: 2, 1, 32>}, {pipeline_mode = #tpu.pipeline_mode<synchronous>, transform_indices = @transform_16, window_bounds = array<i64: 2, 32, 128>}, {pipeline_mode = #tpu.pipeline_mode<synchronous>, transform_indices = @transform_17, window_bounds = array<i64: 2, 1, 128>}, {pipeline_mode = #tpu.pipeline_mode<synchronous>, transform_indices = @transform_18, window_bounds = array<i64: 2, 128, 32>}, {pipeline_mode = #tpu.pipeline_mode<synchronous>, transform_indices = @transform_19, window_bounds = array<i64: 2, 1, 32>}, {pipeline_mode = #tpu.pipeline_mode<synchronous>, transform_indices = @transform_20, window_bounds = array<i64: 2, 1, 32>}, {pipeline_mode = #tpu.pipeline_mode<synchronous>, transform_indices = @transform_21, window_bounds = array<i64: 1, 32>}, {pipeline_mode = #tpu.pipeline_mode<synchronous>, transform_indices = @transform_22, window_bounds = array<i64: 1, 32>}, {transform_indices = @transform_23, window_bounds = array<i64: 1, 1, 32>}]} {
    %c0 = arith.constant 0 : index
    %c0_0 = arith.constant 0 : index
    %c0_1 = arith.constant 0 : index
    %0 = vector.load %arg1[%c0, %c0_0, %c0_1] : memref<1x4x588xf32, #tpu.memory_space<vmem>>, vector<1x4x588xf32>
    %c0_2 = arith.constant 0 : index
    %c0_3 = arith.constant 0 : index
    %c0_4 = arith.constant 0 : index
    %1 = vector.load %arg2[%c0_2, %c0_3, %c0_4] : memref<1x1x588xf32, #tpu.memory_space<vmem>>, vector<1x1x588xf32>
    %2 = vector.broadcast %1 : vector<1x1x588xf32> to vector<1x4x588xf32>
    %3 = arith.subf %0, %2 : vector<1x4x588xf32>
    %c0_5 = arith.constant 0 : index
    %c0_6 = arith.constant 0 : index
    %c0_7 = arith.constant 0 : index
    %4 = vector.load %arg3[%c0_5, %c0_6, %c0_7] : memref<1x1x588xf32, #tpu.memory_space<vmem>>, vector<1x1x588xf32>
    %5 = vector.broadcast %4 : vector<1x1x588xf32> to vector<1x4x588xf32>
    %6 = arith.mulf %3, %5 : vector<1x4x588xf32>
    %c0_8 = arith.constant 0 : index
    %c0_9 = arith.constant 0 : index
    %7 = vector.load %arg4[%c0_8, %c0_9] : memref<588x32xbf16, #tpu.memory_space<vmem>>, vector<588x32xbf16>
    %8 = arith.truncf %6 : vector<1x4x588xf32> to vector<1x4x588xbf16>
    "tpu.trace_start"() <{level = 10 : i32, message = "bsk,kd->bsd"}> : () -> ()
    %cst = arith.constant dense<0.000000e+00> : vector<1x4x32xf32>
    %9 = tpu.matmul %8, %7, %cst {dimension_numbers = #tpu.dot_dimension_numbers<[2], [0], [0, 1], [1], [0, 0, 0, 1, 1, 1], [], []>} : vector<1x4x588xbf16>, vector<588x32xbf16>, vector<1x4x32xf32> -> vector<1x4x32xf32>
    "tpu.trace_stop"() : () -> ()
    %c0_10 = arith.constant 0 : index
    %c0_11 = arith.constant 0 : index
    %10 = vector.load %arg5[%c0_10, %c0_11] : memref<1x32xf32, #tpu.memory_space<vmem>>, vector<1x32xf32>
    %11 = vector.shape_cast %10 : vector<1x32xf32> to vector<1x1x32xf32>
    %12 = vector.broadcast %11 : vector<1x1x32xf32> to vector<1x4x32xf32>
    %13 = arith.addf %9, %12 : vector<1x4x32xf32>
    %cst_12 = arith.constant 0.000000e+00 : f32
    %14 = vector.broadcast %cst_12 : f32 to vector<1x8x32xf32>
    %c0_13 = arith.constant 0 : index
    %c0_14 = arith.constant 0 : index
    %c0_15 = arith.constant 0 : index
    %15 = vector.load %arg25[%c0_13, %c0_14, %c0_15] : memref<1x8x32xf32, #tpu.memory_space<vmem>>, vector<1x8x32xf32>
    tpu.vector_store %arg25[%c0_13, %c0_14, %c0_15], %14 {strides = array<i32>} : memref<1x8x32xf32, #tpu.memory_space<vmem>>, vector<1x8x32xf32>,
    %c0_16 = arith.constant 0 : index
    %c0_17 = arith.constant 0 : index
    %c0_18 = arith.constant 0 : index
    %16 = vector.load %arg6[%c0_16, %c0_17, %c0_18] : memref<1x1x32xf32, #tpu.memory_space<vmem>>, vector<1x1x32xf32>
    %c0_19 = arith.constant 0 : index
    %c0_20 = arith.constant 0 : index
    %c0_21 = arith.constant 0 : index
    %17 = vector.load %arg25[%c0_19, %c0_20, %c0_21] : memref<1x8x32xf32, #tpu.memory_space<vmem>>, vector<1x1x32xf32>
    tpu.vector_store %arg25[%c0_19, %c0_20, %c0_21], %16 {strides = array<i32>} : memref<1x8x32xf32, #tpu.memory_space<vmem>>, vector<1x1x32xf32>,
    %c0_22 = arith.constant 0 : index
    %c0_23 = arith.constant 0 : index
    %c0_24 = arith.constant 0 : index
    %18 = vector.load %arg7[%c0_22, %c0_23, %c0_24] : memref<1x4x32xf32, #tpu.memory_space<vmem>>, vector<1x4x32xf32>
    %19 = arith.addf %13, %18 : vector<1x4x32xf32>
    %c0_25 = arith.constant 0 : index
    %c1 = arith.constant 1 : index
    %c0_26 = arith.constant 0 : index
    %20 = vector.load %arg25[%c0_25, %c1, %c0_26] : memref<1x8x32xf32, #tpu.memory_space<vmem>>, vector<1x4x32xf32>
    tpu.vector_store %arg25[%c0_25, %c1, %c0_26], %19 {strides = array<i32>} : memref<1x8x32xf32, #tpu.memory_space<vmem>>, vector<1x4x32xf32>,
    %c0_27 = arith.constant 0 : index
    %c0_28 = arith.constant 0 : index
    %c0_29 = arith.constant 0 : index
    %21 = vector.load %arg25[%c0_27, %c0_28, %c0_29] : memref<1x8x32xf32, #tpu.memory_space<vmem>>, vector<1x8x32xf32>
    %22 = tpu.iota {dimensions = array<i32: 1>} : vector<8x8xi32>
    %c5_i32 = arith.constant 5 : i32
    %23 = vector.broadcast %c5_i32 : i32 to vector<8x8xi32>
    %24 = arith.cmpi slt, %22, %23 : vector<8x8xi32>
    %cst_30 = arith.constant 0.000000e+00 : f32
    %cst_31 = arith.constant -1.000000e+09 : f32
    %25 = vector.broadcast %cst_30 : f32 to vector<8x8xf32>
    %26 = vector.broadcast %cst_31 : f32 to vector<8x8xf32>
    %27 = arith.select %24, %25, %26 : vector<8x8xi1>, vector<8x8xf32>
    %c0_32 = arith.constant 0 : index
    %c0_33 = arith.constant 0 : index
    %c0_34 = arith.constant 0 : index
    %28 = vector.load %arg8[%c0_32, %c0_33, %c0_34] : memref<2x1x32xf32, #tpu.memory_space<vmem>>, vector<1x1x32xf32>
    %29 = vector.shape_cast %28 : vector<1x1x32xf32> to vector<1x32xf32>
    %c0_35 = arith.constant 0 : index
    %c0_36 = arith.constant 0 : index
    %c0_37 = arith.constant 0 : index
    %30 = vector.load %arg9[%c0_35, %c0_36, %c0_37] : memref<2x1x32xf32, #tpu.memory_space<vmem>>, vector<1x1x32xf32>
    %31 = vector.shape_cast %30 : vector<1x1x32xf32> to vector<1x32xf32>
    %cst_38 = arith.constant dense<0.000000e+00> : vector<1x8xf32>
    %32 = vector.multi_reduction <add>, %21, %cst_38 [2] : vector<1x8x32xf32> to vector<1x8xf32>
    %33 = vector.shape_cast %32 : vector<1x8xf32> to vector<1x8x1xf32>
    %cst_39 = arith.constant 3.200000e+01 : f32
    %34 = vector.broadcast %cst_39 : f32 to vector<1x8x1xf32>
    %35 = arith.divf %33, %34 : vector<1x8x1xf32>
    %36 = vector.broadcast %35 : vector<1x8x1xf32> to vector<1x8x32xf32>
    %37 = arith.subf %21, %36 : vector<1x8x32xf32>
    %38 = arith.mulf %37, %37 : vector<1x8x32xf32>
    %cst_40 = arith.constant dense<0.000000e+00> : vector<1x8xf32>
    %39 = vector.multi_reduction <add>, %38, %cst_40 [2] : vector<1x8x32xf32> to vector<1x8xf32>
    %40 = vector.shape_cast %39 : vector<1x8xf32> to vector<1x8x1xf32>
    %cst_41 = arith.constant 3.200000e+01 : f32
    %41 = vector.broadcast %cst_41 : f32 to vector<1x8x1xf32>
    %42 = arith.divf %40, %41 : vector<1x8x1xf32>
    %cst_42 = arith.constant 9.99999997E-7 : f32
    %43 = vector.broadcast %cst_42 : f32 to vector<1x8x1xf32>
    %44 = arith.addf %42, %43 : vector<1x8x1xf32>
    %45 = math.rsqrt %44 : vector<1x8x1xf32>
    %46 = vector.broadcast %45 : vector<1x8x1xf32> to vector<1x8x32xf32>
    %47 = arith.mulf %37, %46 : vector<1x8x32xf32>
    %48 = vector.shape_cast %29 : vector<1x32xf32> to vector<1x1x32xf32>
    %49 = vector.broadcast %48 : vector<1x1x32xf32> to vector<1x8x32xf32>
    %50 = arith.mulf %47, %49 : vector<1x8x32xf32>
    %51 = vector.shape_cast %31 : vector<1x32xf32> to vector<1x1x32xf32>
    %52 = vector.broadcast %51 : vector<1x1x32xf32> to vector<1x8x32xf32>
    %53 = arith.addf %50, %52 : vector<1x8x32xf32>
    %c0_43 = arith.constant 0 : index
    %c0_44 = arith.constant 0 : index
    %c0_45 = arith.constant 0 : index
    %54 = vector.load %arg10[%c0_43, %c0_44, %c0_45] : memref<2x32x96xbf16, #tpu.memory_space<vmem>>, vector<1x32x96xbf16>
    %55 = vector.shape_cast %54 : vector<1x32x96xbf16> to vector<32x96xbf16>
    %56 = arith.truncf %53 : vector<1x8x32xf32> to vector<1x8x32xbf16>
    "tpu.trace_start"() <{level = 10 : i32, message = "bsk,kd->bsd"}> : () -> ()
    %cst_46 = arith.constant dense<0.000000e+00> : vector<1x8x96xf32>
    %57 = tpu.matmul %56, %55, %cst_46 {dimension_numbers = #tpu.dot_dimension_numbers<[2], [0], [0, 1], [1], [0, 0, 0, 1, 1, 1], [], []>} : vector<1x8x32xbf16>, vector<32x96xbf16>, vector<1x8x96xf32> -> vector<1x8x96xf32>
    "tpu.trace_stop"() : () -> ()
    %c0_47 = arith.constant 0 : index
    %c0_48 = arith.constant 0 : index
    %c0_49 = arith.constant 0 : index
    %58 = vector.load %arg11[%c0_47, %c0_48, %c0_49] : memref<2x1x96xf32, #tpu.memory_space<vmem>>, vector<1x1x96xf32>
    %59 = vector.shape_cast %58 : vector<1x1x96xf32> to vector<1x96xf32>
    %60 = vector.shape_cast %59 : vector<1x96xf32> to vector<1x1x96xf32>
    %61 = vector.broadcast %60 : vector<1x1x96xf32> to vector<1x8x96xf32>
    %62 = arith.addf %57, %61 : vector<1x8x96xf32>
    %63 = vector.extract_strided_slice %62 {offsets = [0, 0, 0], sizes = [1, 8, 8], strides = [1, 1, 1]} : vector<1x8x96xf32> to vector<1x8x8xf32>
    %cst_50 = arith.constant 0.353553385 : f32
    %64 = vector.broadcast %cst_50 : f32 to vector<1x8x8xf32>
    %65 = arith.mulf %63, %64 : vector<1x8x8xf32>
    %66 = vector.extract_strided_slice %62 {offsets = [0, 0, 32], sizes = [1, 8, 8], strides = [1, 1, 1]} : vector<1x8x96xf32> to vector<1x8x8xf32>
    %67 = vector.extract_strided_slice %62 {offsets = [0, 0, 64], sizes = [1, 8, 8], strides = [1, 1, 1]} : vector<1x8x96xf32> to vector<1x8x8xf32>
    "tpu.trace_start"() <{level = 10 : i32, message = "bqe,bke->bqk"}> : () -> ()
    %cst_51 = arith.constant dense<0.000000e+00> : vector<1x8x8xf32>
    %68 = tpu.matmul %65, %66, %cst_51 {dimension_numbers = #tpu.dot_dimension_numbers<[2], [2], [1], [1], [0, 0, 0, 1, 1, 1], [0], [0]>} : vector<1x8x8xf32>, vector<1x8x8xf32>, vector<1x8x8xf32> -> vector<1x8x8xf32>
    "tpu.trace_stop"() : () -> ()
    %69 = vector.shape_cast %27 : vector<8x8xf32> to vector<1x8x8xf32>
    %70 = arith.addf %68, %69 : vector<1x8x8xf32>
    %cst_52 = arith.constant dense<0xFF800000> : vector<1x8xf32>
    %71 = vector.multi_reduction <maximumf>, %70, %cst_52 [2] : vector<1x8x8xf32> to vector<1x8xf32>
    %72 = vector.shape_cast %71 : vector<1x8xf32> to vector<1x8x1xf32>
    %73 = vector.broadcast %72 : vector<1x8x1xf32> to vector<1x8x8xf32>
    %74 = arith.subf %70, %73 : vector<1x8x8xf32>
    %75 = math.exp %74 : vector<1x8x8xf32>
    %cst_53 = arith.constant dense<0.000000e+00> : vector<1x8xf32>
    %76 = vector.multi_reduction <add>, %75, %cst_53 [2] : vector<1x8x8xf32> to vector<1x8xf32>
    %77 = vector.shape_cast %76 : vector<1x8xf32> to vector<1x8x1xf32>
    %78 = tpu.reciprocal %77 {approx = true} : vector<1x8x1xf32> -> vector<1x8x1xf32>
    %79 = vector.broadcast %78 : vector<1x8x1xf32> to vector<1x8x8xf32>
    %80 = arith.mulf %75, %79 : vector<1x8x8xf32>
    "tpu.trace_start"() <{level = 10 : i32, message = "bqk,bke->bqe"}> : () -> ()
    %cst_54 = arith.constant dense<0.000000e+00> : vector<1x8x8xf32>
    %81 = tpu.matmul %80, %67, %cst_54 {dimension_numbers = #tpu.dot_dimension_numbers<[2], [1], [1], [2], [0, 0, 0, 1, 1, 2], [0], [0]>} : vector<1x8x8xf32>, vector<1x8x8xf32>, vector<1x8x8xf32> -> vector<1x8x8xf32>
    "tpu.trace_stop"() : () -> ()
    %c0_55 = arith.constant 0 : index
    %c0_56 = arith.constant 0 : index
    %c0_57 = arith.constant 0 : index
    %82 = vector.load %arg25[%c0_55, %c0_56, %c0_57] : memref<1x8x32xf32, #tpu.memory_space<vmem>>, vector<1x8x8xf32>
    tpu.vector_store %arg25[%c0_55, %c0_56, %c0_57], %81 {strides = array<i32>} : memref<1x8x32xf32, #tpu.memory_space<vmem>>, vector<1x8x8xf32>,
    %83 = vector.extract_strided_slice %62 {offsets = [0, 0, 8], sizes = [1, 8, 8], strides = [1, 1, 1]} : vector<1x8x96xf32> to vector<1x8x8xf32>
    %cst_58 = arith.constant 0.353553385 : f32
    %84 = vector.broadcast %cst_58 : f32 to vector<1x8x8xf32>
    %85 = arith.mulf %83, %84 : vector<1x8x8xf32>
    %86 = vector.extract_strided_slice %62 {offsets = [0, 0, 40], sizes = [1, 8, 8], strides = [1, 1, 1]} : vector<1x8x96xf32> to vector<1x8x8xf32>
    %87 = vector.extract_strided_slice %62 {offsets = [0, 0, 72], sizes = [1, 8, 8], strides = [1, 1, 1]} : vector<1x8x96xf32> to vector<1x8x8xf32>
    "tpu.trace_start"() <{level = 10 : i32, message = "bqe,bke->bqk"}> : () -> ()
    %cst_59 = arith.constant dense<0.000000e+00> : vector<1x8x8xf32>
    %88 = tpu.matmul %85, %86, %cst_59 {dimension_numbers = #tpu.dot_dimension_numbers<[2], [2], [1], [1], [0, 0, 0, 1, 1, 1], [0], [0]>} : vector<1x8x8xf32>, vector<1x8x8xf32>, vector<1x8x8xf32> -> vector<1x8x8xf32>
    "tpu.trace_stop"() : () -> ()
    %89 = vector.shape_cast %27 : vector<8x8xf32> to vector<1x8x8xf32>
    %90 = arith.addf %88, %89 : vector<1x8x8xf32>
    %cst_60 = arith.constant dense<0xFF800000> : vector<1x8xf32>
    %91 = vector.multi_reduction <maximumf>, %90, %cst_60 [2] : vector<1x8x8xf32> to vector<1x8xf32>
    %92 = vector.shape_cast %91 : vector<1x8xf32> to vector<1x8x1xf32>
    %93 = vector.broadcast %92 : vector<1x8x1xf32> to vector<1x8x8xf32>
    %94 = arith.subf %90, %93 : vector<1x8x8xf32>
    %95 = math.exp %94 : vector<1x8x8xf32>
    %cst_61 = arith.constant dense<0.000000e+00> : vector<1x8xf32>
    %96 = vector.multi_reduction <add>, %95, %cst_61 [2] : vector<1x8x8xf32> to vector<1x8xf32>
    %97 = vector.shape_cast %96 : vector<1x8xf32> to vector<1x8x1xf32>
    %98 = tpu.reciprocal %97 {approx = true} : vector<1x8x1xf32> -> vector<1x8x1xf32>
    %99 = vector.broadcast %98 : vector<1x8x1xf32> to vector<1x8x8xf32>
    %100 = arith.mulf %95, %99 : vector<1x8x8xf32>
    "tpu.trace_start"() <{level = 10 : i32, message = "bqk,bke->bqe"}> : () -> ()
    %cst_62 = arith.constant dense<0.000000e+00> : vector<1x8x8xf32>
    %101 = tpu.matmul %100, %87, %cst_62 {dimension_numbers = #tpu.dot_dimension_numbers<[2], [1], [1], [2], [0, 0, 0, 1, 1, 2], [0], [0]>} : vector<1x8x8xf32>, vector<1x8x8xf32>, vector<1x8x8xf32> -> vector<1x8x8xf32>
    "tpu.trace_stop"() : () -> ()
    %c0_63 = arith.constant 0 : index
    %c0_64 = arith.constant 0 : index
    %c8 = arith.constant 8 : index
    %102 = vector.load %arg25[%c0_63, %c0_64, %c8] : memref<1x8x32xf32, #tpu.memory_space<vmem>>, vector<1x8x8xf32>
    tpu.vector_store %arg25[%c0_63, %c0_64, %c8], %101 {strides = array<i32>} : memref<1x8x32xf32, #tpu.memory_space<vmem>>, vector<1x8x8xf32>,
    %103 = vector.extract_strided_slice %62 {offsets = [0, 0, 16], sizes = [1, 8, 8], strides = [1, 1, 1]} : vector<1x8x96xf32> to vector<1x8x8xf32>
    %cst_65 = arith.constant 0.353553385 : f32
    %104 = vector.broadcast %cst_65 : f32 to vector<1x8x8xf32>
    %105 = arith.mulf %103, %104 : vector<1x8x8xf32>
    %106 = vector.extract_strided_slice %62 {offsets = [0, 0, 48], sizes = [1, 8, 8], strides = [1, 1, 1]} : vector<1x8x96xf32> to vector<1x8x8xf32>
    %107 = vector.extract_strided_slice %62 {offsets = [0, 0, 80], sizes = [1, 8, 8], strides = [1, 1, 1]} : vector<1x8x96xf32> to vector<1x8x8xf32>
    "tpu.trace_start"() <{level = 10 : i32, message = "bqe,bke->bqk"}> : () -> ()
    %cst_66 = arith.constant dense<0.000000e+00> : vector<1x8x8xf32>
    %108 = tpu.matmul %105, %106, %cst_66 {dimension_numbers = #tpu.dot_dimension_numbers<[2], [2], [1], [1], [0, 0, 0, 1, 1, 1], [0], [0]>} : vector<1x8x8xf32>, vector<1x8x8xf32>, vector<1x8x8xf32> -> vector<1x8x8xf32>
    "tpu.trace_stop"() : () -> ()
    %109 = vector.shape_cast %27 : vector<8x8xf32> to vector<1x8x8xf32>
    %110 = arith.addf %108, %109 : vector<1x8x8xf32>
    %cst_67 = arith.constant dense<0xFF800000> : vector<1x8xf32>
    %111 = vector.multi_reduction <maximumf>, %110, %cst_67 [2] : vector<1x8x8xf32> to vector<1x8xf32>
    %112 = vector.shape_cast %111 : vector<1x8xf32> to vector<1x8x1xf32>
    %113 = vector.broadcast %112 : vector<1x8x1xf32> to vector<1x8x8xf32>
    %114 = arith.subf %110, %113 : vector<1x8x8xf32>
    %115 = math.exp %114 : vector<1x8x8xf32>
    %cst_68 = arith.constant dense<0.000000e+00> : vector<1x8xf32>
    %116 = vector.multi_reduction <add>, %115, %cst_68 [2] : vector<1x8x8xf32> to vector<1x8xf32>
    %117 = vector.shape_cast %116 : vector<1x8xf32> to vector<1x8x1xf32>
    %118 = tpu.reciprocal %117 {approx = true} : vector<1x8x1xf32> -> vector<1x8x1xf32>
    %119 = vector.broadcast %118 : vector<1x8x1xf32> to vector<1x8x8xf32>
    %120 = arith.mulf %115, %119 : vector<1x8x8xf32>
    "tpu.trace_start"() <{level = 10 : i32, message = "bqk,bke->bqe"}> : () -> ()
    %cst_69 = arith.constant dense<0.000000e+00> : vector<1x8x8xf32>
    %121 = tpu.matmul %120, %107, %cst_69 {dimension_numbers = #tpu.dot_dimension_numbers<[2], [1], [1], [2], [0, 0, 0, 1, 1, 2], [0], [0]>} : vector<1x8x8xf32>, vector<1x8x8xf32>, vector<1x8x8xf32> -> vector<1x8x8xf32>
    "tpu.trace_stop"() : () -> ()
    %c0_70 = arith.constant 0 : index
    %c0_71 = arith.constant 0 : index
    %c16 = arith.constant 16 : index
    %122 = vector.load %arg25[%c0_70, %c0_71, %c16] : memref<1x8x32xf32, #tpu.memory_space<vmem>>, vector<1x8x8xf32>
    tpu.vector_store %arg25[%c0_70, %c0_71, %c16], %121 {strides = array<i32>} : memref<1x8x32xf32, #tpu.memory_space<vmem>>, vector<1x8x8xf32>,
    %123 = vector.extract_strided_slice %62 {offsets = [0, 0, 24], sizes = [1, 8, 8], strides = [1, 1, 1]} : vector<1x8x96xf32> to vector<1x8x8xf32>
    %cst_72 = arith.constant 0.353553385 : f32
    %124 = vector.broadcast %cst_72 : f32 to vector<1x8x8xf32>
    %125 = arith.mulf %123, %124 : vector<1x8x8xf32>
    %126 = vector.extract_strided_slice %62 {offsets = [0, 0, 56], sizes = [1, 8, 8], strides = [1, 1, 1]} : vector<1x8x96xf32> to vector<1x8x8xf32>
    %127 = vector.extract_strided_slice %62 {offsets = [0, 0, 88], sizes = [1, 8, 8], strides = [1, 1, 1]} : vector<1x8x96xf32> to vector<1x8x8xf32>
    "tpu.trace_start"() <{level = 10 : i32, message = "bqe,bke->bqk"}> : () -> ()
    %cst_73 = arith.constant dense<0.000000e+00> : vector<1x8x8xf32>
    %128 = tpu.matmul %125, %126, %cst_73 {dimension_numbers = #tpu.dot_dimension_numbers<[2], [2], [1], [1], [0, 0, 0, 1, 1, 1], [0], [0]>} : vector<1x8x8xf32>, vector<1x8x8xf32>, vector<1x8x8xf32> -> vector<1x8x8xf32>
    "tpu.trace_stop"() : () -> ()
    %129 = vector.shape_cast %27 : vector<8x8xf32> to vector<1x8x8xf32>
    %130 = arith.addf %128, %129 : vector<1x8x8xf32>
    %cst_74 = arith.constant dense<0xFF800000> : vector<1x8xf32>
    %131 = vector.multi_reduction <maximumf>, %130, %cst_74 [2] : vector<1x8x8xf32> to vector<1x8xf32>
    %132 = vector.shape_cast %131 : vector<1x8xf32> to vector<1x8x1xf32>
    %133 = vector.broadcast %132 : vector<1x8x1xf32> to vector<1x8x8xf32>
    %134 = arith.subf %130, %133 : vector<1x8x8xf32>
    %135 = math.exp %134 : vector<1x8x8xf32>
    %cst_75 = arith.constant dense<0.000000e+00> : vector<1x8xf32>
    %136 = vector.multi_reduction <add>, %135, %cst_75 [2] : vector<1x8x8xf32> to vector<1x8xf32>
    %137 = vector.shape_cast %136 : vector<1x8xf32> to vector<1x8x1xf32>
    %138 = tpu.reciprocal %137 {approx = true} : vector<1x8x1xf32> -> vector<1x8x1xf32>
    %139 = vector.broadcast %138 : vector<1x8x1xf32> to vector<1x8x8xf32>
    %140 = arith.mulf %135, %139 : vector<1x8x8xf32>
    "tpu.trace_start"() <{level = 10 : i32, message = "bqk,bke->bqe"}> : () -> ()
    %cst_76 = arith.constant dense<0.000000e+00> : vector<1x8x8xf32>
    %141 = tpu.matmul %140, %127, %cst_76 {dimension_numbers = #tpu.dot_dimension_numbers<[2], [1], [1], [2], [0, 0, 0, 1, 1, 2], [0], [0]>} : vector<1x8x8xf32>, vector<1x8x8xf32>, vector<1x8x8xf32> -> vector<1x8x8xf32>
    "tpu.trace_stop"() : () -> ()
    %c0_77 = arith.constant 0 : index
    %c0_78 = arith.constant 0 : index
    %c24 = arith.constant 24 : index
    %142 = vector.load %arg25[%c0_77, %c0_78, %c24] : memref<1x8x32xf32, #tpu.memory_space<vmem>>, vector<1x8x8xf32>
    tpu.vector_store %arg25[%c0_77, %c0_78, %c24], %141 {strides = array<i32>} : memref<1x8x32xf32, #tpu.memory_space<vmem>>, vector<1x8x8xf32>,
    %c0_79 = arith.constant 0 : index
    %c0_80 = arith.constant 0 : index
    %c0_81 = arith.constant 0 : index
    %143 = vector.load %arg25[%c0_79, %c0_80, %c0_81] : memref<1x8x32xf32, #tpu.memory_space<vmem>>, vector<1x8x32xf32>
    %c0_82 = arith.constant 0 : index
    %c0_83 = arith.constant 0 : index
    %c0_84 = arith.constant 0 : index
    %144 = vector.load %arg12[%c0_82, %c0_83, %c0_84] : memref<2x32x32xbf16, #tpu.memory_space<vmem>>, vector<1x32x32xbf16>
    %145 = vector.shape_cast %144 : vector<1x32x32xbf16> to vector<32x32xbf16>
    %146 = arith.truncf %143 : vector<1x8x32xf32> to vector<1x8x32xbf16>
    "tpu.trace_start"() <{level = 10 : i32, message = "bsk,kd->bsd"}> : () -> ()
    %cst_85 = arith.constant dense<0.000000e+00> : vector<1x8x32xf32>
    %147 = tpu.matmul %146, %145, %cst_85 {dimension_numbers = #tpu.dot_dimension_numbers<[2], [0], [0, 1], [1], [0, 0, 0, 1, 1, 1], [], []>} : vector<1x8x32xbf16>, vector<32x32xbf16>, vector<1x8x32xf32> -> vector<1x8x32xf32>
    "tpu.trace_stop"() : () -> ()
    %c0_86 = arith.constant 0 : index
    %c0_87 = arith.constant 0 : index
    %c0_88 = arith.constant 0 : index
    %148 = vector.load %arg13[%c0_86, %c0_87, %c0_88] : memref<2x1x32xf32, #tpu.memory_space<vmem>>, vector<1x1x32xf32>
    %149 = vector.shape_cast %148 : vector<1x1x32xf32> to vector<1x32xf32>
    %150 = vector.shape_cast %149 : vector<1x32xf32> to vector<1x1x32xf32>
    %151 = vector.broadcast %150 : vector<1x1x32xf32> to vector<1x8x32xf32>
    %152 = arith.addf %147, %151 : vector<1x8x32xf32>
    %c0_89 = arith.constant 0 : index
    %c0_90 = arith.constant 0 : index
    %c0_91 = arith.constant 0 : index
    %153 = vector.load %arg14[%c0_89, %c0_90, %c0_91] : memref<2x1x32xf32, #tpu.memory_space<vmem>>, vector<1x1x32xf32>
    %154 = vector.shape_cast %153 : vector<1x1x32xf32> to vector<1x32xf32>
    %155 = vector.shape_cast %154 : vector<1x32xf32> to vector<1x1x32xf32>
    %156 = vector.broadcast %155 : vector<1x1x32xf32> to vector<1x8x32xf32>
    %157 = arith.mulf %156, %152 : vector<1x8x32xf32>
    %158 = arith.addf %21, %157 : vector<1x8x32xf32>
    %c0_92 = arith.constant 0 : index
    %c0_93 = arith.constant 0 : index
    %c0_94 = arith.constant 0 : index
    %159 = vector.load %arg15[%c0_92, %c0_93, %c0_94] : memref<2x1x32xf32, #tpu.memory_space<vmem>>, vector<1x1x32xf32>
    %160 = vector.shape_cast %159 : vector<1x1x32xf32> to vector<1x32xf32>
    %c0_95 = arith.constant 0 : index
    %c0_96 = arith.constant 0 : index
    %c0_97 = arith.constant 0 : index
    %161 = vector.load %arg16[%c0_95, %c0_96, %c0_97] : memref<2x1x32xf32, #tpu.memory_space<vmem>>, vector<1x1x32xf32>
    %162 = vector.shape_cast %161 : vector<1x1x32xf32> to vector<1x32xf32>
    %cst_98 = arith.constant dense<0.000000e+00> : vector<1x8xf32>
    %163 = vector.multi_reduction <add>, %158, %cst_98 [2] : vector<1x8x32xf32> to vector<1x8xf32>
    %164 = vector.shape_cast %163 : vector<1x8xf32> to vector<1x8x1xf32>
    %cst_99 = arith.constant 3.200000e+01 : f32
    %165 = vector.broadcast %cst_99 : f32 to vector<1x8x1xf32>
    %166 = arith.divf %164, %165 : vector<1x8x1xf32>
    %167 = vector.broadcast %166 : vector<1x8x1xf32> to vector<1x8x32xf32>
    %168 = arith.subf %158, %167 : vector<1x8x32xf32>
    %169 = arith.mulf %168, %168 : vector<1x8x32xf32>
    %cst_100 = arith.constant dense<0.000000e+00> : vector<1x8xf32>
    %170 = vector.multi_reduction <add>, %169, %cst_100 [2] : vector<1x8x32xf32> to vector<1x8xf32>
    %171 = vector.shape_cast %170 : vector<1x8xf32> to vector<1x8x1xf32>
    %cst_101 = arith.constant 3.200000e+01 : f32
    %172 = vector.broadcast %cst_101 : f32 to vector<1x8x1xf32>
    %173 = arith.divf %171, %172 : vector<1x8x1xf32>
    %cst_102 = arith.constant 9.99999997E-7 : f32
    %174 = vector.broadcast %cst_102 : f32 to vector<1x8x1xf32>
    %175 = arith.addf %173, %174 : vector<1x8x1xf32>
    %176 = math.rsqrt %175 : vector<1x8x1xf32>
    %177 = vector.broadcast %176 : vector<1x8x1xf32> to vector<1x8x32xf32>
    %178 = arith.mulf %168, %177 : vector<1x8x32xf32>
    %179 = vector.shape_cast %160 : vector<1x32xf32> to vector<1x1x32xf32>
    %180 = vector.broadcast %179 : vector<1x1x32xf32> to vector<1x8x32xf32>
    %181 = arith.mulf %178, %180 : vector<1x8x32xf32>
    %182 = vector.shape_cast %162 : vector<1x32xf32> to vector<1x1x32xf32>
    %183 = vector.broadcast %182 : vector<1x1x32xf32> to vector<1x8x32xf32>
    %184 = arith.addf %181, %183 : vector<1x8x32xf32>
    %c0_103 = arith.constant 0 : index
    %c0_104 = arith.constant 0 : index
    %c0_105 = arith.constant 0 : index
    %185 = vector.load %arg17[%c0_103, %c0_104, %c0_105] : memref<2x32x128xbf16, #tpu.memory_space<vmem>>, vector<1x32x128xbf16>
    %186 = vector.shape_cast %185 : vector<1x32x128xbf16> to vector<32x128xbf16>
    %187 = arith.truncf %184 : vector<1x8x32xf32> to vector<1x8x32xbf16>
    "tpu.trace_start"() <{level = 10 : i32, message = "bsk,kd->bsd"}> : () -> ()
    %cst_106 = arith.constant dense<0.000000e+00> : vector<1x8x128xf32>
    %188 = tpu.matmul %187, %186, %cst_106 {dimension_numbers = #tpu.dot_dimension_numbers<[2], [0], [0, 1], [1], [0, 0, 0, 1, 1, 1], [], []>} : vector<1x8x32xbf16>, vector<32x128xbf16>, vector<1x8x128xf32> -> vector<1x8x128xf32>
    "tpu.trace_stop"() : () -> ()
    %c0_107 = arith.constant 0 : index
    %c0_108 = arith.constant 0 : index
    %c0_109 = arith.constant 0 : index
    %189 = vector.load %arg18[%c0_107, %c0_108, %c0_109] : memref<2x1x128xf32, #tpu.memory_space<vmem>>, vector<1x1x128xf32>
    %190 = vector.shape_cast %189 : vector<1x1x128xf32> to vector<1x128xf32>
    %191 = vector.shape_cast %190 : vector<1x128xf32> to vector<1x1x128xf32>
    %192 = vector.broadcast %191 : vector<1x1x128xf32> to vector<1x8x128xf32>
    %193 = arith.addf %188, %192 : vector<1x8x128xf32>
    %194 = arith.mulf %193, %193 : vector<1x8x128xf32>
    %195 = arith.mulf %193, %194 : vector<1x8x128xf32>
    %cst_110 = arith.constant 4.471500e-02 : f32
    %196 = vector.broadcast %cst_110 : f32 to vector<1x8x128xf32>
    %197 = arith.mulf %196, %195 : vector<1x8x128xf32>
    %198 = arith.addf %193, %197 : vector<1x8x128xf32>
    %cst_111 = arith.constant 0.797884583 : f32
    %199 = vector.broadcast %cst_111 : f32 to vector<1x8x128xf32>
    %200 = arith.mulf %199, %198 : vector<1x8x128xf32>
    %201 = math.tanh %200 : vector<1x8x128xf32>
    %cst_112 = arith.constant 1.000000e+00 : f32
    %202 = vector.broadcast %cst_112 : f32 to vector<1x8x128xf32>
    %203 = arith.addf %202, %201 : vector<1x8x128xf32>
    %cst_113 = arith.constant 5.000000e-01 : f32
    %204 = vector.broadcast %cst_113 : f32 to vector<1x8x128xf32>
    %205 = arith.mulf %204, %203 : vector<1x8x128xf32>
    %206 = arith.mulf %193, %205 : vector<1x8x128xf32>
    %c0_114 = arith.constant 0 : index
    %c0_115 = arith.constant 0 : index
    %c0_116 = arith.constant 0 : index
    %207 = vector.load %arg19[%c0_114, %c0_115, %c0_116] : memref<2x128x32xbf16, #tpu.memory_space<vmem>>, vector<1x128x32xbf16>
    %208 = vector.shape_cast %207 : vector<1x128x32xbf16> to vector<128x32xbf16>
    %209 = arith.truncf %206 : vector<1x8x128xf32> to vector<1x8x128xbf16>
    "tpu.trace_start"() <{level = 10 : i32, message = "bsk,kd->bsd"}> : () -> ()
    %cst_117 = arith.constant dense<0.000000e+00> : vector<1x8x32xf32>
    %210 = tpu.matmul %209, %208, %cst_117 {dimension_numbers = #tpu.dot_dimension_numbers<[2], [0], [0, 1], [1], [0, 0, 0, 1, 1, 1], [], []>} : vector<1x8x128xbf16>, vector<128x32xbf16>, vector<1x8x32xf32> -> vector<1x8x32xf32>
    "tpu.trace_stop"() : () -> ()
    %c0_118 = arith.constant 0 : index
    %c0_119 = arith.constant 0 : index
    %c0_120 = arith.constant 0 : index
    %211 = vector.load %arg20[%c0_118, %c0_119, %c0_120] : memref<2x1x32xf32, #tpu.memory_space<vmem>>, vector<1x1x32xf32>
    %212 = vector.shape_cast %211 : vector<1x1x32xf32> to vector<1x32xf32>
    %213 = vector.shape_cast %212 : vector<1x32xf32> to vector<1x1x32xf32>
    %214 = vector.broadcast %213 : vector<1x1x32xf32> to vector<1x8x32xf32>
    %215 = arith.addf %210, %214 : vector<1x8x32xf32>
    %c0_121 = arith.constant 0 : index
    %c0_122 = arith.constant 0 : index
    %c0_123 = arith.constant 0 : index
    %216 = vector.load %arg21[%c0_121, %c0_122, %c0_123] : memref<2x1x32xf32, #tpu.memory_space<vmem>>, vector<1x1x32xf32>
    %217 = vector.shape_cast %216 : vector<1x1x32xf32> to vector<1x32xf32>
    %218 = vector.shape_cast %217 : vector<1x32xf32> to vector<1x1x32xf32>
    %219 = vector.broadcast %218 : vector<1x1x32xf32> to vector<1x8x32xf32>
    %220 = arith.mulf %219, %215 : vector<1x8x32xf32>
    %221 = arith.addf %158, %220 : vector<1x8x32xf32>
    %c1_124 = arith.constant 1 : index
    %c0_125 = arith.constant 0 : index
    %c0_126 = arith.constant 0 : index
    %222 = vector.load %arg8[%c1_124, %c0_125, %c0_126] : memref<2x1x32xf32, #tpu.memory_space<vmem>>, vector<1x1x32xf32>
    %223 = vector.shape_cast %222 : vector<1x1x32xf32> to vector<1x32xf32>
    %c1_127 = arith.constant 1 : index
    %c0_128 = arith.constant 0 : index
    %c0_129 = arith.constant 0 : index
    %224 = vector.load %arg9[%c1_127, %c0_128, %c0_129] : memref<2x1x32xf32, #tpu.memory_space<vmem>>, vector<1x1x32xf32>
    %225 = vector.shape_cast %224 : vector<1x1x32xf32> to vector<1x32xf32>
    %cst_130 = arith.constant dense<0.000000e+00> : vector<1x8xf32>
    %226 = vector.multi_reduction <add>, %221, %cst_130 [2] : vector<1x8x32xf32> to vector<1x8xf32>
    %227 = vector.shape_cast %226 : vector<1x8xf32> to vector<1x8x1xf32>
    %cst_131 = arith.constant 3.200000e+01 : f32
    %228 = vector.broadcast %cst_131 : f32 to vector<1x8x1xf32>
    %229 = arith.divf %227, %228 : vector<1x8x1xf32>
    %230 = vector.broadcast %229 : vector<1x8x1xf32> to vector<1x8x32xf32>
    %231 = arith.subf %221, %230 : vector<1x8x32xf32>
    %232 = arith.mulf %231, %231 : vector<1x8x32xf32>
    %cst_132 = arith.constant dense<0.000000e+00> : vector<1x8xf32>
    %233 = vector.multi_reduction <add>, %232, %cst_132 [2] : vector<1x8x32xf32> to vector<1x8xf32>
    %234 = vector.shape_cast %233 : vector<1x8xf32> to vector<1x8x1xf32>
    %cst_133 = arith.constant 3.200000e+01 : f32
    %235 = vector.broadcast %cst_133 : f32 to vector<1x8x1xf32>
    %236 = arith.divf %234, %235 : vector<1x8x1xf32>
    %cst_134 = arith.constant 9.99999997E-7 : f32
    %237 = vector.broadcast %cst_134 : f32 to vector<1x8x1xf32>
    %238 = arith.addf %236, %237 : vector<1x8x1xf32>
    %239 = math.rsqrt %238 : vector<1x8x1xf32>
    %240 = vector.broadcast %239 : vector<1x8x1xf32> to vector<1x8x32xf32>
    %241 = arith.mulf %231, %240 : vector<1x8x32xf32>
    %242 = vector.shape_cast %223 : vector<1x32xf32> to vector<1x1x32xf32>
    %243 = vector.broadcast %242 : vector<1x1x32xf32> to vector<1x8x32xf32>
    %244 = arith.mulf %241, %243 : vector<1x8x32xf32>
    %245 = vector.shape_cast %225 : vector<1x32xf32> to vector<1x1x32xf32>
    %246 = vector.broadcast %245 : vector<1x1x32xf32> to vector<1x8x32xf32>
    %247 = arith.addf %244, %246 : vector<1x8x32xf32>
    %c1_135 = arith.constant 1 : index
    %c0_136 = arith.constant 0 : index
    %c0_137 = arith.constant 0 : index
    %248 = vector.load %arg10[%c1_135, %c0_136, %c0_137] : memref<2x32x96xbf16, #tpu.memory_space<vmem>>, vector<1x32x96xbf16>
    %249 = vector.shape_cast %248 : vector<1x32x96xbf16> to vector<32x96xbf16>
    %250 = arith.truncf %247 : vector<1x8x32xf32> to vector<1x8x32xbf16>
    "tpu.trace_start"() <{level = 10 : i32, message = "bsk,kd->bsd"}> : () -> ()
    %cst_138 = arith.constant dense<0.000000e+00> : vector<1x8x96xf32>
    %251 = tpu.matmul %250, %249, %cst_138 {dimension_numbers = #tpu.dot_dimension_numbers<[2], [0], [0, 1], [1], [0, 0, 0, 1, 1, 1], [], []>} : vector<1x8x32xbf16>, vector<32x96xbf16>, vector<1x8x96xf32> -> vector<1x8x96xf32>
    "tpu.trace_stop"() : () -> ()
    %c1_139 = arith.constant 1 : index
    %c0_140 = arith.constant 0 : index
    %c0_141 = arith.constant 0 : index
    %252 = vector.load %arg11[%c1_139, %c0_140, %c0_141] : memref<2x1x96xf32, #tpu.memory_space<vmem>>, vector<1x1x96xf32>
    %253 = vector.shape_cast %252 : vector<1x1x96xf32> to vector<1x96xf32>
    %254 = vector.shape_cast %253 : vector<1x96xf32> to vector<1x1x96xf32>
    %255 = vector.broadcast %254 : vector<1x1x96xf32> to vector<1x8x96xf32>
    %256 = arith.addf %251, %255 : vector<1x8x96xf32>
    %257 = vector.extract_strided_slice %256 {offsets = [0, 0, 0], sizes = [1, 8, 8], strides = [1, 1, 1]} : vector<1x8x96xf32> to vector<1x8x8xf32>
    %cst_142 = arith.constant 0.353553385 : f32
    %258 = vector.broadcast %cst_142 : f32 to vector<1x8x8xf32>
    %259 = arith.mulf %257, %258 : vector<1x8x8xf32>
    %260 = vector.extract_strided_slice %256 {offsets = [0, 0, 32], sizes = [1, 8, 8], strides = [1, 1, 1]} : vector<1x8x96xf32> to vector<1x8x8xf32>
    %261 = vector.extract_strided_slice %256 {offsets = [0, 0, 64], sizes = [1, 8, 8], strides = [1, 1, 1]} : vector<1x8x96xf32> to vector<1x8x8xf32>
    "tpu.trace_start"() <{level = 10 : i32, message = "bqe,bke->bqk"}> : () -> ()
    %cst_143 = arith.constant dense<0.000000e+00> : vector<1x8x8xf32>
    %262 = tpu.matmul %259, %260, %cst_143 {dimension_numbers = #tpu.dot_dimension_numbers<[2], [2], [1], [1], [0, 0, 0, 1, 1, 1], [0], [0]>} : vector<1x8x8xf32>, vector<1x8x8xf32>, vector<1x8x8xf32> -> vector<1x8x8xf32>
    "tpu.trace_stop"() : () -> ()
    %263 = vector.shape_cast %27 : vector<8x8xf32> to vector<1x8x8xf32>
    %264 = arith.addf %262, %263 : vector<1x8x8xf32>
    %cst_144 = arith.constant dense<0xFF800000> : vector<1x8xf32>
    %265 = vector.multi_reduction <maximumf>, %264, %cst_144 [2] : vector<1x8x8xf32> to vector<1x8xf32>
    %266 = vector.shape_cast %265 : vector<1x8xf32> to vector<1x8x1xf32>
    %267 = vector.broadcast %266 : vector<1x8x1xf32> to vector<1x8x8xf32>
    %268 = arith.subf %264, %267 : vector<1x8x8xf32>
    %269 = math.exp %268 : vector<1x8x8xf32>
    %cst_145 = arith.constant dense<0.000000e+00> : vector<1x8xf32>
    %270 = vector.multi_reduction <add>, %269, %cst_145 [2] : vector<1x8x8xf32> to vector<1x8xf32>
    %271 = vector.shape_cast %270 : vector<1x8xf32> to vector<1x8x1xf32>
    %272 = tpu.reciprocal %271 {approx = true} : vector<1x8x1xf32> -> vector<1x8x1xf32>
    %273 = vector.broadcast %272 : vector<1x8x1xf32> to vector<1x8x8xf32>
    %274 = arith.mulf %269, %273 : vector<1x8x8xf32>
    "tpu.trace_start"() <{level = 10 : i32, message = "bqk,bke->bqe"}> : () -> ()
    %cst_146 = arith.constant dense<0.000000e+00> : vector<1x8x8xf32>
    %275 = tpu.matmul %274, %261, %cst_146 {dimension_numbers = #tpu.dot_dimension_numbers<[2], [1], [1], [2], [0, 0, 0, 1, 1, 2], [0], [0]>} : vector<1x8x8xf32>, vector<1x8x8xf32>, vector<1x8x8xf32> -> vector<1x8x8xf32>
    "tpu.trace_stop"() : () -> ()
    %c0_147 = arith.constant 0 : index
    %c0_148 = arith.constant 0 : index
    %c0_149 = arith.constant 0 : index
    %276 = vector.load %arg25[%c0_147, %c0_148, %c0_149] : memref<1x8x32xf32, #tpu.memory_space<vmem>>, vector<1x8x8xf32>
    tpu.vector_store %arg25[%c0_147, %c0_148, %c0_149], %275 {strides = array<i32>} : memref<1x8x32xf32, #tpu.memory_space<vmem>>, vector<1x8x8xf32>,
    %277 = vector.extract_strided_slice %256 {offsets = [0, 0, 8], sizes = [1, 8, 8], strides = [1, 1, 1]} : vector<1x8x96xf32> to vector<1x8x8xf32>
    %cst_150 = arith.constant 0.353553385 : f32
    %278 = vector.broadcast %cst_150 : f32 to vector<1x8x8xf32>
    %279 = arith.mulf %277, %278 : vector<1x8x8xf32>
    %280 = vector.extract_strided_slice %256 {offsets = [0, 0, 40], sizes = [1, 8, 8], strides = [1, 1, 1]} : vector<1x8x96xf32> to vector<1x8x8xf32>
    %281 = vector.extract_strided_slice %256 {offsets = [0, 0, 72], sizes = [1, 8, 8], strides = [1, 1, 1]} : vector<1x8x96xf32> to vector<1x8x8xf32>
    "tpu.trace_start"() <{level = 10 : i32, message = "bqe,bke->bqk"}> : () -> ()
    %cst_151 = arith.constant dense<0.000000e+00> : vector<1x8x8xf32>
    %282 = tpu.matmul %279, %280, %cst_151 {dimension_numbers = #tpu.dot_dimension_numbers<[2], [2], [1], [1], [0, 0, 0, 1, 1, 1], [0], [0]>} : vector<1x8x8xf32>, vector<1x8x8xf32>, vector<1x8x8xf32> -> vector<1x8x8xf32>
    "tpu.trace_stop"() : () -> ()
    %283 = vector.shape_cast %27 : vector<8x8xf32> to vector<1x8x8xf32>
    %284 = arith.addf %282, %283 : vector<1x8x8xf32>
    %cst_152 = arith.constant dense<0xFF800000> : vector<1x8xf32>
    %285 = vector.multi_reduction <maximumf>, %284, %cst_152 [2] : vector<1x8x8xf32> to vector<1x8xf32>
    %286 = vector.shape_cast %285 : vector<1x8xf32> to vector<1x8x1xf32>
    %287 = vector.broadcast %286 : vector<1x8x1xf32> to vector<1x8x8xf32>
    %288 = arith.subf %284, %287 : vector<1x8x8xf32>
    %289 = math.exp %288 : vector<1x8x8xf32>
    %cst_153 = arith.constant dense<0.000000e+00> : vector<1x8xf32>
    %290 = vector.multi_reduction <add>, %289, %cst_153 [2] : vector<1x8x8xf32> to vector<1x8xf32>
    %291 = vector.shape_cast %290 : vector<1x8xf32> to vector<1x8x1xf32>
    %292 = tpu.reciprocal %291 {approx = true} : vector<1x8x1xf32> -> vector<1x8x1xf32>
    %293 = vector.broadcast %292 : vector<1x8x1xf32> to vector<1x8x8xf32>
    %294 = arith.mulf %289, %293 : vector<1x8x8xf32>
    "tpu.trace_start"() <{level = 10 : i32, message = "bqk,bke->bqe"}> : () -> ()
    %cst_154 = arith.constant dense<0.000000e+00> : vector<1x8x8xf32>
    %295 = tpu.matmul %294, %281, %cst_154 {dimension_numbers = #tpu.dot_dimension_numbers<[2], [1], [1], [2], [0, 0, 0, 1, 1, 2], [0], [0]>} : vector<1x8x8xf32>, vector<1x8x8xf32>, vector<1x8x8xf32> -> vector<1x8x8xf32>
    "tpu.trace_stop"() : () -> ()
    %c0_155 = arith.constant 0 : index
    %c0_156 = arith.constant 0 : index
    %c8_157 = arith.constant 8 : index
    %296 = vector.load %arg25[%c0_155, %c0_156, %c8_157] : memref<1x8x32xf32, #tpu.memory_space<vmem>>, vector<1x8x8xf32>
    tpu.vector_store %arg25[%c0_155, %c0_156, %c8_157], %295 {strides = array<i32>} : memref<1x8x32xf32, #tpu.memory_space<vmem>>, vector<1x8x8xf32>,
    %297 = vector.extract_strided_slice %256 {offsets = [0, 0, 16], sizes = [1, 8, 8], strides = [1, 1, 1]} : vector<1x8x96xf32> to vector<1x8x8xf32>
    %cst_158 = arith.constant 0.353553385 : f32
    %298 = vector.broadcast %cst_158 : f32 to vector<1x8x8xf32>
    %299 = arith.mulf %297, %298 : vector<1x8x8xf32>
    %300 = vector.extract_strided_slice %256 {offsets = [0, 0, 48], sizes = [1, 8, 8], strides = [1, 1, 1]} : vector<1x8x96xf32> to vector<1x8x8xf32>
    %301 = vector.extract_strided_slice %256 {offsets = [0, 0, 80], sizes = [1, 8, 8], strides = [1, 1, 1]} : vector<1x8x96xf32> to vector<1x8x8xf32>
    "tpu.trace_start"() <{level = 10 : i32, message = "bqe,bke->bqk"}> : () -> ()
    %cst_159 = arith.constant dense<0.000000e+00> : vector<1x8x8xf32>
    %302 = tpu.matmul %299, %300, %cst_159 {dimension_numbers = #tpu.dot_dimension_numbers<[2], [2], [1], [1], [0, 0, 0, 1, 1, 1], [0], [0]>} : vector<1x8x8xf32>, vector<1x8x8xf32>, vector<1x8x8xf32> -> vector<1x8x8xf32>
    "tpu.trace_stop"() : () -> ()
    %303 = vector.shape_cast %27 : vector<8x8xf32> to vector<1x8x8xf32>
    %304 = arith.addf %302, %303 : vector<1x8x8xf32>
    %cst_160 = arith.constant dense<0xFF800000> : vector<1x8xf32>
    %305 = vector.multi_reduction <maximumf>, %304, %cst_160 [2] : vector<1x8x8xf32> to vector<1x8xf32>
    %306 = vector.shape_cast %305 : vector<1x8xf32> to vector<1x8x1xf32>
    %307 = vector.broadcast %306 : vector<1x8x1xf32> to vector<1x8x8xf32>
    %308 = arith.subf %304, %307 : vector<1x8x8xf32>
    %309 = math.exp %308 : vector<1x8x8xf32>
    %cst_161 = arith.constant dense<0.000000e+00> : vector<1x8xf32>
    %310 = vector.multi_reduction <add>, %309, %cst_161 [2] : vector<1x8x8xf32> to vector<1x8xf32>
    %311 = vector.shape_cast %310 : vector<1x8xf32> to vector<1x8x1xf32>
    %312 = tpu.reciprocal %311 {approx = true} : vector<1x8x1xf32> -> vector<1x8x1xf32>
    %313 = vector.broadcast %312 : vector<1x8x1xf32> to vector<1x8x8xf32>
    %314 = arith.mulf %309, %313 : vector<1x8x8xf32>
    "tpu.trace_start"() <{level = 10 : i32, message = "bqk,bke->bqe"}> : () -> ()
    %cst_162 = arith.constant dense<0.000000e+00> : vector<1x8x8xf32>
    %315 = tpu.matmul %314, %301, %cst_162 {dimension_numbers = #tpu.dot_dimension_numbers<[2], [1], [1], [2], [0, 0, 0, 1, 1, 2], [0], [0]>} : vector<1x8x8xf32>, vector<1x8x8xf32>, vector<1x8x8xf32> -> vector<1x8x8xf32>
    "tpu.trace_stop"() : () -> ()
    %c0_163 = arith.constant 0 : index
    %c0_164 = arith.constant 0 : index
    %c16_165 = arith.constant 16 : index
    %316 = vector.load %arg25[%c0_163, %c0_164, %c16_165] : memref<1x8x32xf32, #tpu.memory_space<vmem>>, vector<1x8x8xf32>
    tpu.vector_store %arg25[%c0_163, %c0_164, %c16_165], %315 {strides = array<i32>} : memref<1x8x32xf32, #tpu.memory_space<vmem>>, vector<1x8x8xf32>,
    %317 = vector.extract_strided_slice %256 {offsets = [0, 0, 24], sizes = [1, 8, 8], strides = [1, 1, 1]} : vector<1x8x96xf32> to vector<1x8x8xf32>
    %cst_166 = arith.constant 0.353553385 : f32
    %318 = vector.broadcast %cst_166 : f32 to vector<1x8x8xf32>
    %319 = arith.mulf %317, %318 : vector<1x8x8xf32>
    %320 = vector.extract_strided_slice %256 {offsets = [0, 0, 56], sizes = [1, 8, 8], strides = [1, 1, 1]} : vector<1x8x96xf32> to vector<1x8x8xf32>
    %321 = vector.extract_strided_slice %256 {offsets = [0, 0, 88], sizes = [1, 8, 8], strides = [1, 1, 1]} : vector<1x8x96xf32> to vector<1x8x8xf32>
    "tpu.trace_start"() <{level = 10 : i32, message = "bqe,bke->bqk"}> : () -> ()
    %cst_167 = arith.constant dense<0.000000e+00> : vector<1x8x8xf32>
    %322 = tpu.matmul %319, %320, %cst_167 {dimension_numbers = #tpu.dot_dimension_numbers<[2], [2], [1], [1], [0, 0, 0, 1, 1, 1], [0], [0]>} : vector<1x8x8xf32>, vector<1x8x8xf32>, vector<1x8x8xf32> -> vector<1x8x8xf32>
    "tpu.trace_stop"() : () -> ()
    %323 = vector.shape_cast %27 : vector<8x8xf32> to vector<1x8x8xf32>
    %324 = arith.addf %322, %323 : vector<1x8x8xf32>
    %cst_168 = arith.constant dense<0xFF800000> : vector<1x8xf32>
    %325 = vector.multi_reduction <maximumf>, %324, %cst_168 [2] : vector<1x8x8xf32> to vector<1x8xf32>
    %326 = vector.shape_cast %325 : vector<1x8xf32> to vector<1x8x1xf32>
    %327 = vector.broadcast %326 : vector<1x8x1xf32> to vector<1x8x8xf32>
    %328 = arith.subf %324, %327 : vector<1x8x8xf32>
    %329 = math.exp %328 : vector<1x8x8xf32>
    %cst_169 = arith.constant dense<0.000000e+00> : vector<1x8xf32>
    %330 = vector.multi_reduction <add>, %329, %cst_169 [2] : vector<1x8x8xf32> to vector<1x8xf32>
    %331 = vector.shape_cast %330 : vector<1x8xf32> to vector<1x8x1xf32>
    %332 = tpu.reciprocal %331 {approx = true} : vector<1x8x1xf32> -> vector<1x8x1xf32>
    %333 = vector.broadcast %332 : vector<1x8x1xf32> to vector<1x8x8xf32>
    %334 = arith.mulf %329, %333 : vector<1x8x8xf32>
    "tpu.trace_start"() <{level = 10 : i32, message = "bqk,bke->bqe"}> : () -> ()
    %cst_170 = arith.constant dense<0.000000e+00> : vector<1x8x8xf32>
    %335 = tpu.matmul %334, %321, %cst_170 {dimension_numbers = #tpu.dot_dimension_numbers<[2], [1], [1], [2], [0, 0, 0, 1, 1, 2], [0], [0]>} : vector<1x8x8xf32>, vector<1x8x8xf32>, vector<1x8x8xf32> -> vector<1x8x8xf32>
    "tpu.trace_stop"() : () -> ()
    %c0_171 = arith.constant 0 : index
    %c0_172 = arith.constant 0 : index
    %c24_173 = arith.constant 24 : index
    %336 = vector.load %arg25[%c0_171, %c0_172, %c24_173] : memref<1x8x32xf32, #tpu.memory_space<vmem>>, vector<1x8x8xf32>
    tpu.vector_store %arg25[%c0_171, %c0_172, %c24_173], %335 {strides = array<i32>} : memref<1x8x32xf32, #tpu.memory_space<vmem>>, vector<1x8x8xf32>,
    %c0_174 = arith.constant 0 : index
    %c0_175 = arith.constant 0 : index
    %c0_176 = arith.constant 0 : index
    %337 = vector.load %arg25[%c0_174, %c0_175, %c0_176] : memref<1x8x32xf32, #tpu.memory_space<vmem>>, vector<1x8x32xf32>
    %c1_177 = arith.constant 1 : index
    %c0_178 = arith.constant 0 : index
    %c0_179 = arith.constant 0 : index
    %338 = vector.load %arg12[%c1_177, %c0_178, %c0_179] : memref<2x32x32xbf16, #tpu.memory_space<vmem>>, vector<1x32x32xbf16>
    %339 = vector.shape_cast %338 : vector<1x32x32xbf16> to vector<32x32xbf16>
    %340 = arith.truncf %337 : vector<1x8x32xf32> to vector<1x8x32xbf16>
    "tpu.trace_start"() <{level = 10 : i32, message = "bsk,kd->bsd"}> : () -> ()
    %cst_180 = arith.constant dense<0.000000e+00> : vector<1x8x32xf32>
    %341 = tpu.matmul %340, %339, %cst_180 {dimension_numbers = #tpu.dot_dimension_numbers<[2], [0], [0, 1], [1], [0, 0, 0, 1, 1, 1], [], []>} : vector<1x8x32xbf16>, vector<32x32xbf16>, vector<1x8x32xf32> -> vector<1x8x32xf32>
    "tpu.trace_stop"() : () -> ()
    %c1_181 = arith.constant 1 : index
    %c0_182 = arith.constant 0 : index
    %c0_183 = arith.constant 0 : index
    %342 = vector.load %arg13[%c1_181, %c0_182, %c0_183] : memref<2x1x32xf32, #tpu.memory_space<vmem>>, vector<1x1x32xf32>
    %343 = vector.shape_cast %342 : vector<1x1x32xf32> to vector<1x32xf32>
    %344 = vector.shape_cast %343 : vector<1x32xf32> to vector<1x1x32xf32>
    %345 = vector.broadcast %344 : vector<1x1x32xf32> to vector<1x8x32xf32>
    %346 = arith.addf %341, %345 : vector<1x8x32xf32>
    %c1_184 = arith.constant 1 : index
    %c0_185 = arith.constant 0 : index
    %c0_186 = arith.constant 0 : index
    %347 = vector.load %arg14[%c1_184, %c0_185, %c0_186] : memref<2x1x32xf32, #tpu.memory_space<vmem>>, vector<1x1x32xf32>
    %348 = vector.shape_cast %347 : vector<1x1x32xf32> to vector<1x32xf32>
    %349 = vector.shape_cast %348 : vector<1x32xf32> to vector<1x1x32xf32>
    %350 = vector.broadcast %349 : vector<1x1x32xf32> to vector<1x8x32xf32>
    %351 = arith.mulf %350, %346 : vector<1x8x32xf32>
    %352 = arith.addf %221, %351 : vector<1x8x32xf32>
    %c1_187 = arith.constant 1 : index
    %c0_188 = arith.constant 0 : index
    %c0_189 = arith.constant 0 : index
    %353 = vector.load %arg15[%c1_187, %c0_188, %c0_189] : memref<2x1x32xf32, #tpu.memory_space<vmem>>, vector<1x1x32xf32>
    %354 = vector.shape_cast %353 : vector<1x1x32xf32> to vector<1x32xf32>
    %c1_190 = arith.constant 1 : index
    %c0_191 = arith.constant 0 : index
    %c0_192 = arith.constant 0 : index
    %355 = vector.load %arg16[%c1_190, %c0_191, %c0_192] : memref<2x1x32xf32, #tpu.memory_space<vmem>>, vector<1x1x32xf32>
    %356 = vector.shape_cast %355 : vector<1x1x32xf32> to vector<1x32xf32>
    %cst_193 = arith.constant dense<0.000000e+00> : vector<1x8xf32>
    %357 = vector.multi_reduction <add>, %352, %cst_193 [2] : vector<1x8x32xf32> to vector<1x8xf32>
    %358 = vector.shape_cast %357 : vector<1x8xf32> to vector<1x8x1xf32>
    %cst_194 = arith.constant 3.200000e+01 : f32
    %359 = vector.broadcast %cst_194 : f32 to vector<1x8x1xf32>
    %360 = arith.divf %358, %359 : vector<1x8x1xf32>
    %361 = vector.broadcast %360 : vector<1x8x1xf32> to vector<1x8x32xf32>
    %362 = arith.subf %352, %361 : vector<1x8x32xf32>
    %363 = arith.mulf %362, %362 : vector<1x8x32xf32>
    %cst_195 = arith.constant dense<0.000000e+00> : vector<1x8xf32>
    %364 = vector.multi_reduction <add>, %363, %cst_195 [2] : vector<1x8x32xf32> to vector<1x8xf32>
    %365 = vector.shape_cast %364 : vector<1x8xf32> to vector<1x8x1xf32>
    %cst_196 = arith.constant 3.200000e+01 : f32
    %366 = vector.broadcast %cst_196 : f32 to vector<1x8x1xf32>
    %367 = arith.divf %365, %366 : vector<1x8x1xf32>
    %cst_197 = arith.constant 9.99999997E-7 : f32
    %368 = vector.broadcast %cst_197 : f32 to vector<1x8x1xf32>
    %369 = arith.addf %367, %368 : vector<1x8x1xf32>
    %370 = math.rsqrt %369 : vector<1x8x1xf32>
    %371 = vector.broadcast %370 : vector<1x8x1xf32> to vector<1x8x32xf32>
    %372 = arith.mulf %362, %371 : vector<1x8x32xf32>
    %373 = vector.shape_cast %354 : vector<1x32xf32> to vector<1x1x32xf32>
    %374 = vector.broadcast %373 : vector<1x1x32xf32> to vector<1x8x32xf32>
    %375 = arith.mulf %372, %374 : vector<1x8x32xf32>
    %376 = vector.shape_cast %356 : vector<1x32xf32> to vector<1x1x32xf32>
    %377 = vector.broadcast %376 : vector<1x1x32xf32> to vector<1x8x32xf32>
    %378 = arith.addf %375, %377 : vector<1x8x32xf32>
    %c1_198 = arith.constant 1 : index
    %c0_199 = arith.constant 0 : index
    %c0_200 = arith.constant 0 : index
    %379 = vector.load %arg17[%c1_198, %c0_199, %c0_200] : memref<2x32x128xbf16, #tpu.memory_space<vmem>>, vector<1x32x128xbf16>
    %380 = vector.shape_cast %379 : vector<1x32x128xbf16> to vector<32x128xbf16>
    %381 = arith.truncf %378 : vector<1x8x32xf32> to vector<1x8x32xbf16>
    "tpu.trace_start"() <{level = 10 : i32, message = "bsk,kd->bsd"}> : () -> ()
    %cst_201 = arith.constant dense<0.000000e+00> : vector<1x8x128xf32>
    %382 = tpu.matmul %381, %380, %cst_201 {dimension_numbers = #tpu.dot_dimension_numbers<[2], [0], [0, 1], [1], [0, 0, 0, 1, 1, 1], [], []>} : vector<1x8x32xbf16>, vector<32x128xbf16>, vector<1x8x128xf32> -> vector<1x8x128xf32>
    "tpu.trace_stop"() : () -> ()
    %c1_202 = arith.constant 1 : index
    %c0_203 = arith.constant 0 : index
    %c0_204 = arith.constant 0 : index
    %383 = vector.load %arg18[%c1_202, %c0_203, %c0_204] : memref<2x1x128xf32, #tpu.memory_space<vmem>>, vector<1x1x128xf32>
    %384 = vector.shape_cast %383 : vector<1x1x128xf32> to vector<1x128xf32>
    %385 = vector.shape_cast %384 : vector<1x128xf32> to vector<1x1x128xf32>
    %386 = vector.broadcast %385 : vector<1x1x128xf32> to vector<1x8x128xf32>
    %387 = arith.addf %382, %386 : vector<1x8x128xf32>
    %388 = arith.mulf %387, %387 : vector<1x8x128xf32>
    %389 = arith.mulf %387, %388 : vector<1x8x128xf32>
    %cst_205 = arith.constant 4.471500e-02 : f32
    %390 = vector.broadcast %cst_205 : f32 to vector<1x8x128xf32>
    %391 = arith.mulf %390, %389 : vector<1x8x128xf32>
    %392 = arith.addf %387, %391 : vector<1x8x128xf32>
    %cst_206 = arith.constant 0.797884583 : f32
    %393 = vector.broadcast %cst_206 : f32 to vector<1x8x128xf32>
    %394 = arith.mulf %393, %392 : vector<1x8x128xf32>
    %395 = math.tanh %394 : vector<1x8x128xf32>
    %cst_207 = arith.constant 1.000000e+00 : f32
    %396 = vector.broadcast %cst_207 : f32 to vector<1x8x128xf32>
    %397 = arith.addf %396, %395 : vector<1x8x128xf32>
    %cst_208 = arith.constant 5.000000e-01 : f32
    %398 = vector.broadcast %cst_208 : f32 to vector<1x8x128xf32>
    %399 = arith.mulf %398, %397 : vector<1x8x128xf32>
    %400 = arith.mulf %387, %399 : vector<1x8x128xf32>
    %c1_209 = arith.constant 1 : index
    %c0_210 = arith.constant 0 : index
    %c0_211 = arith.constant 0 : index
    %401 = vector.load %arg19[%c1_209, %c0_210, %c0_211] : memref<2x128x32xbf16, #tpu.memory_space<vmem>>, vector<1x128x32xbf16>
    %402 = vector.shape_cast %401 : vector<1x128x32xbf16> to vector<128x32xbf16>
    %403 = arith.truncf %400 : vector<1x8x128xf32> to vector<1x8x128xbf16>
    "tpu.trace_start"() <{level = 10 : i32, message = "bsk,kd->bsd"}> : () -> ()
    %cst_212 = arith.constant dense<0.000000e+00> : vector<1x8x32xf32>
    %404 = tpu.matmul %403, %402, %cst_212 {dimension_numbers = #tpu.dot_dimension_numbers<[2], [0], [0, 1], [1], [0, 0, 0, 1, 1, 1], [], []>} : vector<1x8x128xbf16>, vector<128x32xbf16>, vector<1x8x32xf32> -> vector<1x8x32xf32>
    "tpu.trace_stop"() : () -> ()
    %c1_213 = arith.constant 1 : index
    %c0_214 = arith.constant 0 : index
    %c0_215 = arith.constant 0 : index
    %405 = vector.load %arg20[%c1_213, %c0_214, %c0_215] : memref<2x1x32xf32, #tpu.memory_space<vmem>>, vector<1x1x32xf32>
    %406 = vector.shape_cast %405 : vector<1x1x32xf32> to vector<1x32xf32>
    %407 = vector.shape_cast %406 : vector<1x32xf32> to vector<1x1x32xf32>
    %408 = vector.broadcast %407 : vector<1x1x32xf32> to vector<1x8x32xf32>
    %409 = arith.addf %404, %408 : vector<1x8x32xf32>
    %c1_216 = arith.constant 1 : index
    %c0_217 = arith.constant 0 : index
    %c0_218 = arith.constant 0 : index
    %410 = vector.load %arg21[%c1_216, %c0_217, %c0_218] : memref<2x1x32xf32, #tpu.memory_space<vmem>>, vector<1x1x32xf32>
    %411 = vector.shape_cast %410 : vector<1x1x32xf32> to vector<1x32xf32>
    %412 = vector.shape_cast %411 : vector<1x32xf32> to vector<1x1x32xf32>
    %413 = vector.broadcast %412 : vector<1x1x32xf32> to vector<1x8x32xf32>
    %414 = arith.mulf %413, %409 : vector<1x8x32xf32>
    %415 = arith.addf %352, %414 : vector<1x8x32xf32>
    %416 = vector.extract_strided_slice %415 {offsets = [0, 0, 0], sizes = [1, 1, 32], strides = [1, 1, 1]} : vector<1x8x32xf32> to vector<1x1x32xf32>
    %c0_219 = arith.constant 0 : index
    %c0_220 = arith.constant 0 : index
    %417 = vector.load %arg22[%c0_219, %c0_220] : memref<1x32xf32, #tpu.memory_space<vmem>>, vector<1x32xf32>
    %c0_221 = arith.constant 0 : index
    %c0_222 = arith.constant 0 : index
    %418 = vector.load %arg23[%c0_221, %c0_222] : memref<1x32xf32, #tpu.memory_space<vmem>>, vector<1x32xf32>
    %cst_223 = arith.constant dense<0.000000e+00> : vector<1x1xf32>
    %419 = vector.multi_reduction <add>, %416, %cst_223 [2] : vector<1x1x32xf32> to vector<1x1xf32>
    %420 = vector.shape_cast %419 : vector<1x1xf32> to vector<1x1x1xf32>
    %cst_224 = arith.constant 3.200000e+01 : f32
    %421 = vector.broadcast %cst_224 : f32 to vector<1x1x1xf32>
    %422 = arith.divf %420, %421 : vector<1x1x1xf32>
    %423 = vector.broadcast %422 : vector<1x1x1xf32> to vector<1x1x32xf32>
    %424 = arith.subf %416, %423 : vector<1x1x32xf32>
    %425 = arith.mulf %424, %424 : vector<1x1x32xf32>
    %cst_225 = arith.constant dense<0.000000e+00> : vector<1x1xf32>
    %426 = vector.multi_reduction <add>, %425, %cst_225 [2] : vector<1x1x32xf32> to vector<1x1xf32>
    %427 = vector.shape_cast %426 : vector<1x1xf32> to vector<1x1x1xf32>
    %cst_226 = arith.constant 3.200000e+01 : f32
    %428 = vector.broadcast %cst_226 : f32 to vector<1x1x1xf32>
    %429 = arith.divf %427, %428 : vector<1x1x1xf32>
    %cst_227 = arith.constant 9.99999997E-7 : f32
    %430 = vector.broadcast %cst_227 : f32 to vector<1x1x1xf32>
    %431 = arith.addf %429, %430 : vector<1x1x1xf32>
    %432 = math.rsqrt %431 : vector<1x1x1xf32>
    %433 = vector.broadcast %432 : vector<1x1x1xf32> to vector<1x1x32xf32>
    %434 = arith.mulf %424, %433 : vector<1x1x32xf32>
    %435 = vector.shape_cast %417 : vector<1x32xf32> to vector<1x1x32xf32>
    %436 = arith.mulf %434, %435 : vector<1x1x32xf32>
    %437 = vector.shape_cast %418 : vector<1x32xf32> to vector<1x1x32xf32>
    %438 = arith.addf %436, %437 : vector<1x1x32xf32>
    %c0_228 = arith.constant 0 : index
    %c0_229 = arith.constant 0 : index
    %c0_230 = arith.constant 0 : index
    %439 = vector.load %arg24[%c0_228, %c0_229, %c0_230] : memref<1x1x32xf32, #tpu.memory_space<vmem>>, vector<1x1x32xf32>
    tpu.vector_store %arg24[%c0_228, %c0_229, %c0_230], %438 {strides = array<i32>} : memref<1x1x32xf32, #tpu.memory_space<vmem>>, vector<1x1x32xf32>,
    return
  }
  func.func @transform_0(%arg0: i32) -> (i32, i32, i32) {
    %c0_i32 = arith.constant 0 : i32
    %c0_i32_0 = arith.constant 0 : i32
    %c0_i32_1 = arith.constant 0 : i32
    return %arg0, %c0_i32, %c0_i32_0 : i32, i32, i32
  }
  func.func @transform_1(%arg0: i32) -> (i32, i32, i32) {
    %c0_i32 = arith.constant 0 : i32
    %c0_i32_0 = arith.constant 0 : i32
    %c0_i32_1 = arith.constant 0 : i32
    %c0_i32_2 = arith.constant 0 : i32
    return %c0_i32, %c0_i32_0, %c0_i32_1 : i32, i32, i32
  }
  func.func @transform_2(%arg0: i32) -> (i32, i32, i32) {
    %c0_i32 = arith.constant 0 : i32
    %c0_i32_0 = arith.constant 0 : i32
    %c0_i32_1 = arith.constant 0 : i32
    %c0_i32_2 = arith.constant 0 : i32
    return %c0_i32, %c0_i32_0, %c0_i32_1 : i32, i32, i32
  }
  func.func @transform_3(%arg0: i32) -> (i32, i32) {
    %c0_i32 = arith.constant 0 : i32
    %c0_i32_0 = arith.constant 0 : i32
    %c0_i32_1 = arith.constant 0 : i32
    return %c0_i32, %c0_i32_0 : i32, i32
  }
  func.func @transform_4(%arg0: i32) -> (i32, i32) {
    %c0_i32 = arith.constant 0 : i32
    %c0_i32_0 = arith.constant 0 : i32
    %c0_i32_1 = arith.constant 0 : i32
    return %c0_i32, %c0_i32_0 : i32, i32
  }
  func.func @transform_5(%arg0: i32) -> (i32, i32, i32) {
    %c0_i32 = arith.constant 0 : i32
    %c0_i32_0 = arith.constant 0 : i32
    %c0_i32_1 = arith.constant 0 : i32
    %c0_i32_2 = arith.constant 0 : i32
    return %c0_i32, %c0_i32_0, %c0_i32_1 : i32, i32, i32
  }
  func.func @transform_6(%arg0: i32) -> (i32, i32, i32) {
    %c0_i32 = arith.constant 0 : i32
    %c0_i32_0 = arith.constant 0 : i32
    %c0_i32_1 = arith.constant 0 : i32
    %c0_i32_2 = arith.constant 0 : i32
    return %c0_i32, %c0_i32_0, %c0_i32_1 : i32, i32, i32
  }
  func.func @transform_7(%arg0: i32) -> (i32, i32, i32) {
    %c0_i32 = arith.constant 0 : i32
    %c0_i32_0 = arith.constant 0 : i32
    %c0_i32_1 = arith.constant 0 : i32
    %c0_i32_2 = arith.constant 0 : i32
    return %c0_i32, %c0_i32_0, %c0_i32_1 : i32, i32, i32
  }
  func.func @transform_8(%arg0: i32) -> (i32, i32, i32) {
    %c0_i32 = arith.constant 0 : i32
    %c0_i32_0 = arith.constant 0 : i32
    %c0_i32_1 = arith.constant 0 : i32
    %c0_i32_2 = arith.constant 0 : i32
    return %c0_i32, %c0_i32_0, %c0_i32_1 : i32, i32, i32
  }
  func.func @transform_9(%arg0: i32) -> (i32, i32, i32) {
    %c0_i32 = arith.constant 0 : i32
    %c0_i32_0 = arith.constant 0 : i32
    %c0_i32_1 = arith.constant 0 : i32
    %c0_i32_2 = arith.constant 0 : i32
    return %c0_i32, %c0_i32_0, %c0_i32_1 : i32, i32, i32
  }
  func.func @transform_10(%arg0: i32) -> (i32, i32, i32) {
    %c0_i32 = arith.constant 0 : i32
    %c0_i32_0 = arith.constant 0 : i32
    %c0_i32_1 = arith.constant 0 : i32
    %c0_i32_2 = arith.constant 0 : i32
    return %c0_i32, %c0_i32_0, %c0_i32_1 : i32, i32, i32
  }
  func.func @transform_11(%arg0: i32) -> (i32, i32, i32) {
    %c0_i32 = arith.constant 0 : i32
    %c0_i32_0 = arith.constant 0 : i32
    %c0_i32_1 = arith.constant 0 : i32
    %c0_i32_2 = arith.constant 0 : i32
    return %c0_i32, %c0_i32_0, %c0_i32_1 : i32, i32, i32
  }
  func.func @transform_12(%arg0: i32) -> (i32, i32, i32) {
    %c0_i32 = arith.constant 0 : i32
    %c0_i32_0 = arith.constant 0 : i32
    %c0_i32_1 = arith.constant 0 : i32
    %c0_i32_2 = arith.constant 0 : i32
    return %c0_i32, %c0_i32_0, %c0_i32_1 : i32, i32, i32
  }
  func.func @transform_13(%arg0: i32) -> (i32, i32, i32) {
    %c0_i32 = arith.constant 0 : i32
    %c0_i32_0 = arith.constant 0 : i32
    %c0_i32_1 = arith.constant 0 : i32
    %c0_i32_2 = arith.constant 0 : i32
    return %c0_i32, %c0_i32_0, %c0_i32_1 : i32, i32, i32
  }
  func.func @transform_14(%arg0: i32) -> (i32, i32, i32) {
    %c0_i32 = arith.constant 0 : i32
    %c0_i32_0 = arith.constant 0 : i32
    %c0_i32_1 = arith.constant 0 : i32
    %c0_i32_2 = arith.constant 0 : i32
    return %c0_i32, %c0_i32_0, %c0_i32_1 : i32, i32, i32
  }
  func.func @transform_15(%arg0: i32) -> (i32, i32, i32) {
    %c0_i32 = arith.constant 0 : i32
    %c0_i32_0 = arith.constant 0 : i32
    %c0_i32_1 = arith.constant 0 : i32
    %c0_i32_2 = arith.constant 0 : i32
    return %c0_i32, %c0_i32_0, %c0_i32_1 : i32, i32, i32
  }
  func.func @transform_16(%arg0: i32) -> (i32, i32, i32) {
    %c0_i32 = arith.constant 0 : i32
    %c0_i32_0 = arith.constant 0 : i32
    %c0_i32_1 = arith.constant 0 : i32
    %c0_i32_2 = arith.constant 0 : i32
    return %c0_i32, %c0_i32_0, %c0_i32_1 : i32, i32, i32
  }
  func.func @transform_17(%arg0: i32) -> (i32, i32, i32) {
    %c0_i32 = arith.constant 0 : i32
    %c0_i32_0 = arith.constant 0 : i32
    %c0_i32_1 = arith.constant 0 : i32
    %c0_i32_2 = arith.constant 0 : i32
    return %c0_i32, %c0_i32_0, %c0_i32_1 : i32, i32, i32
  }
  func.func @transform_18(%arg0: i32) -> (i32, i32, i32) {
    %c0_i32 = arith.constant 0 : i32
    %c0_i32_0 = arith.constant 0 : i32
    %c0_i32_1 = arith.constant 0 : i32
    %c0_i32_2 = arith.constant 0 : i32
    return %c0_i32, %c0_i32_0, %c0_i32_1 : i32, i32, i32
  }
  func.func @transform_19(%arg0: i32) -> (i32, i32, i32) {
    %c0_i32 = arith.constant 0 : i32
    %c0_i32_0 = arith.constant 0 : i32
    %c0_i32_1 = arith.constant 0 : i32
    %c0_i32_2 = arith.constant 0 : i32
    return %c0_i32, %c0_i32_0, %c0_i32_1 : i32, i32, i32
  }
  func.func @transform_20(%arg0: i32) -> (i32, i32, i32) {
    %c0_i32 = arith.constant 0 : i32
    %c0_i32_0 = arith.constant 0 : i32
    %c0_i32_1 = arith.constant 0 : i32
    %c0_i32_2 = arith.constant 0 : i32
    return %c0_i32, %c0_i32_0, %c0_i32_1 : i32, i32, i32
  }
  func.func @transform_21(%arg0: i32) -> (i32, i32) {
    %c0_i32 = arith.constant 0 : i32
    %c0_i32_0 = arith.constant 0 : i32
    %c0_i32_1 = arith.constant 0 : i32
    return %c0_i32, %c0_i32_0 : i32, i32
  }
  func.func @transform_22(%arg0: i32) -> (i32, i32) {
    %c0_i32 = arith.constant 0 : i32
    %c0_i32_0 = arith.constant 0 : i32
    %c0_i32_1 = arith.constant 0 : i32
    return %c0_i32, %c0_i32_0 : i32, i32
  }
  func.func @transform_23(%arg0: i32) -> (i32, i32, i32) {
    %c0_i32 = arith.constant 0 : i32
    %c0_i32_0 = arith.constant 0 : i32
    %c0_i32_1 = arith.constant 0 : i32
    return %arg0, %c0_i32, %c0_i32_0 : i32, i32, i32
  }
}

</mosaic_0001>

<llo_original>
// kernel: dinov2_forward.1
$region0: #{dinov2_forward.1}
  #allocation0 [shape = 'u32[]', space=smem, size = 0x4, offset = 0x4, fixed_abs, tag = 'smem constant byte address 0x4 - core index']
  #allocation1 [shape = 'u32[144,128]{1,0:T(1,128)}', space=vmem, size = 0x12000, scoped, tag = 'internal scratch']
  #allocation2 [shape = 'f32[1,8,32]{2,1,0:T(8,128)}', space=vmem, size = 0x1000, scoped, tag = 'scratch operand']
  %s0 = inlined_call_operand.vmem [shape: f32[2,4,588], index: 0, kind: input, shape index: {}]
  %s1 = inlined_call_operand.vmem [shape: f32[1,1,588], index: 1, kind: input, shape index: {}]
  %s2 = inlined_call_operand.vmem [shape: f32[1,1,588], index: 2, kind: input, shape index: {}]
  %s3 = inlined_call_operand.vmem [shape: bf16[588,32], index: 3, kind: input, shape index: {}]
  %s4 = inlined_call_operand.vmem [shape: f32[1,32], index: 4, kind: input, shape index: {}]
  %s5 = inlined_call_operand.vmem [shape: f32[1,1,32], index: 5, kind: input, shape index: {}]
  %s6 = inlined_call_operand.vmem [shape: f32[1,4,32], index: 6, kind: input, shape index: {}]
  %s7 = inlined_call_operand.vmem [shape: f32[2,1,32], index: 7, kind: input, shape index: {}]
  %s8 = inlined_call_operand.vmem [shape: f32[2,1,32], index: 8, kind: input, shape index: {}]
  %s9 = inlined_call_operand.vmem [shape: bf16[2,32,96], index: 9, kind: input, shape index: {}]
  %s10 = inlined_call_operand.vmem [shape: f32[2,1,96], index: 10, kind: input, shape index: {}]
  %s11 = inlined_call_operand.vmem [shape: bf16[2,32,32], index: 11, kind: input, shape index: {}]
  %s12 = inlined_call_operand.vmem [shape: f32[2,1,32], index: 12, kind: input, shape index: {}]
  %s13 = inlined_call_operand.vmem [shape: f32[2,1,32], index: 13, kind: input, shape index: {}]
  %s14 = inlined_call_operand.vmem [shape: f32[2,1,32], index: 14, kind: input, shape index: {}]
  %s15 = inlined_call_operand.vmem [shape: f32[2,1,32], index: 15, kind: input, shape index: {}]
  %s16 = inlined_call_operand.vmem [shape: bf16[2,32,128], index: 16, kind: input, shape index: {}]
  %s17 = inlined_call_operand.vmem [shape: f32[2,1,128], index: 17, kind: input, shape index: {}]
  %s18 = inlined_call_operand.vmem [shape: bf16[2,128,32], index: 18, kind: input, shape index: {}]
  %s19 = inlined_call_operand.vmem [shape: f32[2,1,32], index: 19, kind: input, shape index: {}]
  %s20 = inlined_call_operand.vmem [shape: f32[2,1,32], index: 20, kind: input, shape index: {}]
  %s21 = inlined_call_operand.vmem [shape: f32[1,32], index: 21, kind: input, shape index: {}]
  %s22 = inlined_call_operand.vmem [shape: f32[1,32], index: 22, kind: input, shape index: {}]
  %s23 = inlined_call_operand.hbm [shape: f32[2,1,32], index: 23, kind: output, shape index: {}]
  %s24 = sld [smem:[#allocation0]]
  $region125: #{dinov2_forward.1} parent=0
    _
  %s26 = ssub.s32 1, %s24
  %s27 = scalar_select 0, %s26, %s24
  $region1: #{dinov2_forward.1} parent=0
    #allocation3 [shape = 'u8[1024]{0}', space=vmem, size = 0x400, scoped, tag = 'output window, operand 0']
    #allocation4 [shape = 's32[2]{0}', space=sflag, size = 0x8, scoped, tag = 'scoped memory for dinov2_forward.1']
    %28 = vsyncpa [#allocation4], 0
    %s29 = scalar_lea.sflag [#allocation4], 1
    %30 = vsyncpa %s29, 0
    loop: start=0, step=1, limit=4
    $region2: #{dinov2_forward.1} parent=1 // loop_pre_header
      _
    $region3: #{dinov2_forward.1} parent=1 // loop_header
      %s32 = sphi 0, %s36
      %p33 = scmp.ge.s32.totalorder %s32, 4
      %s42 = sphi 0, %s44
      %s45 = sphi 0, %s42
      %s46 = sphi 0, %s45
      %s62 = sphi 0, %s46
      %s66 = sphi 0, %s66
      %s68 = sphi 0, %s66
      %s69 = sphi 0, %s68
      %s83 = sphi 0, %s69
      %s87 = sphi 0, %s87
      %s89 = sphi 0, %s87
      %s90 = sphi 0, %s89
      %s104 = sphi 0, %s90
      %s108 = sphi 0, %s108
      %s110 = sphi 0, %s108
      %s111 = sphi 0, %s110
      %s125 = sphi 0, %s111
      %s129 = sphi 0, %s129
      %s131 = sphi 0, %s129
      %s132 = sphi 0, %s131
      %s146 = sphi 0, %s132
      %s150 = sphi 0, %s150
      %s152 = sphi 0, %s150
      %s153 = sphi 0, %s152
      %s167 = sphi 0, %s153
      %s171 = sphi 0, %s171
      %s173 = sphi 0, %s171
      %s174 = sphi 0, %s173
      %s188 = sphi 0, %s174
      %s192 = sphi 0, %s192
      %s194 = sphi 0, %s192
      %s195 = sphi 0, %s194
      %s209 = sphi 0, %s195
      %s213 = sphi 0, %s213
      %s215 = sphi 0, %s213
      %s216 = sphi 0, %s215
      %s230 = sphi 0, %s216
      %s234 = sphi 0, %s234
      %s236 = sphi 0, %s234
      %s237 = sphi 0, %s236
      %s251 = sphi 0, %s237
      %s255 = sphi 0, %s255
      %s257 = sphi 0, %s255
      %s258 = sphi 0, %s257
      %s272 = sphi 0, %s258
      %s276 = sphi 0, %s276
      %s278 = sphi 0, %s276
      %s279 = sphi 0, %s278
      %s293 = sphi 0, %s279
      %s297 = sphi 0, %s297
      %s299 = sphi 0, %s297
      %s300 = sphi 0, %s299
      %s314 = sphi 0, %s300
      %s318 = sphi 0, %s318
      %s320 = sphi 0, %s318
      %s321 = sphi 0, %s320
      %s335 = sphi 0, %s321
      %s339 = sphi 0, %s339
      %s341 = sphi 0, %s339
      %s342 = sphi 0, %s341
      %s356 = sphi 0, %s342
      %s360 = sphi 0, %s360
      %s362 = sphi 0, %s360
      %s363 = sphi 0, %s362
      %s377 = sphi 0, %s363
      %s381 = sphi 0, %s381
      %s383 = sphi 0, %s381
      %s384 = sphi 0, %s383
      %s398 = sphi 0, %s384
      %s402 = sphi 0, %s402
      %s404 = sphi 0, %s402
      %s405 = sphi 0, %s404
      %s419 = sphi 0, %s405
      %s423 = sphi 0, %s423
      %s425 = sphi 0, %s423
      %s426 = sphi 0, %s425
      %s440 = sphi 0, %s426
      %s444 = sphi 0, %s444
      %s446 = sphi 0, %s444
      %s447 = sphi 0, %s446
      %s461 = sphi 0, %s447
      %s465 = sphi 0, %s465
      %s467 = sphi 0, %s465
      %s468 = sphi 0, %s467
      %s482 = sphi 0, %s468
      %s486 = sphi 0, %s486
      %s488 = sphi 0, %s486
      %s489 = sphi 0, %s488
      %s503 = sphi 0, %s489
      %s507 = sphi 0, %s507
      %s509 = sphi 0, %s507
      %s510 = sphi 0, %s509
      %s524 = sphi 0, %s510
      %s530 = sphi 0, %s532
      %s533 = sphi 0, %s530
      %s534 = sphi 0, %s533
      %s550 = sphi 0, %s534
    $region4: #{dinov2_forward.1} parent=1 // loop_header_branch
      %35 = sbr.rel (%p33) target = $region8
    $region5: #{dinov2_forward.1} parent=1 // loop_body
      %s37 = ssub.s32 %s32, 1
      %s38 = ssub.s32 %s32, 2
      %s39 = sadd.s32 %s32, 1
      %s40 = ssub.s32 %s32, %s39
      %p41 = scmp.eq.s32.totalorder %s40, 0
      %s43 = sadd.s32 %s42, 1
      %s44 = scalar_select %p41, %s42, %s43
      %p47 = pneg %p41
      %p48 = scmp.eq.s32.totalorder %s32, 1
      %p49 = por %p47, %p48
      %p50 = scmp.ne.s32.totalorder %s42, %s45
      %p51 = scmp.eq.s32.totalorder %s32, 0
      %p52 = por %p50, %p51
      %p53 = scmp.ne.s32.totalorder %s42, %s45
      %p54 = scmp.eq.s32.totalorder %s37, 1
      %p55 = por %p53, %p54
      %p56 = scmp.ne.s32.totalorder %s45, %s46
      %p57 = scmp.eq.s32.totalorder %s37, 0
      %p58 = por %p56, %p57
      %p59 = scmp.ne.s32.totalorder %s45, %s46
      %p60 = scmp.eq.s32.totalorder %s38, 1
      %p61 = por %p59, %p60
      %p63 = scmp.ne.s32.totalorder %s46, %s62
      %p64 = scmp.eq.s32.totalorder %s38, 0
      %p65 = por %p63, %p64
      %s67 = sadd.s32 %s66, 1
      %p70 = scmp.eq.s32.totalorder %s32, 1
      %p71 = scmp.ne.s32.totalorder %s66, %s68
      %p72 = scmp.eq.s32.totalorder %s32, 0
      %p73 = por %p71, %p72
      %p74 = scmp.ne.s32.totalorder %s66, %s68
      %p75 = scmp.eq.s32.totalorder %s37, 1
      %p76 = por %p74, %p75
      %p77 = scmp.ne.s32.totalorder %s68, %s69
      %p78 = scmp.eq.s32.totalorder %s37, 0
      %p79 = por %p77, %p78
      %p80 = scmp.ne.s32.totalorder %s68, %s69
      %p81 = scmp.eq.s32.totalorder %s38, 1
      %p82 = por %p80, %p81
      %p84 = scmp.ne.s32.totalorder %s69, %s83
      %p85 = scmp.eq.s32.totalorder %s38, 0
      %p86 = por %p84, %p85
      %s88 = sadd.s32 %s87, 1
      %p91 = scmp.eq.s32.totalorder %s32, 1
      %p92 = scmp.ne.s32.totalorder %s87, %s89
      %p93 = scmp.eq.s32.totalorder %s32, 0
      %p94 = por %p92, %p93
      %p95 = scmp.ne.s32.totalorder %s87, %s89
      %p96 = scmp.eq.s32.totalorder %s37, 1
      %p97 = por %p95, %p96
      %p98 = scmp.ne.s32.totalorder %s89, %s90
      %p99 = scmp.eq.s32.totalorder %s37, 0
      %p100 = por %p98, %p99
      %p101 = scmp.ne.s32.totalorder %s89, %s90
      %p102 = scmp.eq.s32.totalorder %s38, 1
      %p103 = por %p101, %p102
      %p105 = scmp.ne.s32.totalorder %s90, %s104
      %p106 = scmp.eq.s32.totalorder %s38, 0
      %p107 = por %p105, %p106
      %s109 = sadd.s32 %s108, 1
      %p112 = scmp.eq.s32.totalorder %s32, 1
      %p113 = scmp.ne.s32.totalorder %s108, %s110
      %p114 = scmp.eq.s32.totalorder %s32, 0
      %p115 = por %p113, %p114
      %p116 = scmp.ne.s32.totalorder %s108, %s110
      %p117 = scmp.eq.s32.totalorder %s37, 1
      %p118 = por %p116, %p117
      %p119 = scmp.ne.s32.totalorder %s110, %s111
      %p120 = scmp.eq.s32.totalorder %s37, 0
      %p121 = por %p119, %p120
      %p122 = scmp.ne.s32.totalorder %s110, %s111
      %p123 = scmp.eq.s32.totalorder %s38, 1
      %p124 = por %p122, %p123
      %p126 = scmp.ne.s32.totalorder %s111, %s125
      %p127 = scmp.eq.s32.totalorder %s38, 0
      %p128 = por %p126, %p127
      %s130 = sadd.s32 %s129, 1
      %p133 = scmp.eq.s32.totalorder %s32, 1
      %p134 = scmp.ne.s32.totalorder %s129, %s131
      %p135 = scmp.eq.s32.totalorder %s32, 0
      %p136 = por %p134, %p135
      %p137 = scmp.ne.s32.totalorder %s129, %s131
      %p138 = scmp.eq.s32.totalorder %s37, 1
      %p139 = por %p137, %p138
      %p140 = scmp.ne.s32.totalorder %s131, %s132
      %p141 = scmp.eq.s32.totalorder %s37, 0
      %p142 = por %p140, %p141
      %p143 = scmp.ne.s32.totalorder %s131, %s132
      %p144 = scmp.eq.s32.totalorder %s38, 1
      %p145 = por %p143, %p144
      %p147 = scmp.ne.s32.totalorder %s132, %s146
      %p148 = scmp.eq.s32.totalorder %s38, 0
      %p149 = por %p147, %p148
      %s151 = sadd.s32 %s150, 1
      %p154 = scmp.eq.s32.totalorder %s32, 1
      %p155 = scmp.ne.s32.totalorder %s150, %s152
      %p156 = scmp.eq.s32.totalorder %s32, 0
      %p157 = por %p155, %p156
      %p158 = scmp.ne.s32.totalorder %s150, %s152
      %p159 = scmp.eq.s32.totalorder %s37, 1
      %p160 = por %p158, %p159
      %p161 = scmp.ne.s32.totalorder %s152, %s153
      %p162 = scmp.eq.s32.totalorder %s37, 0
      %p163 = por %p161, %p162
      %p164 = scmp.ne.s32.totalorder %s152, %s153
      %p165 = scmp.eq.s32.totalorder %s38, 1
      %p166 = por %p164, %p165
      %p168 = scmp.ne.s32.totalorder %s153, %s167
      %p169 = scmp.eq.s32.totalorder %s38, 0
      %p170 = por %p168, %p169
      %s172 = sadd.s32 %s171, 1
      %p175 = scmp.eq.s32.totalorder %s32, 1
      %p176 = scmp.ne.s32.totalorder %s171, %s173
      %p177 = scmp.eq.s32.totalorder %s32, 0
      %p178 = por %p176, %p177
      %p179 = scmp.ne.s32.totalorder %s171, %s173
      %p180 = scmp.eq.s32.totalorder %s37, 1
      %p181 = por %p179, %p180
      %p182 = scmp.ne.s32.totalorder %s173, %s174
      %p183 = scmp.eq.s32.totalorder %s37, 0
      %p184 = por %p182, %p183
      %p185 = scmp.ne.s32.totalorder %s173, %s174
      %p186 = scmp.eq.s32.totalorder %s38, 1
      %p187 = por %p185, %p186
      %p189 = scmp.ne.s32.totalorder %s174, %s188
      %p190 = scmp.eq.s32.totalorder %s38, 0
      %p191 = por %p189, %p190
      %s193 = sadd.s32 %s192, 1
      %p196 = scmp.eq.s32.totalorder %s32, 1
      %p197 = scmp.ne.s32.totalorder %s192, %s194
      %p198 = scmp.eq.s32.totalorder %s32, 0
      %p199 = por %p197, %p198
      %p200 = scmp.ne.s32.totalorder %s192, %s194
      %p201 = scmp.eq.s32.totalorder %s37, 1
      %p202 = por %p200, %p201
      %p203 = scmp.ne.s32.totalorder %s194, %s195
      %p204 = scmp.eq.s32.totalorder %s37, 0
      %p205 = por %p203, %p204
      %p206 = scmp.ne.s32.totalorder %s194, %s195
      %p207 = scmp.eq.s32.totalorder %s38, 1
      %p208 = por %p206, %p207
      %p210 = scmp.ne.s32.totalorder %s195, %s209
      %p211 = scmp.eq.s32.totalorder %s38, 0
      %p212 = por %p210, %p211
      %s214 = sadd.s32 %s213, 1
      %p217 = scmp.eq.s32.totalorder %s32, 1
      %p218 = scmp.ne.s32.totalorder %s213, %s215
      %p219 = scmp.eq.s32.totalorder %s32, 0
      %p220 = por %p218, %p219
      %p221 = scmp.ne.s32.totalorder %s213, %s215
      %p222 = scmp.eq.s32.totalorder %s37, 1
      %p223 = por %p221, %p222
      %p224 = scmp.ne.s32.totalorder %s215, %s216
      %p225 = scmp.eq.s32.totalorder %s37, 0
      %p226 = por %p224, %p225
      %p227 = scmp.ne.s32.totalorder %s215, %s216
      %p228 = scmp.eq.s32.totalorder %s38, 1
      %p229 = por %p227, %p228
      %p231 = scmp.ne.s32.totalorder %s216, %s230
      %p232 = scmp.eq.s32.totalorder %s38, 0
      %p233 = por %p231, %p232
      %s235 = sadd.s32 %s234, 1
      %p238 = scmp.eq.s32.totalorder %s32, 1
      %p239 = scmp.ne.s32.totalorder %s234, %s236
      %p240 = scmp.eq.s32.totalorder %s32, 0
      %p241 = por %p239, %p240
      %p242 = scmp.ne.s32.totalorder %s234, %s236
      %p243 = scmp.eq.s32.totalorder %s37, 1
      %p244 = por %p242, %p243
      %p245 = scmp.ne.s32.totalorder %s236, %s237
      %p246 = scmp.eq.s32.totalorder %s37, 0
      %p247 = por %p245, %p246
      %p248 = scmp.ne.s32.totalorder %s236, %s237
      %p249 = scmp.eq.s32.totalorder %s38, 1
      %p250 = por %p248, %p249
      %p252 = scmp.ne.s32.totalorder %s237, %s251
      %p253 = scmp.eq.s32.totalorder %s38, 0
      %p254 = por %p252, %p253
      %s256 = sadd.s32 %s255, 1
      %p259 = scmp.eq.s32.totalorder %s32, 1
      %p260 = scmp.ne.s32.totalorder %s255, %s257
      %p261 = scmp.eq.s32.totalorder %s32, 0
      %p262 = por %p260, %p261
      %p263 = scmp.ne.s32.totalorder %s255, %s257
      %p264 = scmp.eq.s32.totalorder %s37, 1
      %p265 = por %p263, %p264
      %p266 = scmp.ne.s32.totalorder %s257, %s258
      %p267 = scmp.eq.s32.totalorder %s37, 0
      %p268 = por %p266, %p267
      %p269 = scmp.ne.s32.totalorder %s257, %s258
      %p270 = scmp.eq.s32.totalorder %s38, 1
      %p271 = por %p269, %p270
      %p273 = scmp.ne.s32.totalorder %s258, %s272
      %p274 = scmp.eq.s32.totalorder %s38, 0
      %p275 = por %p273, %p274
      %s277 = sadd.s32 %s276, 1
      %p280 = scmp.eq.s32.totalorder %s32, 1
      %p281 = scmp.ne.s32.totalorder %s276, %s278
      %p282 = scmp.eq.s32.totalorder %s32, 0
      %p283 = por %p281, %p282
      %p284 = scmp.ne.s32.totalorder %s276, %s278
      %p285 = scmp.eq.s32.totalorder %s37, 1
      %p286 = por %p284, %p285
      %p287 = scmp.ne.s32.totalorder %s278, %s279
      %p288 = scmp.eq.s32.totalorder %s37, 0
      %p289 = por %p287, %p288
      %p290 = scmp.ne.s32.totalorder %s278, %s279
      %p291 = scmp.eq.s32.totalorder %s38, 1
      %p292 = por %p290, %p291
      %p294 = scmp.ne.s32.totalorder %s279, %s293
      %p295 = scmp.eq.s32.totalorder %s38, 0
      %p296 = por %p294, %p295
      %s298 = sadd.s32 %s297, 1
      %p301 = scmp.eq.s32.totalorder %s32, 1
      %p302 = scmp.ne.s32.totalorder %s297, %s299
      %p303 = scmp.eq.s32.totalorder %s32, 0
      %p304 = por %p302, %p303
      %p305 = scmp.ne.s32.totalorder %s297, %s299
      %p306 = scmp.eq.s32.totalorder %s37, 1
      %p307 = por %p305, %p306
      %p308 = scmp.ne.s32.totalorder %s299, %s300
      %p309 = scmp.eq.s32.totalorder %s37, 0
      %p310 = por %p308, %p309
      %p311 = scmp.ne.s32.totalorder %s299, %s300
      %p312 = scmp.eq.s32.totalorder %s38, 1
      %p313 = por %p311, %p312
      %p315 = scmp.ne.s32.totalorder %s300, %s314
      %p316 = scmp.eq.s32.totalorder %s38, 0
      %p317 = por %p315, %p316
      %s319 = sadd.s32 %s318, 1
      %p322 = scmp.eq.s32.totalorder %s32, 1
      %p323 = scmp.ne.s32.totalorder %s318, %s320
      %p324 = scmp.eq.s32.totalorder %s32, 0
      %p325 = por %p323, %p324
      %p326 = scmp.ne.s32.totalorder %s318, %s320
      %p327 = scmp.eq.s32.totalorder %s37, 1
      %p328 = por %p326, %p327
      %p329 = scmp.ne.s32.totalorder %s320, %s321
      %p330 = scmp.eq.s32.totalorder %s37, 0
      %p331 = por %p329, %p330
      %p332 = scmp.ne.s32.totalorder %s320, %s321
      %p333 = scmp.eq.s32.totalorder %s38, 1
      %p334 = por %p332, %p333
      %p336 = scmp.ne.s32.totalorder %s321, %s335
      %p337 = scmp.eq.s32.totalorder %s38, 0
      %p338 = por %p336, %p337
      %s340 = sadd.s32 %s339, 1
      %p343 = scmp.eq.s32.totalorder %s32, 1
      %p344 = scmp.ne.s32.totalorder %s339, %s341
      %p345 = scmp.eq.s32.totalorder %s32, 0
      %p346 = por %p344, %p345
      %p347 = scmp.ne.s32.totalorder %s339, %s341
      %p348 = scmp.eq.s32.totalorder %s37, 1
      %p349 = por %p347, %p348
      %p350 = scmp.ne.s32.totalorder %s341, %s342
      %p351 = scmp.eq.s32.totalorder %s37, 0
      %p352 = por %p350, %p351
      %p353 = scmp.ne.s32.totalorder %s341, %s342
      %p354 = scmp.eq.s32.totalorder %s38, 1
      %p355 = por %p353, %p354
      %p357 = scmp.ne.s32.totalorder %s342, %s356
      %p358 = scmp.eq.s32.totalorder %s38, 0
      %p359 = por %p357, %p358
      %s361 = sadd.s32 %s360, 1
      %p364 = scmp.eq.s32.totalorder %s32, 1
      %p365 = scmp.ne.s32.totalorder %s360, %s362
      %p366 = scmp.eq.s32.totalorder %s32, 0
      %p367 = por %p365, %p366
      %p368 = scmp.ne.s32.totalorder %s360, %s362
      %p369 = scmp.eq.s32.totalorder %s37, 1
      %p370 = por %p368, %p369
      %p371 = scmp.ne.s32.totalorder %s362, %s363
      %p372 = scmp.eq.s32.totalorder %s37, 0
      %p373 = por %p371, %p372
      %p374 = scmp.ne.s32.totalorder %s362, %s363
      %p375 = scmp.eq.s32.totalorder %s38, 1
      %p376 = por %p374, %p375
      %p378 = scmp.ne.s32.totalorder %s363, %s377
      %p379 = scmp.eq.s32.totalorder %s38, 0
      %p380 = por %p378, %p379
      %s382 = sadd.s32 %s381, 1
      %p385 = scmp.eq.s32.totalorder %s32, 1
      %p386 = scmp.ne.s32.totalorder %s381, %s383
      %p387 = scmp.eq.s32.totalorder %s32, 0
      %p388 = por %p386, %p387
      %p389 = scmp.ne.s32.totalorder %s381, %s383
      %p390 = scmp.eq.s32.totalorder %s37, 1
      %p391 = por %p389, %p390
      %p392 = scmp.ne.s32.totalorder %s383, %s384
      %p393 = scmp.eq.s32.totalorder %s37, 0
      %p394 = por %p392, %p393
      %p395 = scmp.ne.s32.totalorder %s383, %s384
      %p396 = scmp.eq.s32.totalorder %s38, 1
      %p397 = por %p395, %p396
      %p399 = scmp.ne.s32.totalorder %s384, %s398
      %p400 = scmp.eq.s32.totalorder %s38, 0
      %p401 = por %p399, %p400
      %s403 = sadd.s32 %s402, 1
      %p406 = scmp.eq.s32.totalorder %s32, 1
      %p407 = scmp.ne.s32.totalorder %s402, %s404
      %p408 = scmp.eq.s32.totalorder %s32, 0
      %p409 = por %p407, %p408
      %p410 = scmp.ne.s32.totalorder %s402, %s404
      %p411 = scmp.eq.s32.totalorder %s37, 1
      %p412 = por %p410, %p411
      %p413 = scmp.ne.s32.totalorder %s404, %s405
      %p414 = scmp.eq.s32.totalorder %s37, 0
      %p415 = por %p413, %p414
      %p416 = scmp.ne.s32.totalorder %s404, %s405
      %p417 = scmp.eq.s32.totalorder %s38, 1
      %p418 = por %p416, %p417
      %p420 = scmp.ne.s32.totalorder %s405, %s419
      %p421 = scmp.eq.s32.totalorder %s38, 0
      %p422 = por %p420, %p421
      %s424 = sadd.s32 %s423, 1
      %p427 = scmp.eq.s32.totalorder %s32, 1
      %p428 = scmp.ne.s32.totalorder %s423, %s425
      %p429 = scmp.eq.s32.totalorder %s32, 0
      %p430 = por %p428, %p429
      %p431 = scmp.ne.s32.totalorder %s423, %s425
      %p432 = scmp.eq.s32.totalorder %s37, 1
      %p433 = por %p431, %p432
      %p434 = scmp.ne.s32.totalorder %s425, %s426
      %p435 = scmp.eq.s32.totalorder %s37, 0
      %p436 = por %p434, %p435
      %p437 = scmp.ne.s32.totalorder %s425, %s426
      %p438 = scmp.eq.s32.totalorder %s38, 1
      %p439 = por %p437, %p438
      %p441 = scmp.ne.s32.totalorder %s426, %s440
      %p442 = scmp.eq.s32.totalorder %s38, 0
      %p443 = por %p441, %p442
      %s445 = sadd.s32 %s444, 1
      %p448 = scmp.eq.s32.totalorder %s32, 1
      %p449 = scmp.ne.s32.totalorder %s444, %s446
      %p450 = scmp.eq.s32.totalorder %s32, 0
      %p451 = por %p449, %p450
      %p452 = scmp.ne.s32.totalorder %s444, %s446
      %p453 = scmp.eq.s32.totalorder %s37, 1
      %p454 = por %p452, %p453
      %p455 = scmp.ne.s32.totalorder %s446, %s447
      %p456 = scmp.eq.s32.totalorder %s37, 0
      %p457 = por %p455, %p456
      %p458 = scmp.ne.s32.totalorder %s446, %s447
      %p459 = scmp.eq.s32.totalorder %s38, 1
      %p460 = por %p458, %p459
      %p462 = scmp.ne.s32.totalorder %s447, %s461
      %p463 = scmp.eq.s32.totalorder %s38, 0
      %p464 = por %p462, %p463
      %s466 = sadd.s32 %s465, 1
      %p469 = scmp.eq.s32.totalorder %s32, 1
      %p470 = scmp.ne.s32.totalorder %s465, %s467
      %p471 = scmp.eq.s32.totalorder %s32, 0
      %p472 = por %p470, %p471
      %p473 = scmp.ne.s32.totalorder %s465, %s467
      %p474 = scmp.eq.s32.totalorder %s37, 1
      %p475 = por %p473, %p474
      %p476 = scmp.ne.s32.totalorder %s467, %s468
      %p477 = scmp.eq.s32.totalorder %s37, 0
      %p478 = por %p476, %p477
      %p479 = scmp.ne.s32.totalorder %s467, %s468
      %p480 = scmp.eq.s32.totalorder %s38, 1
      %p481 = por %p479, %p480
      %p483 = scmp.ne.s32.totalorder %s468, %s482
      %p484 = scmp.eq.s32.totalorder %s38, 0
      %p485 = por %p483, %p484
      %s487 = sadd.s32 %s486, 1
      %p490 = scmp.eq.s32.totalorder %s32, 1
      %p491 = scmp.ne.s32.totalorder %s486, %s488
      %p492 = scmp.eq.s32.totalorder %s32, 0
      %p493 = por %p491, %p492
      %p494 = scmp.ne.s32.totalorder %s486, %s488
      %p495 = scmp.eq.s32.totalorder %s37, 1
      %p496 = por %p494, %p495
      %p497 = scmp.ne.s32.totalorder %s488, %s489
      %p498 = scmp.eq.s32.totalorder %s37, 0
      %p499 = por %p497, %p498
      %p500 = scmp.ne.s32.totalorder %s488, %s489
      %p501 = scmp.eq.s32.totalorder %s38, 1
      %p502 = por %p500, %p501
      %p504 = scmp.ne.s32.totalorder %s489, %s503
      %p505 = scmp.eq.s32.totalorder %s38, 0
      %p506 = por %p504, %p505
      %s508 = sadd.s32 %s507, 1
      %p511 = scmp.eq.s32.totalorder %s32, 1
      %p512 = scmp.ne.s32.totalorder %s507, %s509
      %p513 = scmp.eq.s32.totalorder %s32, 0
      %p514 = por %p512, %p513
      %p515 = scmp.ne.s32.totalorder %s507, %s509
      %p516 = scmp.eq.s32.totalorder %s37, 1
      %p517 = por %p515, %p516
      %p518 = scmp.ne.s32.totalorder %s509, %s510
      %p519 = scmp.eq.s32.totalorder %s37, 0
      %p520 = por %p518, %p519
      %p521 = scmp.ne.s32.totalorder %s509, %s510
      %p522 = scmp.eq.s32.totalorder %s38, 1
      %p523 = por %p521, %p522
      %p525 = scmp.ne.s32.totalorder %s510, %s524
      %p526 = scmp.eq.s32.totalorder %s38, 0
      %p527 = por %p525, %p526
      %s528 = ssub.s32 %s32, %s39
      %p529 = scmp.eq.s32.totalorder %s528, 0
      %s531 = sadd.s32 %s530, 1
      %s532 = scalar_select %p529, %s530, %s531
      %p535 = pneg %p529
      %p536 = scmp.eq.s32.totalorder %s32, 1
      %p537 = por %p535, %p536
      %p538 = scmp.ne.s32.totalorder %s530, %s533
      %p539 = scmp.eq.s32.totalorder %s32, 0
      %p540 = por %p538, %p539
      %p541 = scmp.ne.s32.totalorder %s530, %s533
      %p542 = scmp.eq.s32.totalorder %s37, 1
      %p543 = por %p541, %p542
      %p544 = scmp.ne.s32.totalorder %s533, %s534
      %p545 = scmp.eq.s32.totalorder %s37, 0
      %p546 = por %p544, %p545
      %p547 = scmp.ne.s32.totalorder %s533, %s534
      %p548 = scmp.eq.s32.totalorder %s38, 1
      %p549 = por %p547, %p548
      %p551 = scmp.ne.s32.totalorder %s534, %s550
      %p552 = scmp.eq.s32.totalorder %s38, 0
      %p553 = por %p551, %p552
      %p554 = scmp.le.s32.totalorder 1, %s32
      %p555 = scmp.lt.s32.totalorder %s32, 3
      %p556 = pnand %p554, %p555
      %p557 = pneg %p556
      // Predicated region
      $region9: #{dinov2_forward.1} parent=5 // pred_check
        _
      $region10: #{dinov2_forward.1} parent=5 // pred_check_branch
        %559 = sbr.rel (%p556) target = $region12
      $region11: #{dinov2_forward.1} parent=5 // pred_region
        %s560 = ssub.s32 %s32, 1
        // Predicated region
        $region13: #{dinov2_forward.1} parent=11 // pred_check
          %p561 = pneg %p79
        $region14: #{dinov2_forward.1} parent=11 // pred_check_branch
          %563 = sbr.rel (%p561) target = $region16
        $region15: #{dinov2_forward.1} parent=11 // pred_region
          _
        $region16: #{dinov2_forward.1} parent=11 // pred_fallthru
          _
        // Predicated region
        $region17: #{dinov2_forward.1} parent=11 // pred_check
          %p564 = pneg %p100
        $region18: #{dinov2_forward.1} parent=11 // pred_check_branch
          %566 = sbr.rel (%p564) target = $region20
        $region19: #{dinov2_forward.1} parent=11 // pred_region
          _
        $region20: #{dinov2_forward.1} parent=11 // pred_fallthru
          _
        // Predicated region
        $region21: #{dinov2_forward.1} parent=11 // pred_check
          %p567 = pneg %p121
        $region22: #{dinov2_forward.1} parent=11 // pred_check_branch
          %569 = sbr.rel (%p567) target = $region24
        $region23: #{dinov2_forward.1} parent=11 // pred_region
          _
        $region24: #{dinov2_forward.1} parent=11 // pred_fallthru
          _
        // Predicated region
        $region25: #{dinov2_forward.1} parent=11 // pred_check
          %p570 = pneg %p142
        $region26: #{dinov2_forward.1} parent=11 // pred_check_branch
          %572 = sbr.rel (%p570) target = $region28
        $region27: #{dinov2_forward.1} parent=11 // pred_region
          _
        $region28: #{dinov2_forward.1} parent=11 // pred_fallthru
          _
        // Predicated region
        $region29: #{dinov2_forward.1} parent=11 // pred_check
          %p573 = pneg %p163
        $region30: #{dinov2_forward.1} parent=11 // pred_check_branch
          %575 = sbr.rel (%p573) target = $region32
        $region31: #{dinov2_forward.1} parent=11 // pred_region
          _
        $region32: #{dinov2_forward.1} parent=11 // pred_fallthru
          _
        // Predicated region
        $region33: #{dinov2_forward.1} parent=11 // pred_check
          %p576 = pneg %p184
        $region34: #{dinov2_forward.1} parent=11 // pred_check_branch
          %578 = sbr.rel (%p576) target = $region36
        $region35: #{dinov2_forward.1} parent=11 // pred_region
          _
        $region36: #{dinov2_forward.1} parent=11 // pred_fallthru
          _
        // Predicated region
        $region37: #{dinov2_forward.1} parent=11 // pred_check
          %p579 = pneg %p205
        $region38: #{dinov2_forward.1} parent=11 // pred_check_branch
          %581 = sbr.rel (%p579) target = $region40
        $region39: #{dinov2_forward.1} parent=11 // pred_region
          _
        $region40: #{dinov2_forward.1} parent=11 // pred_fallthru
          _
        // Predicated region
        $region41: #{dinov2_forward.1} parent=11 // pred_check
          %p582 = pneg %p226
        $region42: #{dinov2_forward.1} parent=11 // pred_check_branch
          %584 = sbr.rel (%p582) target = $region44
        $region43: #{dinov2_forward.1} parent=11 // pred_region
          _
        $region44: #{dinov2_forward.1} parent=11 // pred_fallthru
          _
        // Predicated region
        $region45: #{dinov2_forward.1} parent=11 // pred_check
          %p585 = pneg %p247
        $region46: #{dinov2_forward.1} parent=11 // pred_check_branch
          %587 = sbr.rel (%p585) target = $region48
        $region47: #{dinov2_forward.1} parent=11 // pred_region
          _
        $region48: #{dinov2_forward.1} parent=11 // pred_fallthru
          _
        // Predicated region
        $region49: #{dinov2_forward.1} parent=11 // pred_check
          %p588 = pneg %p268
        $region50: #{dinov2_forward.1} parent=11 // pred_check_branch
          %590 = sbr.rel (%p588) target = $region52
        $region51: #{dinov2_forward.1} parent=11 // pred_region
          _
        $region52: #{dinov2_forward.1} parent=11 // pred_fallthru
          _
        // Predicated region
        $region53: #{dinov2_forward.1} parent=11 // pred_check
          %p591 = pneg %p289
        $region54: #{dinov2_forward.1} parent=11 // pred_check_branch
          %593 = sbr.rel (%p591) target = $region56
        $region55: #{dinov2_forward.1} parent=11 // pred_region
          _
        $region56: #{dinov2_forward.1} parent=11 // pred_fallthru
          _
        // Predicated region
        $region57: #{dinov2_forward.1} parent=11 // pred_check
          %p594 = pneg %p310
        $region58: #{dinov2_forward.1} parent=11 // pred_check_branch
          %596 = sbr.rel (%p594) target = $region60
        $region59: #{dinov2_forward.1} parent=11 // pred_region
          _
        $region60: #{dinov2_forward.1} parent=11 // pred_fallthru
          _
        // Predicated region
        $region61: #{dinov2_forward.1} parent=11 // pred_check
          %p597 = pneg %p331
        $region62: #{dinov2_forward.1} parent=11 // pred_check_branch
          %599 = sbr.rel (%p597) target = $region64
        $region63: #{dinov2_forward.1} parent=11 // pred_region
          _
        $region64: #{dinov2_forward.1} parent=11 // pred_fallthru
          _
        // Predicated region
        $region65: #{dinov2_forward.1} parent=11 // pred_check
          %p600 = pneg %p352
        $region66: #{dinov2_forward.1} parent=11 // pred_check_branch
          %602 = sbr.rel (%p600) target = $region68
        $region67: #{dinov2_forward.1} parent=11 // pred_region
          _
        $region68: #{dinov2_forward.1} parent=11 // pred_fallthru
          _
        // Predicated region
        $region69: #{dinov2_forward.1} parent=11 // pred_check
          %p603 = pneg %p373
        $region70: #{dinov2_forward.1} parent=11 // pred_check_branch
          %605 = sbr.rel (%p603) target = $region72
        $region71: #{dinov2_forward.1} parent=11 // pred_region
          _
        $region72: #{dinov2_forward.1} parent=11 // pred_fallthru
          _
        // Predicated region
        $region73: #{dinov2_forward.1} parent=11 // pred_check
          %p606 = pneg %p394
        $region74: #{dinov2_forward.1} parent=11 // pred_check_branch
          %608 = sbr.rel (%p606) target = $region76
        $region75: #{dinov2_forward.1} parent=11 // pred_region
          _
        $region76: #{dinov2_forward.1} parent=11 // pred_fallthru
          _
        // Predicated region
        $region77: #{dinov2_forward.1} parent=11 // pred_check
          %p609 = pneg %p415
        $region78: #{dinov2_forward.1} parent=11 // pred_check_branch
          %611 = sbr.rel (%p609) target = $region80
        $region79: #{dinov2_forward.1} parent=11 // pred_region
          _
        $region80: #{dinov2_forward.1} parent=11 // pred_fallthru
          _
        // Predicated region
        $region81: #{dinov2_forward.1} parent=11 // pred_check
          %p612 = pneg %p436
        $region82: #{dinov2_forward.1} parent=11 // pred_check_branch
          %614 = sbr.rel (%p612) target = $region84
        $region83: #{dinov2_forward.1} parent=11 // pred_region
          _
        $region84: #{dinov2_forward.1} parent=11 // pred_fallthru
          _
        // Predicated region
        $region85: #{dinov2_forward.1} parent=11 // pred_check
          %p615 = pneg %p457
        $region86: #{dinov2_forward.1} parent=11 // pred_check_branch
          %617 = sbr.rel (%p615) target = $region88
        $region87: #{dinov2_forward.1} parent=11 // pred_region
          _
        $region88: #{dinov2_forward.1} parent=11 // pred_fallthru
          _
        // Predicated region
        $region89: #{dinov2_forward.1} parent=11 // pred_check
          %p618 = pneg %p478
        $region90: #{dinov2_forward.1} parent=11 // pred_check_branch
          %620 = sbr.rel (%p618) target = $region92
        $region91: #{dinov2_forward.1} parent=11 // pred_region
          _
        $region92: #{dinov2_forward.1} parent=11 // pred_fallthru
          _
        // Predicated region
        $region93: #{dinov2_forward.1} parent=11 // pred_check
          %p621 = pneg %p499
        $region94: #{dinov2_forward.1} parent=11 // pred_check_branch
          %623 = sbr.rel (%p621) target = $region96
        $region95: #{dinov2_forward.1} parent=11 // pred_region
          _
        $region96: #{dinov2_forward.1} parent=11 // pred_fallthru
          _
        // Predicated region
        $region97: #{dinov2_forward.1} parent=11 // pred_check
          %p624 = pneg %p520
        $region98: #{dinov2_forward.1} parent=11 // pred_check_branch
          %626 = sbr.rel (%p624) target = $region100
        $region99: #{dinov2_forward.1} parent=11 // pred_region
          _
        $region100: #{dinov2_forward.1} parent=11 // pred_fallthru
          _
      $region12: #{dinov2_forward.1} parent=5 // pred_fallthru
        _
      %p627 = scmp.lt.s32.totalorder %s32, 2
      // Predicated region
      $region101: #{dinov2_forward.1} parent=5 // pred_check
        %p628 = pneg %p627
      $region102: #{dinov2_forward.1} parent=5 // pred_check_branch
        %630 = sbr.rel (%p628) target = $region104
      $region103: #{dinov2_forward.1} parent=5 // pred_region
        // Predicated region
        $region105: #{dinov2_forward.1} parent=103 // pred_check
          %p631 = pneg %p52
        $region106: #{dinov2_forward.1} parent=103 // pred_check_branch
          %633 = sbr.rel (%p631) target = $region108
        $region107: #{dinov2_forward.1} parent=103 // pred_region
          %p634 = scmp.lt.s32.totalorder %s32, 1
          %s635 = scalar_select %p634, %s32, 1
          %s636 = smul.addr %s635, 5
          %s637 = smul.addr %s636, 4
          %s638 = scalar_lea.vmem %s0, %s637
        $region108: #{dinov2_forward.1} parent=103 // pred_fallthru
          _
      $region104: #{dinov2_forward.1} parent=5 // pred_fallthru
        _
      %p639 = scmp.le.s32.totalorder 1, %s32
      %p640 = scmp.lt.s32.totalorder %s32, 3
      %p641 = pnand %p639, %p640
      %p642 = pneg %p641
      // Predicated region
      $region109: #{dinov2_forward.1} parent=5 // pred_check
        _
      $region110: #{dinov2_forward.1} parent=5 // pred_check_branch
        %644 = sbr.rel (%p641) target = $region112
      $region111: #{dinov2_forward.1} parent=5 // pred_region
        %s645 = ssub.s32 %s32, 1
        %p646 = scmp.lt.s32.totalorder %s37, 1
        %s647 = scalar_select %p646, %s37, 1
        %s648 = smul.addr %s647, 5
        %s649 = smul.addr %s648, 4
        %s650 = scalar_lea.vmem %s0, %s649
        %p651 = pneg %p58
        %p652 = pneg %p55
        %p653 = pneg %p79
        %p654 = pneg %p76
        %p655 = pneg %p100
        %p656 = pneg %p97
        %p657 = pneg %p121
        %p658 = pneg %p118
        %p659 = pneg %p142
        %p660 = pneg %p139
        %p661 = pneg %p163
        %p662 = pneg %p160
        %p663 = pneg %p184
        %p664 = pneg %p181
        %p665 = pneg %p205
        %p666 = pneg %p202
        %p667 = pneg %p226
        %p668 = pneg %p223
        %p669 = pneg %p247
        %p670 = pneg %p244
        %p671 = pneg %p268
        %p672 = pneg %p265
        %p673 = pneg %p289
        %p674 = pneg %p286
        %p675 = pneg %p310
        %p676 = pneg %p307
        %p677 = pneg %p331
        %p678 = pneg %p328
        %p679 = pneg %p352
        %p680 = pneg %p349
        %p681 = pneg %p373
        %p682 = pneg %p370
        %p683 = pneg %p394
        %p684 = pneg %p391
        %p685 = pneg %p415
        %p686 = pneg %p412
        %p687 = pneg %p436
        %p688 = pneg %p433
        %p689 = pneg %p457
        %p690 = pneg %p454
        %p691 = pneg %p478
        %p692 = pneg %p475
        %p693 = pneg %p499
        %p694 = pneg %p496
        %p695 = pneg %p520
        %p696 = pneg %p517
        %p697 = pneg %p546
        %p698 = pneg %p543
        %s699 = sand.u32 %s533, 1
        %s700 = scalar_lea.sflag [#allocation4], %s699
        %s701 = sand.u32 %s533, 1
        %s702 = scalar_lea.vmem [#allocation3], %s701
        %p703 = scmp.lt.s32.totalorder %s37, 1
        %s704 = scalar_select %p703, %s37, 1
        %s705 = smul.addr %s704, 5
        %s706 = smul.addr %s705, 4
        %s707 = scalar_lea.vmem %s0, %s706
        %v709 = vld [vmem:[%s707] sm:$0xff]
        %v710 = vld [vmem:[%s707 + $0x8] sm:$0xff]
        %v711 = vld [vmem:[%s707 + $0x10] sm:$0xf]
        %v712 = vld [vmem:[%s1] sm:$0x1f]
        %v714 = vlaneseq
        %v715 = vshrl.u32 %v714, 7
        %v716 = vsub.s32 0, %v715
        %v717 = vrot.slane %v712, %v716
        %v718 = vlaneseq
        %v719 = vshrl.u32 %v718, 7
        %v720 = vsub.s32 1, %v719
        %v721 = vrot.slane %v712, %v720
        %v722 = vlaneseq
        %v723 = vshrl.u32 %v722, 7
        %v724 = vsub.s32 2, %v723
        %v725 = vrot.slane %v712, %v724
        %v726 = vlaneseq
        %v727 = vshrl.u32 %v726, 7
        %v728 = vsub.s32 3, %v727
        %v729 = vrot.slane %v712, %v728
        %v730 = vlaneseq
        %v731 = vshrl.u32 %v730, 7
        %v732 = vsub.s32 4, %v731
        %v733 = vrot.slane %v712, %v732
        %v735 = vcombine.low %v717, %v721
        %v736 = vcombine.low %v725, %v729
        %v739 = vsub.f32 %v709, %v735
        %v740 = vsub.f32 %v710, %v736
        %v741 = vsub.f32 %v711, %v733
        %v742 = vld [vmem:[%s2] sm:$0x1f]
        %v744 = vlaneseq
        %v745 = vshrl.u32 %v744, 7
        %v746 = vsub.s32 0, %v745
        %v747 = vrot.slane %v742, %v746
        %v748 = vlaneseq
        %v749 = vshrl.u32 %v748, 7
        %v750 = vsub.s32 1, %v749
        %v751 = vrot.slane %v742, %v750
        %v752 = vlaneseq
        %v753 = vshrl.u32 %v752, 7
        %v754 = vsub.s32 2, %v753
        %v755 = vrot.slane %v742, %v754
        %v756 = vlaneseq
        %v757 = vshrl.u32 %v756, 7
        %v758 = vsub.s32 3, %v757
        %v759 = vrot.slane %v742, %v758
        %v760 = vlaneseq
        %v761 = vshrl.u32 %v760, 7
        %v762 = vsub.s32 4, %v761
        %v763 = vrot.slane %v742, %v762
        %v765 = vcombine.low %v747, %v751
        %v766 = vcombine.low %v755, %v759
        %v769 = vmul.f32 %v739, %v765
        %v770 = vmul.f32 %v740, %v766
        %v771 = vmul.f32 %v741, %v763
        %v772 = vld [vmem:[%s3] sm:$0xf]
        %v773 = vld [vmem:[%s3 + $0x4] sm:$0xf]
        %v774 = vld [vmem:[%s3 + $0x8] sm:$0xf]
        %v775 = vld [vmem:[%s3 + $0xc] sm:$0xf]
        %v776 = vld [vmem:[%s3 + $0x10] sm:$0xf]
        %v777 = vld [vmem:[%s3 + $0x14] sm:$0xf]
        %v778 = vld [vmem:[%s3 + $0x18] sm:$0xf]
        %v779 = vld [vmem:[%s3 + $0x1c] sm:$0xf]
        %v780 = vld [vmem:[%s3 + $0x20] sm:$0xf]
        %v781 = vld [vmem:[%s3 + $0x24] sm:$0xf]
        %v782 = vld [vmem:[%s3 + $0x28] sm:$0xf]
        %v783 = vld [vmem:[%s3 + $0x2c] sm:$0xf]
        %v784 = vld [vmem:[%s3 + $0x30] sm:$0xf]
        %v785 = vld [vmem:[%s3 + $0x34] sm:$0xf]
        %v786 = vld [vmem:[%s3 + $0x38] sm:$0xf]
        %v787 = vld [vmem:[%s3 + $0x3c] sm:$0xf]
        %v788 = vld [vmem:[%s3 + $0x40] sm:$0xf]
        %v789 = vld [vmem:[%s3 + $0x44] sm:$0xf]
        %v790 = vld [vmem:[%s3 + $0x48] sm:$0xf]
        %v791 = vld [vmem:[%s3 + $0x4c] sm:$0xf]
        %v792 = vld [vmem:[%s3 + $0x50] sm:$0xf]
        %v793 = vld [vmem:[%s3 + $0x54] sm:$0xf]
        %v794 = vld [vmem:[%s3 + $0x58] sm:$0xf]
        %v795 = vld [vmem:[%s3 + $0x5c] sm:$0xf]
        %v796 = vld [vmem:[%s3 + $0x60] sm:$0xf]
        %v797 = vld [vmem:[%s3 + $0x64] sm:$0xf]
        %v798 = vld [vmem:[%s3 + $0x68] sm:$0xf]
        %v799 = vld [vmem:[%s3 + $0x6c] sm:$0xf]
        %v800 = vld [vmem:[%s3 + $0x70] sm:$0xf]
        %v801 = vld [vmem:[%s3 + $0x74] sm:$0xf]
        %v802 = vld [vmem:[%s3 + $0x78] sm:$0xf]
        %v803 = vld [vmem:[%s3 + $0x7c] sm:$0xf]
        %v804 = vld [vmem:[%s3 + $0x80] sm:$0xf]
        %v805 = vld [vmem:[%s3 + $0x84] sm:$0xf]
        %v806 = vld [vmem:[%s3 + $0x88] sm:$0xf]
        %v807 = vld [vmem:[%s3 + $0x8c] sm:$0xf]
        %v808 = vld [vmem:[%s3 + $0x90] sm:$0xf]
        %v809 = vld [vmem:[%s3 + $0x94] sm:$0xf]
        %v810 = vld [vmem:[%s3 + $0x98] sm:$0xf]
        %v811 = vld [vmem:[%s3 + $0x9c] sm:$0xf]
        %v812 = vld [vmem:[%s3 + $0xa0] sm:$0xf]
        %v813 = vld [vmem:[%s3 + $0xa4] sm:$0xf]
        %v814 = vld [vmem:[%s3 + $0xa8] sm:$0xf]
        %v815 = vld [vmem:[%s3 + $0xac] sm:$0xf]
        %v816 = vld [vmem:[%s3 + $0xb0] sm:$0xf]
        %v817 = vld [vmem:[%s3 + $0xb4] sm:$0xf]
        %v818 = vld [vmem:[%s3 + $0xb8] sm:$0xf]
        %v819 = vld [vmem:[%s3 + $0xbc] sm:$0xf]
        %v820 = vld [vmem:[%s3 + $0xc0] sm:$0xf]
        %v821 = vld [vmem:[%s3 + $0xc4] sm:$0xf]
        %v822 = vld [vmem:[%s3 + $0xc8] sm:$0xf]
        %v823 = vld [vmem:[%s3 + $0xcc] sm:$0xf]
        %v824 = vld [vmem:[%s3 + $0xd0] sm:$0xf]
        %v825 = vld [vmem:[%s3 + $0xd4] sm:$0xf]
        %v826 = vld [vmem:[%s3 + $0xd8] sm:$0xf]
        %v827 = vld [vmem:[%s3 + $0xdc] sm:$0xf]
        %v828 = vld [vmem:[%s3 + $0xe0] sm:$0xf]
        %v829 = vld [vmem:[%s3 + $0xe4] sm:$0xf]
        %v830 = vld [vmem:[%s3 + $0xe8] sm:$0xf]
        %v831 = vld [vmem:[%s3 + $0xec] sm:$0xf]
        %v832 = vld [vmem:[%s3 + $0xf0] sm:$0xf]
        %v833 = vld [vmem:[%s3 + $0xf4] sm:$0xf]
        %v834 = vld [vmem:[%s3 + $0xf8] sm:$0xf]
        %v835 = vld [vmem:[%s3 + $0xfc] sm:$0xf]
        %v836 = vld [vmem:[%s3 + $0x100] sm:$0xf]
        %v837 = vld [vmem:[%s3 + $0x104] sm:$0xf]
        %v838 = vld [vmem:[%s3 + $0x108] sm:$0xf]
        %v839 = vld [vmem:[%s3 + $0x10c] sm:$0xf]
        %v840 = vld [vmem:[%s3 + $0x110] sm:$0xf]
        %v841 = vld [vmem:[%s3 + $0x114] sm:$0xf]
        %v842 = vld [vmem:[%s3 + $0x118] sm:$0xf]
        %v843 = vld [vmem:[%s3 + $0x11c] sm:$0xf]
        %v844 = vld [vmem:[%s3 + $0x120] sm:$0xf]
        %v845 = vld [vmem:[%s3 + $0x124] sm:$0x3]
        %v848 = vcombine.high %v769, %v769
        %v849 = vcombine.high %v770, %v770
        %v852 = vpack.c.bf16 %v769, %v769
        %v853 = vpack.c.bf16 %v848, %v848
        %v854 = vpack.c.bf16 %v770, %v770
        %v855 = vpack.c.bf16 %v849, %v849
        %v856 = vpack.c.bf16 %v771, %v771
        %v857 = vld [vmem:[%s4] sm:$0x1]
        %v859 = vlaneseq
        %v860 = vshrl.u32 %v859, 7
        %v861 = vsub.s32 0, %v860
        %v862 = vrot.slane %v857, %v861
        %v938 = vunpack.c.l.b16 %v772
        %v939 = vunpack.c.l.b16 %v773
        %v940 = vunpack.c.l.b16 %v774
        %v941 = vunpack.c.l.b16 %v775
        %v942 = vunpack.c.l.b16 %v776
        %v943 = vunpack.c.l.b16 %v777
        %v944 = vunpack.c.l.b16 %v778
        %v945 = vunpack.c.l.b16 %v779
        %v946 = vunpack.c.l.b16 %v780
        %v947 = vunpack.c.l.b16 %v781
        %v948 = vunpack.c.l.b16 %v782
        %v949 = vunpack.c.l.b16 %v783
        %v950 = vunpack.c.l.b16 %v784
        %v951 = vunpack.c.l.b16 %v785
        %v952 = vunpack.c.l.b16 %v786
        %v953 = vunpack.c.l.b16 %v787
        %v954 = vunpack.c.l.b16 %v788
        %v955 = vunpack.c.l.b16 %v789
        %v956 = vunpack.c.l.b16 %v790
        %v957 = vunpack.c.l.b16 %v791
        %v958 = vunpack.c.l.b16 %v792
        %v959 = vunpack.c.l.b16 %v793
        %v960 = vunpack.c.l.b16 %v794
        %v961 = vunpack.c.l.b16 %v795
        %v962 = vunpack.c.l.b16 %v796
        %v963 = vunpack.c.l.b16 %v797
        %v964 = vunpack.c.l.b16 %v798
        %v965 = vunpack.c.l.b16 %v799
        %v966 = vunpack.c.l.b16 %v800
        %v967 = vunpack.c.l.b16 %v801
        %v968 = vunpack.c.l.b16 %v802
        %v969 = vunpack.c.l.b16 %v803
        %v970 = vunpack.c.l.b16 %v804
        %v971 = vunpack.c.l.b16 %v805
        %v972 = vunpack.c.l.b16 %v806
        %v973 = vunpack.c.l.b16 %v807
        %v974 = vunpack.c.l.b16 %v808
        %v975 = vunpack.c.l.b16 %v809
        %v976 = vunpack.c.l.b16 %v810
        %v977 = vunpack.c.l.b16 %v811
        %v978 = vunpack.c.l.b16 %v812
        %v979 = vunpack.c.l.b16 %v813
        %v980 = vunpack.c.l.b16 %v814
        %v981 = vunpack.c.l.b16 %v815
        %v982 = vunpack.c.l.b16 %v816
        %v983 = vunpack.c.l.b16 %v817
        %v984 = vunpack.c.l.b16 %v818
        %v985 = vunpack.c.l.b16 %v819
        %v986 = vunpack.c.l.b16 %v820
        %v987 = vunpack.c.l.b16 %v821
        %v988 = vunpack.c.l.b16 %v822
        %v989 = vunpack.c.l.b16 %v823
        %v990 = vunpack.c.l.b16 %v824
        %v991 = vunpack.c.l.b16 %v825
        %v992 = vunpack.c.l.b16 %v826
        %v993 = vunpack.c.l.b16 %v827
        %v994 = vunpack.c.l.b16 %v828
        %v995 = vunpack.c.l.b16 %v829
        %v996 = vunpack.c.l.b16 %v830
        %v997 = vunpack.c.l.b16 %v831
        %v998 = vunpack.c.l.b16 %v832
        %v999 = vunpack.c.l.b16 %v833
        %v1000 = vunpack.c.l.b16 %v834
        %v1001 = vunpack.c.l.b16 %v835
        %v1002 = vunpack.c.l.b16 %v836
        %v1003 = vunpack.c.l.b16 %v837
        %v1004 = vunpack.c.l.b16 %v838
        %v1005 = vunpack.c.l.b16 %v839
        %v1006 = vunpack.c.l.b16 %v840
        %v1007 = vunpack.c.l.b16 %v841
        %v1008 = vunpack.c.l.b16 %v842
        %v1009 = vunpack.c.l.b16 %v843
        %v1010 = vunpack.c.l.b16 %v844
        %v1011 = vunpack.c.l.b16 %v845
        %v1012 = vpack.c.b16 %v939, %v938
        %v1013 = vpack.c.b16 %v941, %v940
        %v1014 = vpack.c.b16 %v943, %v942
        %v1015 = vpack.c.b16 %v945, %v944
        %v1016 = vpack.c.b16 %v947, %v946
        %v1017 = vpack.c.b16 %v949, %v948
        %v1018 = vpack.c.b16 %v951, %v950
        %v1019 = vpack.c.b16 %v953, %v952
        %v1020 = vpack.c.b16 %v955, %v954
        %v1021 = vpack.c.b16 %v957, %v956
        %v1022 = vpack.c.b16 %v959, %v958
        %v1023 = vpack.c.b16 %v961, %v960
        %v1024 = vpack.c.b16 %v963, %v962
        %v1025 = vpack.c.b16 %v965, %v964
        %v1026 = vpack.c.b16 %v967, %v966
        %v1027 = vpack.c.b16 %v969, %v968
        %v1028 = vpack.c.b16 %v971, %v970
        %v1029 = vpack.c.b16 %v973, %v972
        %v1030 = vpack.c.b16 %v975, %v974
        %v1031 = vpack.c.b16 %v977, %v976
        %v1032 = vpack.c.b16 %v979, %v978
        %v1033 = vpack.c.b16 %v981, %v980
        %v1034 = vpack.c.b16 %v983, %v982
        %v1035 = vpack.c.b16 %v985, %v984
        %v1036 = vpack.c.b16 %v987, %v986
        %v1037 = vpack.c.b16 %v989, %v988
        %v1038 = vpack.c.b16 %v991, %v990
        %v1039 = vpack.c.b16 %v993, %v992
        %v1040 = vpack.c.b16 %v995, %v994
        %v1041 = vpack.c.b16 %v997, %v996
        %v1042 = vpack.c.b16 %v999, %v998
        %v1043 = vpack.c.b16 %v1001, %v1000
        %v1044 = vpack.c.b16 %v1003, %v1002
        %v1045 = vpack.c.b16 %v1005, %v1004
        %v1046 = vpack.c.b16 %v1007, %v1006
        %v1047 = vpack.c.b16 %v1009, %v1008
        %v1048 = vpack.c.b16 %v1011, %v1010
        %vm1085 = vcmask 621568
        %v1087 = vsel %vm1085, %v856, 0
        %vm1089 = vcmask 1045504
        %v1091 = vsel %vm1089, %v1048, 0
        %1093 = vmatprep.subr.bf16.mxu0 0
        %1094 = vmatpush1.bf16.msra.mxu0 %v1019
        %1095 = vmatprep.subr.bf16.mxu0 0
        %1096 = vmatpush1.bf16.msra.mxu0 %v1018
        %1097 = vmatprep.subr.bf16.mxu0 0
        %1098 = vmatpush1.bf16.msra.mxu0 %v1017
        %1099 = vmatprep.subr.bf16.mxu0 0
        %1100 = vmatpush1.bf16.msra.mxu0 %v1016
        %1101 = vmatprep.subr.bf16.mxu0 0
        %1102 = vmatpush1.bf16.msra.mxu0 %v1015
        %1103 = vmatprep.subr.bf16.mxu0 0
        %1104 = vmatpush1.bf16.msra.mxu0 %v1014
        %1105 = vmatprep.subr.bf16.mxu0 0
        %1106 = vmatpush1.bf16.msra.mxu0 %v1013
        %1107 = vmatprep.subr.bf16.mxu0 0
        %1108 = vmatpush1.bf16.msra.mxu0 %v1012
        %1109 = vmatprep.subr.bf16.mxu0 0
        %1110 = vmatpush2.bf16.msra.mxu0 %v1027
        %1111 = vmatprep.subr.bf16.mxu0 0
        %1112 = vmatpush2.bf16.msra.mxu0 %v1026
        %1113 = vmatprep.subr.bf16.mxu0 0
        %1114 = vmatpush2.bf16.msra.mxu0 %v1025
        %1115 = vmatprep.subr.bf16.mxu0 0
        %1116 = vmatpush2.bf16.msra.mxu0 %v1024
        %1117 = vmatprep.subr.bf16.mxu0 0
        %1118 = vmatpush2.bf16.msra.mxu0 %v1023
        %1119 = vmatprep.subr.bf16.mxu0 0
        %1120 = vmatpush2.bf16.msra.mxu0 %v1022
        %1121 = vmatprep.subr.bf16.mxu0 0
        %1122 = vmatpush2.bf16.msra.mxu0 %v1021
        %1123 = vmatprep.subr.bf16.mxu0 0
        %1124 = vmatpush2.bf16.msra.mxu0 %v1020
        %1125 = vmatprep.mubr.bf16.mxu0 %v853
        %1126 = vmatmul.mubr.bf16.gmra.mxu0 %v852
        %v1127 = vpop.f32.mrf.mxu0
        %v1128 = vadd.f32 %v862, %v1127
        %v1129 = vpop.f32.mrf.mxu0
        %v1130 = vpop.f32.mrf.mxu0
        %v1131 = vpop.f32.mrf.mxu0
        %1132 = vdwg.mxu0
        %1133 = vmatprep.subr.bf16.mxu0 0
        %1134 = vmatpush1.bf16.msra.mxu0 %v1035
        %1135 = vmatprep.subr.bf16.mxu0 0
        %1136 = vmatpush1.bf16.msra.mxu0 %v1034
        %1137 = vmatprep.subr.bf16.mxu0 0
        %1138 = vmatpush1.bf16.msra.mxu0 %v1033
        %1139 = vmatprep.subr.bf16.mxu0 0
        %1140 = vmatpush1.bf16.msra.mxu0 %v1032
        %1141 = vmatprep.subr.bf16.mxu0 0
        %1142 = vmatpush1.bf16.msra.mxu0 %v1031
        %1143 = vmatprep.subr.bf16.mxu0 0
        %1144 = vmatpush1.bf16.msra.mxu0 %v1030
        %1145 = vmatprep.subr.bf16.mxu0 0
        %1146 = vmatpush1.bf16.msra.mxu0 %v1029
        %1147 = vmatprep.subr.bf16.mxu0 0
        %1148 = vmatpush1.bf16.msra.mxu0 %v1028
        %1149 = vmatprep.subr.bf16.mxu0 0
        %1150 = vmatpush2.bf16.msra.mxu0 %v1043
        %1151 = vmatprep.subr.bf16.mxu0 0
        %1152 = vmatpush2.bf16.msra.mxu0 %v1042
        %1153 = vmatprep.subr.bf16.mxu0 0
        %1154 = vmatpush2.bf16.msra.mxu0 %v1041
        %1155 = vmatprep.subr.bf16.mxu0 0
        %1156 = vmatpush2.bf16.msra.mxu0 %v1040
        %1157 = vmatprep.subr.bf16.mxu0 0
        %1158 = vmatpush2.bf16.msra.mxu0 %v1039
        %1159 = vmatprep.subr.bf16.mxu0 0
        %1160 = vmatpush2.bf16.msra.mxu0 %v1038
        %1161 = vmatprep.subr.bf16.mxu0 0
        %1162 = vmatpush2.bf16.msra.mxu0 %v1037
        %1163 = vmatprep.subr.bf16.mxu0 0
        %1164 = vmatpush2.bf16.msra.mxu0 %v1036
        %1165 = vmatprep.mubr.bf16.mxu0 %v855
        %1166 = vmatmul.mubr.bf16.gmra.mxu0 %v854
        %v1167 = vpop.f32.mrf.mxu0
        %v1168 = vadd.f32 %v1128, %v1167
        %v1169 = vpop.f32.mrf.mxu0
        %v1170 = vpop.f32.mrf.mxu0
        %v1171 = vpop.f32.mrf.mxu0
        %1172 = vdwg.mxu0
        %1173 = vmatprep.subr.bf16.mxu0 0
        %1174 = vmatpush1.bf16.msra.mxu0 0
        %1175 = vmatprep.subr.bf16.mxu0 0
        %1176 = vmatpush1.bf16.msra.mxu0 0
        %1177 = vmatprep.subr.bf16.mxu0 0
        %1178 = vmatpush1.bf16.msra.mxu0 0
        %1179 = vmatprep.subr.bf16.mxu0 0
        %1180 = vmatpush1.bf16.msra.mxu0 %v1091
        %1181 = vmatprep.subr.bf16.mxu0 0
        %1182 = vmatpush1.bf16.msra.mxu0 %v1047
        %1183 = vmatprep.subr.bf16.mxu0 0
        %1184 = vmatpush1.bf16.msra.mxu0 %v1046
        %1185 = vmatprep.subr.bf16.mxu0 0
        %1186 = vmatpush1.bf16.msra.mxu0 %v1045
        %1187 = vmatprep.subr.bf16.mxu0 0
        %1188 = vmatpush1.bf16.msra.mxu0 %v1044
        %1189 = vmatprep.subr.bf16.mxu0 0
        %1190 = vmatpush2.bf16.msra.mxu0 0
        %1191 = vmatprep.subr.bf16.mxu0 0
        %1192 = vmatpush2.bf16.msra.mxu0 0
        %1193 = vmatprep.subr.bf16.mxu0 0
        %1194 = vmatpush2.bf16.msra.mxu0 0
        %1195 = vmatprep.subr.bf16.mxu0 0
        %1196 = vmatpush2.bf16.msra.mxu0 0
        %1197 = vmatprep.subr.bf16.mxu0 0
        %1198 = vmatpush2.bf16.msra.mxu0 0
        %1199 = vmatprep.subr.bf16.mxu0 0
        %1200 = vmatpush2.bf16.msra.mxu0 0
        %1201 = vmatprep.subr.bf16.mxu0 0
        %1202 = vmatpush2.bf16.msra.mxu0 0
        %1203 = vmatprep.subr.bf16.mxu0 0
        %1204 = vmatpush2.bf16.msra.mxu0 0
        %1205 = vmatprep.mubr.bf16.mxu0 0
        %1206 = vmatmul.mubr.bf16.gmra.mxu0 %v1087
        %v1207 = vpop.f32.mrf.mxu0
        %v1208 = vadd.f32 %v1168, %v1207
        %v1209 = vpop.f32.mrf.mxu0
        %v1210 = vpop.f32.mrf.mxu0
        %v1211 = vpop.f32.mrf.mxu0
        %1212 = vdwg.mxu0
        %vm1213 = vcmask 261120
        %1214 = vst.msk [vmem:[#allocation2] sm:$0xff] %vm1213, 0.0
        %v1215 = vld [vmem:[%s5] sm:$0x1]
        %vm1216 = vcmask 253952
        %1217 = vst.msk [vmem:[#allocation2] sm:$0x1] %vm1216, %v1215
        %v1218 = vld [vmem:[%s6] sm:$0xf]
        %v1219 = vadd.f32 %v1208, %v1218
        %vm1220 = vcmask 257024
        %1221 = vst.msk [vmem:[#allocation2 + $0x1] sm:$0xf] %vm1220, %v1219
        %v1222 = vld [vmem:[#allocation2] sm:$0xff]
        %v1223 = vlaneseq
        %v1224 = vand.u32 %v1223, 127
        %vm1225 = vcmp.lt.s32.totalorder %v1224, 5
        %v1226 = vsel %vm1225, 0.0, -1e+09
        %v1227 = vld [vmem:[%s7] sm:$0x1]
        %v1228 = vld [vmem:[%s8] sm:$0x1]
        %v1229 = vsel %vm1213, %v1222, 0.0
        %1230 = vadd.xlane.f32.xlu0 %v1229
        %v1231 = vpop.xlane.xlu0 %1230
        %v1232 = vrcp.pop 32.0
        %v1233 = vmul.f32 %v1231, %v1232
        %v1234 = vsub.f32 %v1222, %v1233
        %v1235 = vmul.f32 %v1234, %v1234
        %v1236 = vsel %vm1213, %v1235, 0.0
        %1237 = vadd.xlane.f32.xlu0 %v1236
        %v1238 = vpop.xlane.xlu0 %1237
        %v1239 = vmul.f32 %v1238, %v1232
        %v1240 = vadd.f32 %v1239, 1e-06
        %v1241 = vrsqrt.pop %v1240
        %v1242 = vmul.f32 %v1234, %v1241
        %v1244 = vlaneseq
        %v1245 = vshrl.u32 %v1244, 7
        %v1246 = vsub.s32 0, %v1245
        %v1247 = vrot.slane %v1227, %v1246
        %v1249 = vmul.f32 %v1242, %v1247
        %v1251 = vlaneseq
        %v1252 = vshrl.u32 %v1251, 7
        %v1253 = vsub.s32 0, %v1252
        %v1254 = vrot.slane %v1228, %v1253
        %v1256 = vadd.f32 %v1249, %v1254
        %v1257 = vld [vmem:[%s9] sm:$0xf]
        %v1258 = vld [vmem:[%s9 + $0x4] sm:$0xf]
        %v1259 = vld [vmem:[%s9 + $0x8] sm:$0xf]
        %v1260 = vld [vmem:[%s9 + $0xc] sm:$0xf]
        %v1261 = vpack.c.bf16 %v1256, %v1256
        %v1262 = vld [vmem:[%s10] sm:$0x1]
        %v1264 = vlaneseq
        %v1265 = vshrl.u32 %v1264, 7
        %v1266 = vsub.s32 0, %v1265
        %v1267 = vrot.slane %v1262, %v1266
        %v1273 = vunpack.c.l.b16 %v1257
        %v1274 = vunpack.c.l.b16 %v1258
        %v1275 = vunpack.c.l.b16 %v1259
        %v1276 = vunpack.c.l.b16 %v1260
        %v1277 = vpack.c.b16 %v1274, %v1273
        %v1278 = vpack.c.b16 %v1276, %v1275
        %v1282 = vsel %vm1213, %v1261, 0
        %1284 = vmatprep.subr.bf16.mxu0 0
        %1285 = vmatpush1.bf16.msra.mxu0 0
        %1286 = vmatprep.subr.bf16.mxu0 0
        %1287 = vmatpush1.bf16.msra.mxu0 0
        %1288 = vmatprep.subr.bf16.mxu0 0
        %1289 = vmatpush1.bf16.msra.mxu0 0
        %1290 = vmatprep.subr.bf16.mxu0 0
        %1291 = vmatpush1.bf16.msra.mxu0 0
        %1292 = vmatprep.subr.bf16.mxu0 0
        %1293 = vmatpush1.bf16.msra.mxu0 0
        %1294 = vmatprep.subr.bf16.mxu0 0
        %1295 = vmatpush1.bf16.msra.mxu0 0
        %1296 = vmatprep.subr.bf16.mxu0 0
        %1297 = vmatpush1.bf16.msra.mxu0 %v1278
        %1298 = vmatprep.subr.bf16.mxu0 0
        %1299 = vmatpush1.bf16.msra.mxu0 %v1277
        %1300 = vmatprep.subr.bf16.mxu0 0
        %1301 = vmatpush2.bf16.msra.mxu0 0
        %1302 = vmatprep.subr.bf16.mxu0 0
        %1303 = vmatpush2.bf16.msra.mxu0 0
        %1304 = vmatprep.subr.bf16.mxu0 0
        %1305 = vmatpush2.bf16.msra.mxu0 0
        %1306 = vmatprep.subr.bf16.mxu0 0
        %1307 = vmatpush2.bf16.msra.mxu0 0
        %1308 = vmatprep.subr.bf16.mxu0 0
        %1309 = vmatpush2.bf16.msra.mxu0 0
        %1310 = vmatprep.subr.bf16.mxu0 0
        %1311 = vmatpush2.bf16.msra.mxu0 0
        %1312 = vmatprep.subr.bf16.mxu0 0
        %1313 = vmatpush2.bf16.msra.mxu0 0
        %1314 = vmatprep.subr.bf16.mxu0 0
        %1315 = vmatpush2.bf16.msra.mxu0 0
        %1316 = vmatprep.mubr.bf16.mxu0 0
        %1317 = vmatmul.mubr.bf16.gmra.mxu0 %v1282
        %v1318 = vpop.f32.mrf.mxu0
        %v1319 = vadd.f32 %v1267, %v1318
        %v1320 = vpop.f32.mrf.mxu0
        %v1321 = vpop.f32.mrf.mxu0
        %v1322 = vpop.f32.mrf.mxu0
        %1323 = vdwg.mxu0
        %v1324 = vmul.f32 %v1319, 0.35355338
        %1326 = vrot.lane.b32.xlu0 %v1319, 96
        %v1327 = vpop.permute.xlu0 %1326
        %vm1328 = vcmask 64512
        %v1330 = vsel %vm1328, %v1324, 0
        %v1332 = vsel %vm1328, %v1327, 0
        %1334 = vmatprep.subr.mxu0 0.0
        %1335 = vmatpush1.xpose.msra.mxu0 0.0
        %1336 = vmatprep.subr.mxu0 0.0
        %1337 = vmatpush1.xpose.msra.mxu0 0.0
        %1338 = vmatprep.subr.mxu0 0.0
        %1339 = vmatpush1.xpose.msra.mxu0 0.0
        %1340 = vmatprep.subr.mxu0 0.0
        %1341 = vmatpush1.xpose.msra.mxu0 0.0
        %1342 = vmatprep.subr.mxu0 0.0
        %1343 = vmatpush1.xpose.msra.mxu0 0.0
        %1344 = vmatprep.subr.mxu0 0.0
        %1345 = vmatpush1.xpose.msra.mxu0 0.0
        %1346 = vmatprep.subr.mxu0 0.0
        %1347 = vmatpush1.xpose.msra.mxu0 0.0
        %1348 = vmatprep.subr.mxu0 0.0
        %1349 = vmatpush1.xpose.msra.mxu0 0.0
        %1350 = vmatprep.subr.mxu0 0.0
        %1351 = vmatpush1.xpose.msra.mxu0 0.0
        %1352 = vmatprep.subr.mxu0 0.0
        %1353 = vmatpush1.xpose.msra.mxu0 0.0
        %1354 = vmatprep.subr.mxu0 0.0
        %1355 = vmatpush1.xpose.msra.mxu0 0.0
        %1356 = vmatprep.subr.mxu0 0.0
        %1357 = vmatpush1.xpose.msra.mxu0 0.0
        %1358 = vmatprep.subr.mxu0 0.0
        %1359 = vmatpush1.xpose.msra.mxu0 0.0
        %1360 = vmatprep.subr.mxu0 0.0
        %1361 = vmatpush1.xpose.msra.mxu0 0.0
        %1362 = vmatprep.subr.mxu0 0.0
        %1363 = vmatpush1.xpose.msra.mxu0 0.0
        %1364 = vmatprep.subr.mxu0 0.0
        %1365 = vmatpush1.xpose.msra.mxu0 %v1332
        %1366 = vmatprep.subr.mxu0 0.0
        %1367 = vmatpush2.xpose.msra.mxu0 0.0
        %1368 = vmatprep.subr.mxu0 0.0
        %1369 = vmatpush2.xpose.msra.mxu0 0.0
        %1370 = vmatprep.subr.mxu0 0.0
        %1371 = vmatpush2.xpose.msra.mxu0 0.0
        %1372 = vmatprep.subr.mxu0 0.0
        %1373 = vmatpush2.xpose.msra.mxu0 0.0
        %1374 = vmatprep.subr.mxu0 0.0
        %1375 = vmatpush2.xpose.msra.mxu0 0.0
        %1376 = vmatprep.subr.mxu0 0.0
        %1377 = vmatpush2.xpose.msra.mxu0 0.0
        %1378 = vmatprep.subr.mxu0 0.0
        %1379 = vmatpush2.xpose.msra.mxu0 0.0
        %1380 = vmatprep.subr.mxu0 0.0
        %1381 = vmatpush2.xpose.msra.mxu0 0.0
        %1382 = vmatprep.subr.mxu0 0.0
        %1383 = vmatpush2.xpose.msra.mxu0 0.0
        %1384 = vmatprep.subr.mxu0 0.0
        %1385 = vmatpush2.xpose.msra.mxu0 0.0
        %1386 = vmatprep.subr.mxu0 0.0
        %1387 = vmatpush2.xpose.msra.mxu0 0.0
        %1388 = vmatprep.subr.mxu0 0.0
        %1389 = vmatpush2.xpose.msra.mxu0 0.0
        %1390 = vmatprep.subr.mxu0 0.0
        %1391 = vmatpush2.xpose.msra.mxu0 0.0
        %1392 = vmatprep.subr.mxu0 0.0
        %1393 = vmatpush2.xpose.msra.mxu0 0.0
        %1394 = vmatprep.subr.mxu0 0.0
        %1395 = vmatpush2.xpose.msra.mxu0 0.0
        %1396 = vmatprep.subr.mxu0 0.0
        %1397 = vmatpush2.xpose.msra.mxu0 0.0
        %1398 = vmatprep.mubr.f32.mxu0 0.0
        %1399 = vmatmul.mubr.f32.gmra.mxu0 %v1330
        %v1400 = vpop.f32.mrf.mxu0
        %v1401 = vadd.f32 %v1226, %v1400
        %v1402 = vpop.f32.mrf.mxu0
        %1403 = vdwg.mxu0
        %v1404 = vsel %vm1328, %v1401, -inf
        %1405 = vmax.xlane.f32.xlu0 %v1404
        %v1406 = vpop.xlane.xlu0 %1405
        %v1407 = vsub.f32 %v1401, %v1406
        %v1408 = vmul.f32 %v1407, 1.442695
        %v1409 = vpow.pop %v1408
        %v1410 = vsel %vm1328, %v1409, 0.0
        %1411 = vadd.xlane.f32.xlu0 %v1410
        %v1412 = vpop.xlane.xlu0 %1411
        %v1413 = vrcp.pop %v1412
        %v1414 = vmul.f32 %v1409, %v1413
        %1415 = vrot.lane.b32.xlu0 %v1319, 64
        %v1416 = vpop.permute.xlu0 %1415
        %v1419 = vsel %vm1328, %v1414, 0
        %1421 = vmatprep.subr.mxu0 0.0
        %1422 = vmatpush1.msra.mxu0 0.0
        %1423 = vmatprep.subr.mxu0 0.0
        %1424 = vmatpush1.msra.mxu0 0.0
        %1425 = vmatprep.subr.mxu0 0.0
        %1426 = vmatpush1.msra.mxu0 0.0
        %1427 = vmatprep.subr.mxu0 0.0
        %1428 = vmatpush1.msra.mxu0 0.0
        %1429 = vmatprep.subr.mxu0 0.0
        %1430 = vmatpush1.msra.mxu0 0.0
        %1431 = vmatprep.subr.mxu0 0.0
        %1432 = vmatpush1.msra.mxu0 0.0
        %1433 = vmatprep.subr.mxu0 0.0
        %1434 = vmatpush1.msra.mxu0 0.0
        %1435 = vmatprep.subr.mxu0 0.0
        %1436 = vmatpush1.msra.mxu0 0.0
        %1437 = vmatprep.subr.mxu0 0.0
        %1438 = vmatpush1.msra.mxu0 0.0
        %1439 = vmatprep.subr.mxu0 0.0
        %1440 = vmatpush1.msra.mxu0 0.0
        %1441 = vmatprep.subr.mxu0 0.0
        %1442 = vmatpush1.msra.mxu0 0.0
        %1443 = vmatprep.subr.mxu0 0.0
        %1444 = vmatpush1.msra.mxu0 0.0
        %1445 = vmatprep.subr.mxu0 0.0
        %1446 = vmatpush1.msra.mxu0 0.0
        %1447 = vmatprep.subr.mxu0 0.0
        %1448 = vmatpush1.msra.mxu0 0.0
        %1449 = vmatprep.subr.mxu0 0.0
        %1450 = vmatpush1.msra.mxu0 0.0
        %1451 = vmatprep.subr.mxu0 0.0
        %1452 = vmatpush1.msra.mxu0 %v1416
        %1453 = vmatprep.subr.mxu0 0.0
        %1454 = vmatpush2.msra.mxu0 0.0
        %1455 = vmatprep.subr.mxu0 0.0
        %1456 = vmatpush2.msra.mxu0 0.0
        %1457 = vmatprep.subr.mxu0 0.0
        %1458 = vmatpush2.msra.mxu0 0.0
        %1459 = vmatprep.subr.mxu0 0.0
        %1460 = vmatpush2.msra.mxu0 0.0
        %1461 = vmatprep.subr.mxu0 0.0
        %1462 = vmatpush2.msra.mxu0 0.0
        %1463 = vmatprep.subr.mxu0 0.0
        %1464 = vmatpush2.msra.mxu0 0.0
        %1465 = vmatprep.subr.mxu0 0.0
        %1466 = vmatpush2.msra.mxu0 0.0
        %1467 = vmatprep.subr.mxu0 0.0
        %1468 = vmatpush2.msra.mxu0 0.0
        %1469 = vmatprep.subr.mxu0 0.0
        %1470 = vmatpush2.msra.mxu0 0.0
        %1471 = vmatprep.subr.mxu0 0.0
        %1472 = vmatpush2.msra.mxu0 0.0
        %1473 = vmatprep.subr.mxu0 0.0
        %1474 = vmatpush2.msra.mxu0 0.0
        %1475 = vmatprep.subr.mxu0 0.0
        %1476 = vmatpush2.msra.mxu0 0.0
        %1477 = vmatprep.subr.mxu0 0.0
        %1478 = vmatpush2.msra.mxu0 0.0
        %1479 = vmatprep.subr.mxu0 0.0
        %1480 = vmatpush2.msra.mxu0 0.0
        %1481 = vmatprep.subr.mxu0 0.0
        %1482 = vmatpush2.msra.mxu0 0.0
        %1483 = vmatprep.subr.mxu0 0.0
        %1484 = vmatpush2.msra.mxu0 0.0
        %1485 = vmatprep.mubr.f32.mxu0 0.0
        %1486 = vmatmul.mubr.f32.gmra.mxu0 %v1419
        %v1487 = vpop.f32.mrf.mxu0
        %v1488 = vadd.f32 0.0, %v1487
        %v1489 = vpop.f32.mrf.mxu0
        %1490 = vdwg.mxu0
        %1491 = vst.msk [vmem:[#allocation2] sm:$0xff] %vm1328, %v1488
        %1492 = vrot.lane.b32.xlu0 %v1324, 120
        %v1493 = vpop.permute.xlu0 %1492
        %1494 = vrot.lane.b32.xlu0 %v1319, 88
        %v1495 = vpop.permute.xlu0 %1494
        %v1496 = vsel %vm1328, %v1493, 0
        %v1498 = vsel %vm1328, %v1495, 0
        %1500 = vmatprep.subr.mxu0 0.0
        %1501 = vmatpush1.xpose.msra.mxu0 0.0
        %1502 = vmatprep.subr.mxu0 0.0
        %1503 = vmatpush1.xpose.msra.mxu0 0.0
        %1504 = vmatprep.subr.mxu0 0.0
        %1505 = vmatpush1.xpose.msra.mxu0 0.0
        %1506 = vmatprep.subr.mxu0 0.0
        %1507 = vmatpush1.xpose.msra.mxu0 0.0
        %1508 = vmatprep.subr.mxu0 0.0
        %1509 = vmatpush1.xpose.msra.mxu0 0.0
        %1510 = vmatprep.subr.mxu0 0.0
        %1511 = vmatpush1.xpose.msra.mxu0 0.0
        %1512 = vmatprep.subr.mxu0 0.0
        %1513 = vmatpush1.xpose.msra.mxu0 0.0
        %1514 = vmatprep.subr.mxu0 0.0
        %1515 = vmatpush1.xpose.msra.mxu0 0.0
        %1516 = vmatprep.subr.mxu0 0.0
        %1517 = vmatpush1.xpose.msra.mxu0 0.0
        %1518 = vmatprep.subr.mxu0 0.0
        %1519 = vmatpush1.xpose.msra.mxu0 0.0
        %1520 = vmatprep.subr.mxu0 0.0
        %1521 = vmatpush1.xpose.msra.mxu0 0.0
        %1522 = vmatprep.subr.mxu0 0.0
        %1523 = vmatpush1.xpose.msra.mxu0 0.0
        %1524 = vmatprep.subr.mxu0 0.0
        %1525 = vmatpush1.xpose.msra.mxu0 0.0
        %1526 = vmatprep.subr.mxu0 0.0
        %1527 = vmatpush1.xpose.msra.mxu0 0.0
        %1528 = vmatprep.subr.mxu0 0.0
        %1529 = vmatpush1.xpose.msra.mxu0 0.0
        %1530 = vmatprep.subr.mxu0 0.0
        %1531 = vmatpush1.xpose.msra.mxu0 %v1498
        %1532 = vmatprep.subr.mxu0 0.0
        %1533 = vmatpush2.xpose.msra.mxu0 0.0
        %1534 = vmatprep.subr.mxu0 0.0
        %1535 = vmatpush2.xpose.msra.mxu0 0.0
        %1536 = vmatprep.subr.mxu0 0.0
        %1537 = vmatpush2.xpose.msra.mxu0 0.0
        %1538 = vmatprep.subr.mxu0 0.0
        %1539 = vmatpush2.xpose.msra.mxu0 0.0
        %1540 = vmatprep.subr.mxu0 0.0
        %1541 = vmatpush2.xpose.msra.mxu0 0.0
        %1542 = vmatprep.subr.mxu0 0.0
        %1543 = vmatpush2.xpose.msra.mxu0 0.0
        %1544 = vmatprep.subr.mxu0 0.0
        %1545 = vmatpush2.xpose.msra.mxu0 0.0
        %1546 = vmatprep.subr.mxu0 0.0
        %1547 = vmatpush2.xpose.msra.mxu0 0.0
        %1548 = vmatprep.subr.mxu0 0.0
        %1549 = vmatpush2.xpose.msra.mxu0 0.0
        %1550 = vmatprep.subr.mxu0 0.0
        %1551 = vmatpush2.xpose.msra.mxu0 0.0
        %1552 = vmatprep.subr.mxu0 0.0
        %1553 = vmatpush2.xpose.msra.mxu0 0.0
        %1554 = vmatprep.subr.mxu0 0.0
        %1555 = vmatpush2.xpose.msra.mxu0 0.0
        %1556 = vmatprep.subr.mxu0 0.0
        %1557 = vmatpush2.xpose.msra.mxu0 0.0
        %1558 = vmatprep.subr.mxu0 0.0
        %1559 = vmatpush2.xpose.msra.mxu0 0.0
        %1560 = vmatprep.subr.mxu0 0.0
        %1561 = vmatpush2.xpose.msra.mxu0 0.0
        %1562 = vmatprep.subr.mxu0 0.0
        %1563 = vmatpush2.xpose.msra.mxu0 0.0
        %1564 = vmatprep.mubr.f32.mxu0 0.0
        %1565 = vmatmul.mubr.f32.gmra.mxu0 %v1496
        %v1566 = vpop.f32.mrf.mxu0
        %v1567 = vadd.f32 %v1226, %v1566
        %v1568 = vpop.f32.mrf.mxu0
        %1569 = vdwg.mxu0
        %v1570 = vsel %vm1328, %v1567, -inf
        %1571 = vmax.xlane.f32.xlu0 %v1570
        %v1572 = vpop.xlane.xlu0 %1571
        %v1573 = vsub.f32 %v1567, %v1572
        %v1574 = vmul.f32 %v1573, 1.442695
        %v1575 = vpow.pop %v1574
        %v1576 = vsel %vm1328, %v1575, 0.0
        %1577 = vadd.xlane.f32.xlu0 %v1576
        %v1578 = vpop.xlane.xlu0 %1577
        %v1579 = vrcp.pop %v1578
        %v1580 = vmul.f32 %v1575, %v1579
        %1581 = vrot.lane.b32.xlu0 %v1319, 56
        %v1582 = vpop.permute.xlu0 %1581
        %v1585 = vsel %vm1328, %v1580, 0
        %1587 = vmatprep.subr.mxu0 0.0
        %1588 = vmatpush1.msra.mxu0 0.0
        %1589 = vmatprep.subr.mxu0 0.0
        %1590 = vmatpush1.msra.mxu0 0.0
        %1591 = vmatprep.subr.mxu0 0.0
        %1592 = vmatpush1.msra.mxu0 0.0
        %1593 = vmatprep.subr.mxu0 0.0
        %1594 = vmatpush1.msra.mxu0 0.0
        %1595 = vmatprep.subr.mxu0 0.0
        %1596 = vmatpush1.msra.mxu0 0.0
        %1597 = vmatprep.subr.mxu0 0.0
        %1598 = vmatpush1.msra.mxu0 0.0
        %1599 = vmatprep.subr.mxu0 0.0
        %1600 = vmatpush1.msra.mxu0 0.0
        %1601 = vmatprep.subr.mxu0 0.0
        %1602 = vmatpush1.msra.mxu0 0.0
        %1603 = vmatprep.subr.mxu0 0.0
        %1604 = vmatpush1.msra.mxu0 0.0
        %1605 = vmatprep.subr.mxu0 0.0
        %1606 = vmatpush1.msra.mxu0 0.0
        %1607 = vmatprep.subr.mxu0 0.0
        %1608 = vmatpush1.msra.mxu0 0.0
        %1609 = vmatprep.subr.mxu0 0.0
        %1610 = vmatpush1.msra.mxu0 0.0
        %1611 = vmatprep.subr.mxu0 0.0
        %1612 = vmatpush1.msra.mxu0 0.0
        %1613 = vmatprep.subr.mxu0 0.0
        %1614 = vmatpush1.msra.mxu0 0.0
        %1615 = vmatprep.subr.mxu0 0.0
        %1616 = vmatpush1.msra.mxu0 0.0
        %1617 = vmatprep.subr.mxu0 0.0
        %1618 = vmatpush1.msra.mxu0 %v1582
        %1619 = vmatprep.subr.mxu0 0.0
        %1620 = vmatpush2.msra.mxu0 0.0
        %1621 = vmatprep.subr.mxu0 0.0
        %1622 = vmatpush2.msra.mxu0 0.0
        %1623 = vmatprep.subr.mxu0 0.0
        %1624 = vmatpush2.msra.mxu0 0.0
        %1625 = vmatprep.subr.mxu0 0.0
        %1626 = vmatpush2.msra.mxu0 0.0
        %1627 = vmatprep.subr.mxu0 0.0
        %1628 = vmatpush2.msra.mxu0 0.0
        %1629 = vmatprep.subr.mxu0 0.0
        %1630 = vmatpush2.msra.mxu0 0.0
        %1631 = vmatprep.subr.mxu0 0.0
        %1632 = vmatpush2.msra.mxu0 0.0
        %1633 = vmatprep.subr.mxu0 0.0
        %1634 = vmatpush2.msra.mxu0 0.0
        %1635 = vmatprep.subr.mxu0 0.0
        %1636 = vmatpush2.msra.mxu0 0.0
        %1637 = vmatprep.subr.mxu0 0.0
        %1638 = vmatpush2.msra.mxu0 0.0
        %1639 = vmatprep.subr.mxu0 0.0
        %1640 = vmatpush2.msra.mxu0 0.0
        %1641 = vmatprep.subr.mxu0 0.0
        %1642 = vmatpush2.msra.mxu0 0.0
        %1643 = vmatprep.subr.mxu0 0.0
        %1644 = vmatpush2.msra.mxu0 0.0
        %1645 = vmatprep.subr.mxu0 0.0
        %1646 = vmatpush2.msra.mxu0 0.0
        %1647 = vmatprep.subr.mxu0 0.0
        %1648 = vmatpush2.msra.mxu0 0.0
        %1649 = vmatprep.subr.mxu0 0.0
        %1650 = vmatpush2.msra.mxu0 0.0
        %1651 = vmatprep.mubr.f32.mxu0 0.0
        %1652 = vmatmul.mubr.f32.gmra.mxu0 %v1585
        %v1653 = vpop.f32.mrf.mxu0
        %v1654 = vadd.f32 0.0, %v1653
        %v1655 = vpop.f32.mrf.mxu0
        %1656 = vdwg.mxu0
        %1658 = vrot.lane.b32.xlu0 %v1654, 8
        %v1659 = vpop.permute.xlu0 %1658
        %vm1661 = vcmask 130112
        %1662 = vst.msk [vmem:[#allocation2] sm:$0xff] %vm1661, %v1659
        %1663 = vrot.lane.b32.xlu0 %v1324, 112
        %v1664 = vpop.permute.xlu0 %1663
        %1665 = vrot.lane.b32.xlu0 %v1319, 80
        %v1666 = vpop.permute.xlu0 %1665
        %v1667 = vsel %vm1328, %v1664, 0
        %v1669 = vsel %vm1328, %v1666, 0
        %1671 = vmatprep.subr.mxu0 0.0
        %1672 = vmatpush1.xpose.msra.mxu0 0.0
        %1673 = vmatprep.subr.mxu0 0.0
        %1674 = vmatpush1.xpose.msra.mxu0 0.0
        %1675 = vmatprep.subr.mxu0 0.0
        %1676 = vmatpush1.xpose.msra.mxu0 0.0
        %1677 = vmatprep.subr.mxu0 0.0
        %1678 = vmatpush1.xpose.msra.mxu0 0.0
        %1679 = vmatprep.subr.mxu0 0.0
        %1680 = vmatpush1.xpose.msra.mxu0 0.0
        %1681 = vmatprep.subr.mxu0 0.0
        %1682 = vmatpush1.xpose.msra.mxu0 0.0
        %1683 = vmatprep.subr.mxu0 0.0
        %1684 = vmatpush1.xpose.msra.mxu0 0.0
        %1685 = vmatprep.subr.mxu0 0.0
        %1686 = vmatpush1.xpose.msra.mxu0 0.0
        %1687 = vmatprep.subr.mxu0 0.0
        %1688 = vmatpush1.xpose.msra.mxu0 0.0
        %1689 = vmatprep.subr.mxu0 0.0
        %1690 = vmatpush1.xpose.msra.mxu0 0.0
        %1691 = vmatprep.subr.mxu0 0.0
        %1692 = vmatpush1.xpose.msra.mxu0 0.0
        %1693 = vmatprep.subr.mxu0 0.0
        %1694 = vmatpush1.xpose.msra.mxu0 0.0
        %1695 = vmatprep.subr.mxu0 0.0
        %1696 = vmatpush1.xpose.msra.mxu0 0.0
        %1697 = vmatprep.subr.mxu0 0.0
        %1698 = vmatpush1.xpose.msra.mxu0 0.0
        %1699 = vmatprep.subr.mxu0 0.0
        %1700 = vmatpush1.xpose.msra.mxu0 0.0
        %1701 = vmatprep.subr.mxu0 0.0
        %1702 = vmatpush1.xpose.msra.mxu0 %v1669
        %1703 = vmatprep.subr.mxu0 0.0
        %1704 = vmatpush2.xpose.msra.mxu0 0.0
        %1705 = vmatprep.subr.mxu0 0.0
        %1706 = vmatpush2.xpose.msra.mxu0 0.0
        %1707 = vmatprep.subr.mxu0 0.0
        %1708 = vmatpush2.xpose.msra.mxu0 0.0
        %1709 = vmatprep.subr.mxu0 0.0
        %1710 = vmatpush2.xpose.msra.mxu0 0.0
        %1711 = vmatprep.subr.mxu0 0.0
        %1712 = vmatpush2.xpose.msra.mxu0 0.0
        %1713 = vmatprep.subr.mxu0 0.0
        %1714 = vmatpush2.xpose.msra.mxu0 0.0
        %1715 = vmatprep.subr.mxu0 0.0
        %1716 = vmatpush2.xpose.msra.mxu0 0.0
        %1717 = vmatprep.subr.mxu0 0.0
        %1718 = vmatpush2.xpose.msra.mxu0 0.0
        %1719 = vmatprep.subr.mxu0 0.0
        %1720 = vmatpush2.xpose.msra.mxu0 0.0
        %1721 = vmatprep.subr.mxu0 0.0
        %1722 = vmatpush2.xpose.msra.mxu0 0.0
        %1723 = vmatprep.subr.mxu0 0.0
        %1724 = vmatpush2.xpose.msra.mxu0 0.0
        %1725 = vmatprep.subr.mxu0 0.0
        %1726 = vmatpush2.xpose.msra.mxu0 0.0
        %1727 = vmatprep.subr.mxu0 0.0
        %1728 = vmatpush2.xpose.msra.mxu0 0.0
        %1729 = vmatprep.subr.mxu0 0.0
        %1730 = vmatpush2.xpose.msra.mxu0 0.0
        %1731 = vmatprep.subr.mxu0 0.0
        %1732 = vmatpush2.xpose.msra.mxu0 0.0
        %1733 = vmatprep.subr.mxu0 0.0
        %1734 = vmatpush2.xpose.msra.mxu0 0.0
        %1735 = vmatprep.mubr.f32.mxu0 0.0
        %1736 = vmatmul.mubr.f32.gmra.mxu0 %v1667
        %v1737 = vpop.f32.mrf.mxu0
        %v1738 = vadd.f32 %v1226, %v1737
        %v1739 = vpop.f32.mrf.mxu0
        %1740 = vdwg.mxu0
        %v1741 = vsel %vm1328, %v1738, -inf
        %1742 = vmax.xlane.f32.xlu0 %v1741
        %v1743 = vpop.xlane.xlu0 %1742
        %v1744 = vsub.f32 %v1738, %v1743
        %v1745 = vmul.f32 %v1744, 1.442695
        %v1746 = vpow.pop %v1745
        %v1747 = vsel %vm1328, %v1746, 0.0
        %1748 = vadd.xlane.f32.xlu0 %v1747
        %v1749 = vpop.xlane.xlu0 %1748
        %v1750 = vrcp.pop %v1749
        %v1751 = vmul.f32 %v1746, %v1750
        %1752 = vrot.lane.b32.xlu0 %v1319, 48
        %v1753 = vpop.permute.xlu0 %1752
        %v1756 = vsel %vm1328, %v1751, 0
        %1758 = vmatprep.subr.mxu0 0.0
        %1759 = vmatpush1.msra.mxu0 0.0
        %1760 = vmatprep.subr.mxu0 0.0
        %1761 = vmatpush1.msra.mxu0 0.0
        %1762 = vmatprep.subr.mxu0 0.0
        %1763 = vmatpush1.msra.mxu0 0.0
        %1764 = vmatprep.subr.mxu0 0.0
        %1765 = vmatpush1.msra.mxu0 0.0
        %1766 = vmatprep.subr.mxu0 0.0
        %1767 = vmatpush1.msra.mxu0 0.0
        %1768 = vmatprep.subr.mxu0 0.0
        %1769 = vmatpush1.msra.mxu0 0.0
        %1770 = vmatprep.subr.mxu0 0.0
        %1771 = vmatpush1.msra.mxu0 0.0
        %1772 = vmatprep.subr.mxu0 0.0
        %1773 = vmatpush1.msra.mxu0 0.0
        %1774 = vmatprep.subr.mxu0 0.0
        %1775 = vmatpush1.msra.mxu0 0.0
        %1776 = vmatprep.subr.mxu0 0.0
        %1777 = vmatpush1.msra.mxu0 0.0
        %1778 = vmatprep.subr.mxu0 0.0
        %1779 = vmatpush1.msra.mxu0 0.0
        %1780 = vmatprep.subr.mxu0 0.0
        %1781 = vmatpush1.msra.mxu0 0.0
        %1782 = vmatprep.subr.mxu0 0.0
        %1783 = vmatpush1.msra.mxu0 0.0
        %1784 = vmatprep.subr.mxu0 0.0
        %1785 = vmatpush1.msra.mxu0 0.0
        %1786 = vmatprep.subr.mxu0 0.0
        %1787 = vmatpush1.msra.mxu0 0.0
        %1788 = vmatprep.subr.mxu0 0.0
        %1789 = vmatpush1.msra.mxu0 %v1753
        %1790 = vmatprep.subr.mxu0 0.0
        %1791 = vmatpush2.msra.mxu0 0.0
        %1792 = vmatprep.subr.mxu0 0.0
        %1793 = vmatpush2.msra.mxu0 0.0
        %1794 = vmatprep.subr.mxu0 0.0
        %1795 = vmatpush2.msra.mxu0 0.0
        %1796 = vmatprep.subr.mxu0 0.0
        %1797 = vmatpush2.msra.mxu0 0.0
        %1798 = vmatprep.subr.mxu0 0.0
        %1799 = vmatpush2.msra.mxu0 0.0
        %1800 = vmatprep.subr.mxu0 0.0
        %1801 = vmatpush2.msra.mxu0 0.0
        %1802 = vmatprep.subr.mxu0 0.0
        %1803 = vmatpush2.msra.mxu0 0.0
        %1804 = vmatprep.subr.mxu0 0.0
        %1805 = vmatpush2.msra.mxu0 0.0
        %1806 = vmatprep.subr.mxu0 0.0
        %1807 = vmatpush2.msra.mxu0 0.0
        %1808 = vmatprep.subr.mxu0 0.0
        %1809 = vmatpush2.msra.mxu0 0.0
        %1810 = vmatprep.subr.mxu0 0.0
        %1811 = vmatpush2.msra.mxu0 0.0
        %1812 = vmatprep.subr.mxu0 0.0
        %1813 = vmatpush2.msra.mxu0 0.0
        %1814 = vmatprep.subr.mxu0 0.0
        %1815 = vmatpush2.msra.mxu0 0.0
        %1816 = vmatprep.subr.mxu0 0.0
        %1817 = vmatpush2.msra.mxu0 0.0
        %1818 = vmatprep.subr.mxu0 0.0
        %1819 = vmatpush2.msra.mxu0 0.0
        %1820 = vmatprep.subr.mxu0 0.0
        %1821 = vmatpush2.msra.mxu0 0.0
        %1822 = vmatprep.mubr.f32.mxu0 0.0
        %1823 = vmatmul.mubr.f32.gmra.mxu0 %v1756
        %v1824 = vpop.f32.mrf.mxu0
        %v1825 = vadd.f32 0.0, %v1824
        %v1826 = vpop.f32.mrf.mxu0
        %1827 = vdwg.mxu0
        %1829 = vrot.lane.b32.xlu0 %v1825, 16
        %v1830 = vpop.permute.xlu0 %1829
        %vm1832 = vcmask 195712
        %1833 = vst.msk [vmem:[#allocation2] sm:$0xff] %vm1832, %v1830
        %1834 = vrot.lane.b32.xlu0 %v1324, 104
        %v1835 = vpop.permute.xlu0 %1834
        %1836 = vrot.lane.b32.xlu0 %v1319, 72
        %v1837 = vpop.permute.xlu0 %1836
        %v1838 = vsel %vm1328, %v1835, 0
        %v1840 = vsel %vm1328, %v1837, 0
        %1842 = vmatprep.subr.mxu0 0.0
        %1843 = vmatpush1.xpose.msra.mxu0 0.0
        %1844 = vmatprep.subr.mxu0 0.0
        %1845 = vmatpush1.xpose.msra.mxu0 0.0
        %1846 = vmatprep.subr.mxu0 0.0
        %1847 = vmatpush1.xpose.msra.mxu0 0.0
        %1848 = vmatprep.subr.mxu0 0.0
        %1849 = vmatpush1.xpose.msra.mxu0 0.0
        %1850 = vmatprep.subr.mxu0 0.0
        %1851 = vmatpush1.xpose.msra.mxu0 0.0
        %1852 = vmatprep.subr.mxu0 0.0
        %1853 = vmatpush1.xpose.msra.mxu0 0.0
        %1854 = vmatprep.subr.mxu0 0.0
        %1855 = vmatpush1.xpose.msra.mxu0 0.0
        %1856 = vmatprep.subr.mxu0 0.0
        %1857 = vmatpush1.xpose.msra.mxu0 0.0
        %1858 = vmatprep.subr.mxu0 0.0
        %1859 = vmatpush1.xpose.msra.mxu0 0.0
        %1860 = vmatprep.subr.mxu0 0.0
        %1861 = vmatpush1.xpose.msra.mxu0 0.0
        %1862 = vmatprep.subr.mxu0 0.0
        %1863 = vmatpush1.xpose.msra.mxu0 0.0
        %1864 = vmatprep.subr.mxu0 0.0
        %1865 = vmatpush1.xpose.msra.mxu0 0.0
        %1866 = vmatprep.subr.mxu0 0.0
        %1867 = vmatpush1.xpose.msra.mxu0 0.0
        %1868 = vmatprep.subr.mxu0 0.0
        %1869 = vmatpush1.xpose.msra.mxu0 0.0
        %1870 = vmatprep.subr.mxu0 0.0
        %1871 = vmatpush1.xpose.msra.mxu0 0.0
        %1872 = vmatprep.subr.mxu0 0.0
        %1873 = vmatpush1.xpose.msra.mxu0 %v1840
        %1874 = vmatprep.subr.mxu0 0.0
        %1875 = vmatpush2.xpose.msra.mxu0 0.0
        %1876 = vmatprep.subr.mxu0 0.0
        %1877 = vmatpush2.xpose.msra.mxu0 0.0
        %1878 = vmatprep.subr.mxu0 0.0
        %1879 = vmatpush2.xpose.msra.mxu0 0.0
        %1880 = vmatprep.subr.mxu0 0.0
        %1881 = vmatpush2.xpose.msra.mxu0 0.0
        %1882 = vmatprep.subr.mxu0 0.0
        %1883 = vmatpush2.xpose.msra.mxu0 0.0
        %1884 = vmatprep.subr.mxu0 0.0
        %1885 = vmatpush2.xpose.msra.mxu0 0.0
        %1886 = vmatprep.subr.mxu0 0.0
        %1887 = vmatpush2.xpose.msra.mxu0 0.0
        %1888 = vmatprep.subr.mxu0 0.0
        %1889 = vmatpush2.xpose.msra.mxu0 0.0
        %1890 = vmatprep.subr.mxu0 0.0
        %1891 = vmatpush2.xpose.msra.mxu0 0.0
        %1892 = vmatprep.subr.mxu0 0.0
        %1893 = vmatpush2.xpose.msra.mxu0 0.0
        %1894 = vmatprep.subr.mxu0 0.0
        %1895 = vmatpush2.xpose.msra.mxu0 0.0
        %1896 = vmatprep.subr.mxu0 0.0
        %1897 = vmatpush2.xpose.msra.mxu0 0.0
        %1898 = vmatprep.subr.mxu0 0.0
        %1899 = vmatpush2.xpose.msra.mxu0 0.0
        %1900 = vmatprep.subr.mxu0 0.0
        %1901 = vmatpush2.xpose.msra.mxu0 0.0
        %1902 = vmatprep.subr.mxu0 0.0
        %1903 = vmatpush2.xpose.msra.mxu0 0.0
        %1904 = vmatprep.subr.mxu0 0.0
        %1905 = vmatpush2.xpose.msra.mxu0 0.0
        %1906 = vmatprep.mubr.f32.mxu0 0.0
        %1907 = vmatmul.mubr.f32.gmra.mxu0 %v1838
        %v1908 = vpop.f32.mrf.mxu0
        %v1909 = vadd.f32 %v1226, %v1908
        %v1910 = vpop.f32.mrf.mxu0
        %1911 = vdwg.mxu0
        %v1912 = vsel %vm1328, %v1909, -inf
        %1913 = vmax.xlane.f32.xlu0 %v1912
        %v1914 = vpop.xlane.xlu0 %1913
        %v1915 = vsub.f32 %v1909, %v1914
        %v1916 = vmul.f32 %v1915, 1.442695
        %v1917 = vpow.pop %v1916
        %v1918 = vsel %vm1328, %v1917, 0.0
        %1919 = vadd.xlane.f32.xlu0 %v1918
        %v1920 = vpop.xlane.xlu0 %1919
        %v1921 = vrcp.pop %v1920
        %v1922 = vmul.f32 %v1917, %v1921
        %1923 = vrot.lane.b32.xlu0 %v1319, 40
        %v1924 = vpop.permute.xlu0 %1923
        %v1927 = vsel %vm1328, %v1922, 0
        %1929 = vmatprep.subr.mxu0 0.0
        %1930 = vmatpush1.msra.mxu0 0.0
        %1931 = vmatprep.subr.mxu0 0.0
        %1932 = vmatpush1.msra.mxu0 0.0
        %1933 = vmatprep.subr.mxu0 0.0
        %1934 = vmatpush1.msra.mxu0 0.0
        %1935 = vmatprep.subr.mxu0 0.0
        %1936 = vmatpush1.msra.mxu0 0.0
        %1937 = vmatprep.subr.mxu0 0.0
        %1938 = vmatpush1.msra.mxu0 0.0
        %1939 = vmatprep.subr.mxu0 0.0
        %1940 = vmatpush1.msra.mxu0 0.0
        %1941 = vmatprep.subr.mxu0 0.0
        %1942 = vmatpush1.msra.mxu0 0.0
        %1943 = vmatprep.subr.mxu0 0.0
        %1944 = vmatpush1.msra.mxu0 0.0
        %1945 = vmatprep.subr.mxu0 0.0
        %1946 = vmatpush1.msra.mxu0 0.0
        %1947 = vmatprep.subr.mxu0 0.0
        %1948 = vmatpush1.msra.mxu0 0.0
        %1949 = vmatprep.subr.mxu0 0.0
        %1950 = vmatpush1.msra.mxu0 0.0
        %1951 = vmatprep.subr.mxu0 0.0
        %1952 = vmatpush1.msra.mxu0 0.0
        %1953 = vmatprep.subr.mxu0 0.0
        %1954 = vmatpush1.msra.mxu0 0.0
        %1955 = vmatprep.subr.mxu0 0.0
        %1956 = vmatpush1.msra.mxu0 0.0
        %1957 = vmatprep.subr.mxu0 0.0
        %1958 = vmatpush1.msra.mxu0 0.0
        %1959 = vmatprep.subr.mxu0 0.0
        %1960 = vmatpush1.msra.mxu0 %v1924
        %1961 = vmatprep.subr.mxu0 0.0
        %1962 = vmatpush2.msra.mxu0 0.0
        %1963 = vmatprep.subr.mxu0 0.0
        %1964 = vmatpush2.msra.mxu0 0.0
        %1965 = vmatprep.subr.mxu0 0.0
        %1966 = vmatpush2.msra.mxu0 0.0
        %1967 = vmatprep.subr.mxu0 0.0
        %1968 = vmatpush2.msra.mxu0 0.0
        %1969 = vmatprep.subr.mxu0 0.0
        %1970 = vmatpush2.msra.mxu0 0.0
        %1971 = vmatprep.subr.mxu0 0.0
        %1972 = vmatpush2.msra.mxu0 0.0
        %1973 = vmatprep.subr.mxu0 0.0
        %1974 = vmatpush2.msra.mxu0 0.0
        %1975 = vmatprep.subr.mxu0 0.0
        %1976 = vmatpush2.msra.mxu0 0.0
        %1977 = vmatprep.subr.mxu0 0.0
        %1978 = vmatpush2.msra.mxu0 0.0
        %1979 = vmatprep.subr.mxu0 0.0
        %1980 = vmatpush2.msra.mxu0 0.0
        %1981 = vmatprep.subr.mxu0 0.0
        %1982 = vmatpush2.msra.mxu0 0.0
        %1983 = vmatprep.subr.mxu0 0.0
        %1984 = vmatpush2.msra.mxu0 0.0
        %1985 = vmatprep.subr.mxu0 0.0
        %1986 = vmatpush2.msra.mxu0 0.0
        %1987 = vmatprep.subr.mxu0 0.0
        %1988 = vmatpush2.msra.mxu0 0.0
        %1989 = vmatprep.subr.mxu0 0.0
        %1990 = vmatpush2.msra.mxu0 0.0
        %1991 = vmatprep.subr.mxu0 0.0
        %1992 = vmatpush2.msra.mxu0 0.0
        %1993 = vmatprep.mubr.f32.mxu0 0.0
        %1994 = vmatmul.mubr.f32.gmra.mxu0 %v1927
        %v1995 = vpop.f32.mrf.mxu0
        %v1996 = vadd.f32 0.0, %v1995
        %v1997 = vpop.f32.mrf.mxu0
        %1998 = vdwg.mxu0
        %2000 = vrot.lane.b32.xlu0 %v1996, 24
        %v2001 = vpop.permute.xlu0 %2000
        %vm2003 = vcmask 261312
        %2004 = vst.msk [vmem:[#allocation2] sm:$0xff] %vm2003, %v2001
        %v2005 = vld [vmem:[#allocation2] sm:$0xff]
        %v2006 = vld [vmem:[%s11] sm:$0xf]
        %v2007 = vld [vmem:[%s11 + $0x4] sm:$0xf]
        %v2008 = vld [vmem:[%s11 + $0x8] sm:$0xf]
        %v2009 = vld [vmem:[%s11 + $0xc] sm:$0xf]
        %v2010 = vpack.c.bf16 %v2005, %v2005
        %v2011 = vld [vmem:[%s12] sm:$0x1]
        %v2013 = vlaneseq
        %v2014 = vshrl.u32 %v2013, 7
        %v2015 = vsub.s32 0, %v2014
        %v2016 = vrot.slane %v2011, %v2015
        %v2022 = vunpack.c.l.b16 %v2006
        %v2023 = vunpack.c.l.b16 %v2007
        %v2024 = vunpack.c.l.b16 %v2008
        %v2025 = vunpack.c.l.b16 %v2009
        %v2026 = vpack.c.b16 %v2023, %v2022
        %v2027 = vpack.c.b16 %v2025, %v2024
        %v2031 = vsel %vm1213, %v2010, 0
        %2033 = vmatprep.subr.bf16.mxu0 0
        %2034 = vmatpush1.bf16.msra.mxu0 0
        %2035 = vmatprep.subr.bf16.mxu0 0
        %2036 = vmatpush1.bf16.msra.mxu0 0
        %2037 = vmatprep.subr.bf16.mxu0 0
        %2038 = vmatpush1.bf16.msra.mxu0 0
        %2039 = vmatprep.subr.bf16.mxu0 0
        %2040 = vmatpush1.bf16.msra.mxu0 0
        %2041 = vmatprep.subr.bf16.mxu0 0
        %2042 = vmatpush1.bf16.msra.mxu0 0
        %2043 = vmatprep.subr.bf16.mxu0 0
        %2044 = vmatpush1.bf16.msra.mxu0 0
        %2045 = vmatprep.subr.bf16.mxu0 0
        %2046 = vmatpush1.bf16.msra.mxu0 %v2027
        %2047 = vmatprep.subr.bf16.mxu0 0
        %2048 = vmatpush1.bf16.msra.mxu0 %v2026
        %2049 = vmatprep.subr.bf16.mxu0 0
        %2050 = vmatpush2.bf16.msra.mxu0 0
        %2051 = vmatprep.subr.bf16.mxu0 0
        %2052 = vmatpush2.bf16.msra.mxu0 0
        %2053 = vmatprep.subr.bf16.mxu0 0
        %2054 = vmatpush2.bf16.msra.mxu0 0
        %2055 = vmatprep.subr.bf16.mxu0 0
        %2056 = vmatpush2.bf16.msra.mxu0 0
        %2057 = vmatprep.subr.bf16.mxu0 0
        %2058 = vmatpush2.bf16.msra.mxu0 0
        %2059 = vmatprep.subr.bf16.mxu0 0
        %2060 = vmatpush2.bf16.msra.mxu0 0
        %2061 = vmatprep.subr.bf16.mxu0 0
        %2062 = vmatpush2.bf16.msra.mxu0 0
        %2063 = vmatprep.subr.bf16.mxu0 0
        %2064 = vmatpush2.bf16.msra.mxu0 0
        %2065 = vmatprep.mubr.bf16.mxu0 0
        %2066 = vmatmul.mubr.bf16.gmra.mxu0 %v2031
        %v2067 = vpop.f32.mrf.mxu0
        %v2068 = vadd.f32 %v2016, %v2067
        %v2069 = vpop.f32.mrf.mxu0
        %v2070 = vpop.f32.mrf.mxu0
        %v2071 = vpop.f32.mrf.mxu0
        %2072 = vdwg.mxu0
        %v2073 = vld [vmem:[%s13] sm:$0x1]
        %v2075 = vlaneseq
        %v2076 = vshrl.u32 %v2075, 7
        %v2077 = vsub.s32 0, %v2076
        %v2078 = vrot.slane %v2073, %v2077
        %v2080 = vmul.f32 %v2078, %v2068
        %v2081 = vadd.f32 %v1222, %v2080
        %v2082 = vld [vmem:[%s14] sm:$0x1]
        %v2083 = vld [vmem:[%s15] sm:$0x1]
        %v2084 = vsel %vm1213, %v2081, 0.0
        %2085 = vadd.xlane.f32.xlu0 %v2084
        %v2086 = vpop.xlane.xlu0 %2085
        %v2087 = vmul.f32 %v2086, %v1232
        %v2088 = vsub.f32 %v2081, %v2087
        %v2089 = vmul.f32 %v2088, %v2088
        %v2090 = vsel %vm1213, %v2089, 0.0
        %2091 = vadd.xlane.f32.xlu0 %v2090
        %v2092 = vpop.xlane.xlu0 %2091
        %v2093 = vmul.f32 %v2092, %v1232
        %v2094 = vadd.f32 %v2093, 1e-06
        %v2095 = vrsqrt.pop %v2094
        %v2096 = vmul.f32 %v2088, %v2095
        %v2098 = vlaneseq
        %v2099 = vshrl.u32 %v2098, 7
        %v2100 = vsub.s32 0, %v2099
        %v2101 = vrot.slane %v2082, %v2100
        %v2103 = vmul.f32 %v2096, %v2101
        %v2105 = vlaneseq
        %v2106 = vshrl.u32 %v2105, 7
        %v2107 = vsub.s32 0, %v2106
        %v2108 = vrot.slane %v2083, %v2107
        %v2110 = vadd.f32 %v2103, %v2108
        %v2111 = vld [vmem:[%s16] sm:$0xf]
        %v2112 = vld [vmem:[%s16 + $0x4] sm:$0xf]
        %v2113 = vld [vmem:[%s16 + $0x8] sm:$0xf]
        %v2114 = vld [vmem:[%s16 + $0xc] sm:$0xf]
        %v2115 = vpack.c.bf16 %v2110, %v2110
        %v2116 = vld [vmem:[%s17] sm:$0x1]
        %v2118 = vlaneseq
        %v2119 = vshrl.u32 %v2118, 7
        %v2120 = vsub.s32 0, %v2119
        %v2121 = vrot.slane %v2116, %v2120
        %v2127 = vunpack.c.l.b16 %v2111
        %v2128 = vunpack.c.l.b16 %v2112
        %v2129 = vunpack.c.l.b16 %v2113
        %v2130 = vunpack.c.l.b16 %v2114
        %v2131 = vpack.c.b16 %v2128, %v2127
        %v2132 = vpack.c.b16 %v2130, %v2129
        %v2136 = vsel %vm1213, %v2115, 0
        %2138 = vmatprep.subr.bf16.mxu0 0
        %2139 = vmatpush1.bf16.msra.mxu0 0
        %2140 = vmatprep.subr.bf16.mxu0 0
        %2141 = vmatpush1.bf16.msra.mxu0 0
        %2142 = vmatprep.subr.bf16.mxu0 0
        %2143 = vmatpush1.bf16.msra.mxu0 0
        %2144 = vmatprep.subr.bf16.mxu0 0
        %2145 = vmatpush1.bf16.msra.mxu0 0
        %2146 = vmatprep.subr.bf16.mxu0 0
        %2147 = vmatpush1.bf16.msra.mxu0 0
        %2148 = vmatprep.subr.bf16.mxu0 0
        %2149 = vmatpush1.bf16.msra.mxu0 0
        %2150 = vmatprep.subr.bf16.mxu0 0
        %2151 = vmatpush1.bf16.msra.mxu0 %v2132
        %2152 = vmatprep.subr.bf16.mxu0 0
        %2153 = vmatpush1.bf16.msra.mxu0 %v2131
        %2154 = vmatprep.subr.bf16.mxu0 0
        %2155 = vmatpush2.bf16.msra.mxu0 0
        %2156 = vmatprep.subr.bf16.mxu0 0
        %2157 = vmatpush2.bf16.msra.mxu0 0
        %2158 = vmatprep.subr.bf16.mxu0 0
        %2159 = vmatpush2.bf16.msra.mxu0 0
        %2160 = vmatprep.subr.bf16.mxu0 0
        %2161 = vmatpush2.bf16.msra.mxu0 0
        %2162 = vmatprep.subr.bf16.mxu0 0
        %2163 = vmatpush2.bf16.msra.mxu0 0
        %2164 = vmatprep.subr.bf16.mxu0 0
        %2165 = vmatpush2.bf16.msra.mxu0 0
        %2166 = vmatprep.subr.bf16.mxu0 0
        %2167 = vmatpush2.bf16.msra.mxu0 0
        %2168 = vmatprep.subr.bf16.mxu0 0
        %2169 = vmatpush2.bf16.msra.mxu0 0
        %2170 = vmatprep.mubr.bf16.mxu0 0
        %2171 = vmatmul.mubr.bf16.gmra.mxu0 %v2136
        %v2172 = vpop.f32.mrf.mxu0
        %v2173 = vadd.f32 %v2121, %v2172
        %v2174 = vpop.f32.mrf.mxu0
        %v2175 = vpop.f32.mrf.mxu0
        %v2176 = vpop.f32.mrf.mxu0
        %2177 = vdwg.mxu0
        %v2178 = vmul.f32 %v2173, %v2173
        %v2179 = vmul.f32 %v2173, %v2178
        %v2180 = vmul.f32 %v2179, 0.044715
        %v2181 = vadd.f32 %v2173, %v2180
        %v2182 = vmul.f32 %v2181, 0.7978846
        %v2183 = vtanh.pop %v2182
        %v2184 = vadd.f32 %v2183, 1.0
        %v2185 = vmul.f32 %v2184, 0.5
        %v2186 = vmul.f32 %v2173, %v2185
        %v2187 = vld [vmem:[%s18] sm:$0xf]
        %v2188 = vld [vmem:[%s18 + $0x4] sm:$0xf]
        %v2189 = vld [vmem:[%s18 + $0x8] sm:$0xf]
        %v2190 = vld [vmem:[%s18 + $0xc] sm:$0xf]
        %v2191 = vld [vmem:[%s18 + $0x10] sm:$0xf]
        %v2192 = vld [vmem:[%s18 + $0x14] sm:$0xf]
        %v2193 = vld [vmem:[%s18 + $0x18] sm:$0xf]
        %v2194 = vld [vmem:[%s18 + $0x1c] sm:$0xf]
        %v2195 = vld [vmem:[%s18 + $0x20] sm:$0xf]
        %v2196 = vld [vmem:[%s18 + $0x24] sm:$0xf]
        %v2197 = vld [vmem:[%s18 + $0x28] sm:$0xf]
        %v2198 = vld [vmem:[%s18 + $0x2c] sm:$0xf]
        %v2199 = vld [vmem:[%s18 + $0x30] sm:$0xf]
        %v2200 = vld [vmem:[%s18 + $0x34] sm:$0xf]
        %v2201 = vld [vmem:[%s18 + $0x38] sm:$0xf]
        %v2202 = vld [vmem:[%s18 + $0x3c] sm:$0xf]
        %v2203 = vpack.c.bf16 %v2186, %v2186
        %v2204 = vld [vmem:[%s19] sm:$0x1]
        %v2206 = vlaneseq
        %v2207 = vshrl.u32 %v2206, 7
        %v2208 = vsub.s32 0, %v2207
        %v2209 = vrot.slane %v2204, %v2208
        %v2227 = vunpack.c.l.b16 %v2187
        %v2228 = vunpack.c.l.b16 %v2188
        %v2229 = vunpack.c.l.b16 %v2189
        %v2230 = vunpack.c.l.b16 %v2190
        %v2231 = vunpack.c.l.b16 %v2191
        %v2232 = vunpack.c.l.b16 %v2192
        %v2233 = vunpack.c.l.b16 %v2193
        %v2234 = vunpack.c.l.b16 %v2194
        %v2235 = vunpack.c.l.b16 %v2195
        %v2236 = vunpack.c.l.b16 %v2196
        %v2237 = vunpack.c.l.b16 %v2197
        %v2238 = vunpack.c.l.b16 %v2198
        %v2239 = vunpack.c.l.b16 %v2199
        %v2240 = vunpack.c.l.b16 %v2200
        %v2241 = vunpack.c.l.b16 %v2201
        %v2242 = vunpack.c.l.b16 %v2202
        %v2243 = vpack.c.b16 %v2228, %v2227
        %v2244 = vpack.c.b16 %v2230, %v2229
        %v2245 = vpack.c.b16 %v2232, %v2231
        %v2246 = vpack.c.b16 %v2234, %v2233
        %v2247 = vpack.c.b16 %v2236, %v2235
        %v2248 = vpack.c.b16 %v2238, %v2237
        %v2249 = vpack.c.b16 %v2240, %v2239
        %v2250 = vpack.c.b16 %v2242, %v2241
        %2259 = vmatprep.subr.bf16.mxu0 0
        %2260 = vmatpush1.bf16.msra.mxu0 %v2250
        %2261 = vmatprep.subr.bf16.mxu0 0
        %2262 = vmatpush1.bf16.msra.mxu0 %v2249
        %2263 = vmatprep.subr.bf16.mxu0 0
        %2264 = vmatpush1.bf16.msra.mxu0 %v2248
        %2265 = vmatprep.subr.bf16.mxu0 0
        %2266 = vmatpush1.bf16.msra.mxu0 %v2247
        %2267 = vmatprep.subr.bf16.mxu0 0
        %2268 = vmatpush1.bf16.msra.mxu0 %v2246
        %2269 = vmatprep.subr.bf16.mxu0 0
        %2270 = vmatpush1.bf16.msra.mxu0 %v2245
        %2271 = vmatprep.subr.bf16.mxu0 0
        %2272 = vmatpush1.bf16.msra.mxu0 %v2244
        %2273 = vmatprep.subr.bf16.mxu0 0
        %2274 = vmatpush1.bf16.msra.mxu0 %v2243
        %2275 = vmatprep.subr.bf16.mxu0 0
        %2276 = vmatpush2.bf16.msra.mxu0 0
        %2277 = vmatprep.subr.bf16.mxu0 0
        %2278 = vmatpush2.bf16.msra.mxu0 0
        %2279 = vmatprep.subr.bf16.mxu0 0
        %2280 = vmatpush2.bf16.msra.mxu0 0
        %2281 = vmatprep.subr.bf16.mxu0 0
        %2282 = vmatpush2.bf16.msra.mxu0 0
        %2283 = vmatprep.subr.bf16.mxu0 0
        %2284 = vmatpush2.bf16.msra.mxu0 0
        %2285 = vmatprep.subr.bf16.mxu0 0
        %2286 = vmatpush2.bf16.msra.mxu0 0
        %2287 = vmatprep.subr.bf16.mxu0 0
        %2288 = vmatpush2.bf16.msra.mxu0 0
        %2289 = vmatprep.subr.bf16.mxu0 0
        %2290 = vmatpush2.bf16.msra.mxu0 0
        %2291 = vmatprep.mubr.bf16.mxu0 0
        %2292 = vmatmul.mubr.bf16.gmra.mxu0 %v2203
        %v2293 = vpop.f32.mrf.mxu0
        %v2294 = vadd.f32 %v2209, %v2293
        %v2295 = vpop.f32.mrf.mxu0
        %v2296 = vpop.f32.mrf.mxu0
        %v2297 = vpop.f32.mrf.mxu0
        %2298 = vdwg.mxu0
        %v2299 = vld [vmem:[%s20] sm:$0x1]
        %v2301 = vlaneseq
        %v2302 = vshrl.u32 %v2301, 7
        %v2303 = vsub.s32 0, %v2302
        %v2304 = vrot.slane %v2299, %v2303
        %v2306 = vmul.f32 %v2304, %v2294
        %v2307 = vadd.f32 %v2081, %v2306
        %s2308 = scalar_lea.vmem %s7, 1
        %v2309 = vld [vmem:[%s2308] sm:$0x1]
        %s2310 = scalar_lea.vmem %s8, 1
        %v2311 = vld [vmem:[%s2310] sm:$0x1]
        %v2312 = vsel %vm1213, %v2307, 0.0
        %2313 = vadd.xlane.f32.xlu0 %v2312
        %v2314 = vpop.xlane.xlu0 %2313
        %v2315 = vmul.f32 %v2314, %v1232
        %v2316 = vsub.f32 %v2307, %v2315
        %v2317 = vmul.f32 %v2316, %v2316
        %v2318 = vsel %vm1213, %v2317, 0.0
        %2319 = vadd.xlane.f32.xlu0 %v2318
        %v2320 = vpop.xlane.xlu0 %2319
        %v2321 = vmul.f32 %v2320, %v1232
        %v2322 = vadd.f32 %v2321, 1e-06
        %v2323 = vrsqrt.pop %v2322
        %v2324 = vmul.f32 %v2316, %v2323
        %v2326 = vlaneseq
        %v2327 = vshrl.u32 %v2326, 7
        %v2328 = vsub.s32 0, %v2327
        %v2329 = vrot.slane %v2309, %v2328
        %v2331 = vmul.f32 %v2324, %v2329
        %v2333 = vlaneseq
        %v2334 = vshrl.u32 %v2333, 7
        %v2335 = vsub.s32 0, %v2334
        %v2336 = vrot.slane %v2311, %v2335
        %v2338 = vadd.f32 %v2331, %v2336
        %s2339 = scalar_lea.vmem %s9, 16
        %v2340 = vld [vmem:[%s2339] sm:$0xf]
        %v2341 = vld [vmem:[%s2339 + $0x4] sm:$0xf]
        %v2342 = vld [vmem:[%s2339 + $0x8] sm:$0xf]
        %v2343 = vld [vmem:[%s2339 + $0xc] sm:$0xf]
        %v2344 = vpack.c.bf16 %v2338, %v2338
        %s2345 = scalar_lea.vmem %s10, 1
        %v2346 = vld [vmem:[%s2345] sm:$0x1]
        %v2348 = vlaneseq
        %v2349 = vshrl.u32 %v2348, 7
        %v2350 = vsub.s32 0, %v2349
        %v2351 = vrot.slane %v2346, %v2350
        %v2357 = vunpack.c.l.b16 %v2340
        %v2358 = vunpack.c.l.b16 %v2341
        %v2359 = vunpack.c.l.b16 %v2342
        %v2360 = vunpack.c.l.b16 %v2343
        %v2361 = vpack.c.b16 %v2358, %v2357
        %v2362 = vpack.c.b16 %v2360, %v2359
        %v2366 = vsel %vm1213, %v2344, 0
        %2368 = vmatprep.subr.bf16.mxu0 0
        %2369 = vmatpush1.bf16.msra.mxu0 0
        %2370 = vmatprep.subr.bf16.mxu0 0
        %2371 = vmatpush1.bf16.msra.mxu0 0
        %2372 = vmatprep.subr.bf16.mxu0 0
        %2373 = vmatpush1.bf16.msra.mxu0 0
        %2374 = vmatprep.subr.bf16.mxu0 0
        %2375 = vmatpush1.bf16.msra.mxu0 0
        %2376 = vmatprep.subr.bf16.mxu0 0
        %2377 = vmatpush1.bf16.msra.mxu0 0
        %2378 = vmatprep.subr.bf16.mxu0 0
        %2379 = vmatpush1.bf16.msra.mxu0 0
        %2380 = vmatprep.subr.bf16.mxu0 0
        %2381 = vmatpush1.bf16.msra.mxu0 %v2362
        %2382 = vmatprep.subr.bf16.mxu0 0
        %2383 = vmatpush1.bf16.msra.mxu0 %v2361
        %2384 = vmatprep.subr.bf16.mxu0 0
        %2385 = vmatpush2.bf16.msra.mxu0 0
        %2386 = vmatprep.subr.bf16.mxu0 0
        %2387 = vmatpush2.bf16.msra.mxu0 0
        %2388 = vmatprep.subr.bf16.mxu0 0
        %2389 = vmatpush2.bf16.msra.mxu0 0
        %2390 = vmatprep.subr.bf16.mxu0 0
        %2391 = vmatpush2.bf16.msra.mxu0 0
        %2392 = vmatprep.subr.bf16.mxu0 0
        %2393 = vmatpush2.bf16.msra.mxu0 0
        %2394 = vmatprep.subr.bf16.mxu0 0
        %2395 = vmatpush2.bf16.msra.mxu0 0
        %2396 = vmatprep.subr.bf16.mxu0 0
        %2397 = vmatpush2.bf16.msra.mxu0 0
        %2398 = vmatprep.subr.bf16.mxu0 0
        %2399 = vmatpush2.bf16.msra.mxu0 0
        %2400 = vmatprep.mubr.bf16.mxu0 0
        %2401 = vmatmul.mubr.bf16.gmra.mxu0 %v2366
        %v2402 = vpop.f32.mrf.mxu0
        %v2403 = vadd.f32 %v2351, %v2402
        %v2404 = vpop.f32.mrf.mxu0
        %v2405 = vpop.f32.mrf.mxu0
        %v2406 = vpop.f32.mrf.mxu0
        %2407 = vdwg.mxu0
        %v2408 = vmul.f32 %v2403, 0.35355338
        %2410 = vrot.lane.b32.xlu0 %v2403, 96
        %v2411 = vpop.permute.xlu0 %2410
        %v2413 = vsel %vm1328, %v2408, 0
        %v2415 = vsel %vm1328, %v2411, 0
        %2417 = vmatprep.subr.mxu0 0.0
        %2418 = vmatpush1.xpose.msra.mxu0 0.0
        %2419 = vmatprep.subr.mxu0 0.0
        %2420 = vmatpush1.xpose.msra.mxu0 0.0
        %2421 = vmatprep.subr.mxu0 0.0
        %2422 = vmatpush1.xpose.msra.mxu0 0.0
        %2423 = vmatprep.subr.mxu0 0.0
        %2424 = vmatpush1.xpose.msra.mxu0 0.0
        %2425 = vmatprep.subr.mxu0 0.0
        %2426 = vmatpush1.xpose.msra.mxu0 0.0
        %2427 = vmatprep.subr.mxu0 0.0
        %2428 = vmatpush1.xpose.msra.mxu0 0.0
        %2429 = vmatprep.subr.mxu0 0.0
        %2430 = vmatpush1.xpose.msra.mxu0 0.0
        %2431 = vmatprep.subr.mxu0 0.0
        %2432 = vmatpush1.xpose.msra.mxu0 0.0
        %2433 = vmatprep.subr.mxu0 0.0
        %2434 = vmatpush1.xpose.msra.mxu0 0.0
        %2435 = vmatprep.subr.mxu0 0.0
        %2436 = vmatpush1.xpose.msra.mxu0 0.0
        %2437 = vmatprep.subr.mxu0 0.0
        %2438 = vmatpush1.xpose.msra.mxu0 0.0
        %2439 = vmatprep.subr.mxu0 0.0
        %2440 = vmatpush1.xpose.msra.mxu0 0.0
        %2441 = vmatprep.subr.mxu0 0.0
        %2442 = vmatpush1.xpose.msra.mxu0 0.0
        %2443 = vmatprep.subr.mxu0 0.0
        %2444 = vmatpush1.xpose.msra.mxu0 0.0
        %2445 = vmatprep.subr.mxu0 0.0
        %2446 = vmatpush1.xpose.msra.mxu0 0.0
        %2447 = vmatprep.subr.mxu0 0.0
        %2448 = vmatpush1.xpose.msra.mxu0 %v2415
        %2449 = vmatprep.subr.mxu0 0.0
        %2450 = vmatpush2.xpose.msra.mxu0 0.0
        %2451 = vmatprep.subr.mxu0 0.0
        %2452 = vmatpush2.xpose.msra.mxu0 0.0
        %2453 = vmatprep.subr.mxu0 0.0
        %2454 = vmatpush2.xpose.msra.mxu0 0.0
        %2455 = vmatprep.subr.mxu0 0.0
        %2456 = vmatpush2.xpose.msra.mxu0 0.0
        %2457 = vmatprep.subr.mxu0 0.0
        %2458 = vmatpush2.xpose.msra.mxu0 0.0
        %2459 = vmatprep.subr.mxu0 0.0
        %2460 = vmatpush2.xpose.msra.mxu0 0.0
        %2461 = vmatprep.subr.mxu0 0.0
        %2462 = vmatpush2.xpose.msra.mxu0 0.0
        %2463 = vmatprep.subr.mxu0 0.0
        %2464 = vmatpush2.xpose.msra.mxu0 0.0
        %2465 = vmatprep.subr.mxu0 0.0
        %2466 = vmatpush2.xpose.msra.mxu0 0.0
        %2467 = vmatprep.subr.mxu0 0.0
        %2468 = vmatpush2.xpose.msra.mxu0 0.0
        %2469 = vmatprep.subr.mxu0 0.0
        %2470 = vmatpush2.xpose.msra.mxu0 0.0
        %2471 = vmatprep.subr.mxu0 0.0
        %2472 = vmatpush2.xpose.msra.mxu0 0.0
        %2473 = vmatprep.subr.mxu0 0.0
        %2474 = vmatpush2.xpose.msra.mxu0 0.0
        %2475 = vmatprep.subr.mxu0 0.0
        %2476 = vmatpush2.xpose.msra.mxu0 0.0
        %2477 = vmatprep.subr.mxu0 0.0
        %2478 = vmatpush2.xpose.msra.mxu0 0.0
        %2479 = vmatprep.subr.mxu0 0.0
        %2480 = vmatpush2.xpose.msra.mxu0 0.0
        %2481 = vmatprep.mubr.f32.mxu0 0.0
        %2482 = vmatmul.mubr.f32.gmra.mxu0 %v2413
        %v2483 = vpop.f32.mrf.mxu0
        %v2484 = vadd.f32 %v1226, %v2483
        %v2485 = vpop.f32.mrf.mxu0
        %2486 = vdwg.mxu0
        %v2487 = vsel %vm1328, %v2484, -inf
        %2488 = vmax.xlane.f32.xlu0 %v2487
        %v2489 = vpop.xlane.xlu0 %2488
        %v2490 = vsub.f32 %v2484, %v2489
        %v2491 = vmul.f32 %v2490, 1.442695
        %v2492 = vpow.pop %v2491
        %v2493 = vsel %vm1328, %v2492, 0.0
        %2494 = vadd.xlane.f32.xlu0 %v2493
        %v2495 = vpop.xlane.xlu0 %2494
        %v2496 = vrcp.pop %v2495
        %v2497 = vmul.f32 %v2492, %v2496
        %2498 = vrot.lane.b32.xlu0 %v2403, 64
        %v2499 = vpop.permute.xlu0 %2498
        %v2502 = vsel %vm1328, %v2497, 0
        %2504 = vmatprep.subr.mxu0 0.0
        %2505 = vmatpush1.msra.mxu0 0.0
        %2506 = vmatprep.subr.mxu0 0.0
        %2507 = vmatpush1.msra.mxu0 0.0
        %2508 = vmatprep.subr.mxu0 0.0
        %2509 = vmatpush1.msra.mxu0 0.0
        %2510 = vmatprep.subr.mxu0 0.0
        %2511 = vmatpush1.msra.mxu0 0.0
        %2512 = vmatprep.subr.mxu0 0.0
        %2513 = vmatpush1.msra.mxu0 0.0
        %2514 = vmatprep.subr.mxu0 0.0
        %2515 = vmatpush1.msra.mxu0 0.0
        %2516 = vmatprep.subr.mxu0 0.0
        %2517 = vmatpush1.msra.mxu0 0.0
        %2518 = vmatprep.subr.mxu0 0.0
        %2519 = vmatpush1.msra.mxu0 0.0
        %2520 = vmatprep.subr.mxu0 0.0
        %2521 = vmatpush1.msra.mxu0 0.0
        %2522 = vmatprep.subr.mxu0 0.0
        %2523 = vmatpush1.msra.mxu0 0.0
        %2524 = vmatprep.subr.mxu0 0.0
        %2525 = vmatpush1.msra.mxu0 0.0
        %2526 = vmatprep.subr.mxu0 0.0
        %2527 = vmatpush1.msra.mxu0 0.0
        %2528 = vmatprep.subr.mxu0 0.0
        %2529 = vmatpush1.msra.mxu0 0.0
        %2530 = vmatprep.subr.mxu0 0.0
        %2531 = vmatpush1.msra.mxu0 0.0
        %2532 = vmatprep.subr.mxu0 0.0
        %2533 = vmatpush1.msra.mxu0 0.0
        %2534 = vmatprep.subr.mxu0 0.0
        %2535 = vmatpush1.msra.mxu0 %v2499
        %2536 = vmatprep.subr.mxu0 0.0
        %2537 = vmatpush2.msra.mxu0 0.0
        %2538 = vmatprep.subr.mxu0 0.0
        %2539 = vmatpush2.msra.mxu0 0.0
        %2540 = vmatprep.subr.mxu0 0.0
        %2541 = vmatpush2.msra.mxu0 0.0
        %2542 = vmatprep.subr.mxu0 0.0
        %2543 = vmatpush2.msra.mxu0 0.0
        %2544 = vmatprep.subr.mxu0 0.0
        %2545 = vmatpush2.msra.mxu0 0.0
        %2546 = vmatprep.subr.mxu0 0.0
        %2547 = vmatpush2.msra.mxu0 0.0
        %2548 = vmatprep.subr.mxu0 0.0
        %2549 = vmatpush2.msra.mxu0 0.0
        %2550 = vmatprep.subr.mxu0 0.0
        %2551 = vmatpush2.msra.mxu0 0.0
        %2552 = vmatprep.subr.mxu0 0.0
        %2553 = vmatpush2.msra.mxu0 0.0
        %2554 = vmatprep.subr.mxu0 0.0
        %2555 = vmatpush2.msra.mxu0 0.0
        %2556 = vmatprep.subr.mxu0 0.0
        %2557 = vmatpush2.msra.mxu0 0.0
        %2558 = vmatprep.subr.mxu0 0.0
        %2559 = vmatpush2.msra.mxu0 0.0
        %2560 = vmatprep.subr.mxu0 0.0
        %2561 = vmatpush2.msra.mxu0 0.0
        %2562 = vmatprep.subr.mxu0 0.0
        %2563 = vmatpush2.msra.mxu0 0.0
        %2564 = vmatprep.subr.mxu0 0.0
        %2565 = vmatpush2.msra.mxu0 0.0
        %2566 = vmatprep.subr.mxu0 0.0
        %2567 = vmatpush2.msra.mxu0 0.0
        %2568 = vmatprep.mubr.f32.mxu0 0.0
        %2569 = vmatmul.mubr.f32.gmra.mxu0 %v2502
        %v2570 = vpop.f32.mrf.mxu0
        %v2571 = vadd.f32 0.0, %v2570
        %v2572 = vpop.f32.mrf.mxu0
        %2573 = vdwg.mxu0
        %2574 = vst.msk [vmem:[#allocation2] sm:$0xff] %vm1328, %v2571
        %2575 = vrot.lane.b32.xlu0 %v2408, 120
        %v2576 = vpop.permute.xlu0 %2575
        %2577 = vrot.lane.b32.xlu0 %v2403, 88
        %v2578 = vpop.permute.xlu0 %2577
        %v2579 = vsel %vm1328, %v2576, 0
        %v2581 = vsel %vm1328, %v2578, 0
        %2583 = vmatprep.subr.mxu0 0.0
        %2584 = vmatpush1.xpose.msra.mxu0 0.0
        %2585 = vmatprep.subr.mxu0 0.0
        %2586 = vmatpush1.xpose.msra.mxu0 0.0
        %2587 = vmatprep.subr.mxu0 0.0
        %2588 = vmatpush1.xpose.msra.mxu0 0.0
        %2589 = vmatprep.subr.mxu0 0.0
        %2590 = vmatpush1.xpose.msra.mxu0 0.0
        %2591 = vmatprep.subr.mxu0 0.0
        %2592 = vmatpush1.xpose.msra.mxu0 0.0
        %2593 = vmatprep.subr.mxu0 0.0
        %2594 = vmatpush1.xpose.msra.mxu0 0.0
        %2595 = vmatprep.subr.mxu0 0.0
        %2596 = vmatpush1.xpose.msra.mxu0 0.0
        %2597 = vmatprep.subr.mxu0 0.0
        %2598 = vmatpush1.xpose.msra.mxu0 0.0
        %2599 = vmatprep.subr.mxu0 0.0
        %2600 = vmatpush1.xpose.msra.mxu0 0.0
        %2601 = vmatprep.subr.mxu0 0.0
        %2602 = vmatpush1.xpose.msra.mxu0 0.0
        %2603 = vmatprep.subr.mxu0 0.0
        %2604 = vmatpush1.xpose.msra.mxu0 0.0
        %2605 = vmatprep.subr.mxu0 0.0
        %2606 = vmatpush1.xpose.msra.mxu0 0.0
        %2607 = vmatprep.subr.mxu0 0.0
        %2608 = vmatpush1.xpose.msra.mxu0 0.0
        %2609 = vmatprep.subr.mxu0 0.0
        %2610 = vmatpush1.xpose.msra.mxu0 0.0
        %2611 = vmatprep.subr.mxu0 0.0
        %2612 = vmatpush1.xpose.msra.mxu0 0.0
        %2613 = vmatprep.subr.mxu0 0.0
        %2614 = vmatpush1.xpose.msra.mxu0 %v2581
        %2615 = vmatprep.subr.mxu0 0.0
        %2616 = vmatpush2.xpose.msra.mxu0 0.0
        %2617 = vmatprep.subr.mxu0 0.0
        %2618 = vmatpush2.xpose.msra.mxu0 0.0
        %2619 = vmatprep.subr.mxu0 0.0
        %2620 = vmatpush2.xpose.msra.mxu0 0.0
        %2621 = vmatprep.subr.mxu0 0.0
        %2622 = vmatpush2.xpose.msra.mxu0 0.0
        %2623 = vmatprep.subr.mxu0 0.0
        %2624 = vmatpush2.xpose.msra.mxu0 0.0
        %2625 = vmatprep.subr.mxu0 0.0
        %2626 = vmatpush2.xpose.msra.mxu0 0.0
        %2627 = vmatprep.subr.mxu0 0.0
        %2628 = vmatpush2.xpose.msra.mxu0 0.0
        %2629 = vmatprep.subr.mxu0 0.0
        %2630 = vmatpush2.xpose.msra.mxu0 0.0
        %2631 = vmatprep.subr.mxu0 0.0
        %2632 = vmatpush2.xpose.msra.mxu0 0.0
        %2633 = vmatprep.subr.mxu0 0.0
        %2634 = vmatpush2.xpose.msra.mxu0 0.0
        %2635 = vmatprep.subr.mxu0 0.0
        %2636 = vmatpush2.xpose.msra.mxu0 0.0
        %2637 = vmatprep.subr.mxu0 0.0
        %2638 = vmatpush2.xpose.msra.mxu0 0.0
        %2639 = vmatprep.subr.mxu0 0.0
        %2640 = vmatpush2.xpose.msra.mxu0 0.0
        %2641 = vmatprep.subr.mxu0 0.0
        %2642 = vmatpush2.xpose.msra.mxu0 0.0
        %2643 = vmatprep.subr.mxu0 0.0
        %2644 = vmatpush2.xpose.msra.mxu0 0.0
        %2645 = vmatprep.subr.mxu0 0.0
        %2646 = vmatpush2.xpose.msra.mxu0 0.0
        %2647 = vmatprep.mubr.f32.mxu0 0.0
        %2648 = vmatmul.mubr.f32.gmra.mxu0 %v2579
        %v2649 = vpop.f32.mrf.mxu0
        %v2650 = vadd.f32 %v1226, %v2649
        %v2651 = vpop.f32.mrf.mxu0
        %2652 = vdwg.mxu0
        %v2653 = vsel %vm1328, %v2650, -inf
        %2654 = vmax.xlane.f32.xlu0 %v2653
        %v2655 = vpop.xlane.xlu0 %2654
        %v2656 = vsub.f32 %v2650, %v2655
        %v2657 = vmul.f32 %v2656, 1.442695
        %v2658 = vpow.pop %v2657
        %v2659 = vsel %vm1328, %v2658, 0.0
        %2660 = vadd.xlane.f32.xlu0 %v2659
        %v2661 = vpop.xlane.xlu0 %2660
        %v2662 = vrcp.pop %v2661
        %v2663 = vmul.f32 %v2658, %v2662
        %2664 = vrot.lane.b32.xlu0 %v2403, 56
        %v2665 = vpop.permute.xlu0 %2664
        %v2668 = vsel %vm1328, %v2663, 0
        %2670 = vmatprep.subr.mxu0 0.0
        %2671 = vmatpush1.msra.mxu0 0.0
        %2672 = vmatprep.subr.mxu0 0.0
        %2673 = vmatpush1.msra.mxu0 0.0
        %2674 = vmatprep.subr.mxu0 0.0
        %2675 = vmatpush1.msra.mxu0 0.0
        %2676 = vmatprep.subr.mxu0 0.0
        %2677 = vmatpush1.msra.mxu0 0.0
        %2678 = vmatprep.subr.mxu0 0.0
        %2679 = vmatpush1.msra.mxu0 0.0
        %2680 = vmatprep.subr.mxu0 0.0
        %2681 = vmatpush1.msra.mxu0 0.0
        %2682 = vmatprep.subr.mxu0 0.0
        %2683 = vmatpush1.msra.mxu0 0.0
        %2684 = vmatprep.subr.mxu0 0.0
        %2685 = vmatpush1.msra.mxu0 0.0
        %2686 = vmatprep.subr.mxu0 0.0
        %2687 = vmatpush1.msra.mxu0 0.0
        %2688 = vmatprep.subr.mxu0 0.0
        %2689 = vmatpush1.msra.mxu0 0.0
        %2690 = vmatprep.subr.mxu0 0.0
        %2691 = vmatpush1.msra.mxu0 0.0
        %2692 = vmatprep.subr.mxu0 0.0
        %2693 = vmatpush1.msra.mxu0 0.0
        %2694 = vmatprep.subr.mxu0 0.0
        %2695 = vmatpush1.msra.mxu0 0.0
        %2696 = vmatprep.subr.mxu0 0.0
        %2697 = vmatpush1.msra.mxu0 0.0
        %2698 = vmatprep.subr.mxu0 0.0
        %2699 = vmatpush1.msra.mxu0 0.0
        %2700 = vmatprep.subr.mxu0 0.0
        %2701 = vmatpush1.msra.mxu0 %v2665
        %2702 = vmatprep.subr.mxu0 0.0
        %2703 = vmatpush2.msra.mxu0 0.0
        %2704 = vmatprep.subr.mxu0 0.0
        %2705 = vmatpush2.msra.mxu0 0.0
        %2706 = vmatprep.subr.mxu0 0.0
        %2707 = vmatpush2.msra.mxu0 0.0
        %2708 = vmatprep.subr.mxu0 0.0
        %2709 = vmatpush2.msra.mxu0 0.0
        %2710 = vmatprep.subr.mxu0 0.0
        %2711 = vmatpush2.msra.mxu0 0.0
        %2712 = vmatprep.subr.mxu0 0.0
        %2713 = vmatpush2.msra.mxu0 0.0
        %2714 = vmatprep.subr.mxu0 0.0
        %2715 = vmatpush2.msra.mxu0 0.0
        %2716 = vmatprep.subr.mxu0 0.0
        %2717 = vmatpush2.msra.mxu0 0.0
        %2718 = vmatprep.subr.mxu0 0.0
        %2719 = vmatpush2.msra.mxu0 0.0
        %2720 = vmatprep.subr.mxu0 0.0
        %2721 = vmatpush2.msra.mxu0 0.0
        %2722 = vmatprep.subr.mxu0 0.0
        %2723 = vmatpush2.msra.mxu0 0.0
        %2724 = vmatprep.subr.mxu0 0.0
        %2725 = vmatpush2.msra.mxu0 0.0
        %2726 = vmatprep.subr.mxu0 0.0
        %2727 = vmatpush2.msra.mxu0 0.0
        %2728 = vmatprep.subr.mxu0 0.0
        %2729 = vmatpush2.msra.mxu0 0.0
        %2730 = vmatprep.subr.mxu0 0.0
        %2731 = vmatpush2.msra.mxu0 0.0
        %2732 = vmatprep.subr.mxu0 0.0
        %2733 = vmatpush2.msra.mxu0 0.0
        %2734 = vmatprep.mubr.f32.mxu0 0.0
        %2735 = vmatmul.mubr.f32.gmra.mxu0 %v2668
        %v2736 = vpop.f32.mrf.mxu0
        %v2737 = vadd.f32 0.0, %v2736
        %v2738 = vpop.f32.mrf.mxu0
        %2739 = vdwg.mxu0
        %2741 = vrot.lane.b32.xlu0 %v2737, 8
        %v2742 = vpop.permute.xlu0 %2741
        %2744 = vst.msk [vmem:[#allocation2] sm:$0xff] %vm1661, %v2742
        %2745 = vrot.lane.b32.xlu0 %v2408, 112
        %v2746 = vpop.permute.xlu0 %2745
        %2747 = vrot.lane.b32.xlu0 %v2403, 80
        %v2748 = vpop.permute.xlu0 %2747
        %v2749 = vsel %vm1328, %v2746, 0
        %v2751 = vsel %vm1328, %v2748, 0
        %2753 = vmatprep.subr.mxu0 0.0
        %2754 = vmatpush1.xpose.msra.mxu0 0.0
        %2755 = vmatprep.subr.mxu0 0.0
        %2756 = vmatpush1.xpose.msra.mxu0 0.0
        %2757 = vmatprep.subr.mxu0 0.0
        %2758 = vmatpush1.xpose.msra.mxu0 0.0
        %2759 = vmatprep.subr.mxu0 0.0
        %2760 = vmatpush1.xpose.msra.mxu0 0.0
        %2761 = vmatprep.subr.mxu0 0.0
        %2762 = vmatpush1.xpose.msra.mxu0 0.0
        %2763 = vmatprep.subr.mxu0 0.0
        %2764 = vmatpush1.xpose.msra.mxu0 0.0
        %2765 = vmatprep.subr.mxu0 0.0
        %2766 = vmatpush1.xpose.msra.mxu0 0.0
        %2767 = vmatprep.subr.mxu0 0.0
        %2768 = vmatpush1.xpose.msra.mxu0 0.0
        %2769 = vmatprep.subr.mxu0 0.0
        %2770 = vmatpush1.xpose.msra.mxu0 0.0
        %2771 = vmatprep.subr.mxu0 0.0
        %2772 = vmatpush1.xpose.msra.mxu0 0.0
        %2773 = vmatprep.subr.mxu0 0.0
        %2774 = vmatpush1.xpose.msra.mxu0 0.0
        %2775 = vmatprep.subr.mxu0 0.0
        %2776 = vmatpush1.xpose.msra.mxu0 0.0
        %2777 = vmatprep.subr.mxu0 0.0
        %2778 = vmatpush1.xpose.msra.mxu0 0.0
        %2779 = vmatprep.subr.mxu0 0.0
        %2780 = vmatpush1.xpose.msra.mxu0 0.0
        %2781 = vmatprep.subr.mxu0 0.0
        %2782 = vmatpush1.xpose.msra.mxu0 0.0
        %2783 = vmatprep.subr.mxu0 0.0
        %2784 = vmatpush1.xpose.msra.mxu0 %v2751
        %2785 = vmatprep.subr.mxu0 0.0
        %2786 = vmatpush2.xpose.msra.mxu0 0.0
        %2787 = vmatprep.subr.mxu0 0.0
        %2788 = vmatpush2.xpose.msra.mxu0 0.0
        %2789 = vmatprep.subr.mxu0 0.0
        %2790 = vmatpush2.xpose.msra.mxu0 0.0
        %2791 = vmatprep.subr.mxu0 0.0
        %2792 = vmatpush2.xpose.msra.mxu0 0.0
        %2793 = vmatprep.subr.mxu0 0.0
        %2794 = vmatpush2.xpose.msra.mxu0 0.0
        %2795 = vmatprep.subr.mxu0 0.0
        %2796 = vmatpush2.xpose.msra.mxu0 0.0
        %2797 = vmatprep.subr.mxu0 0.0
        %2798 = vmatpush2.xpose.msra.mxu0 0.0
        %2799 = vmatprep.subr.mxu0 0.0
        %2800 = vmatpush2.xpose.msra.mxu0 0.0
        %2801 = vmatprep.subr.mxu0 0.0
        %2802 = vmatpush2.xpose.msra.mxu0 0.0
        %2803 = vmatprep.subr.mxu0 0.0
        %2804 = vmatpush2.xpose.msra.mxu0 0.0
        %2805 = vmatprep.subr.mxu0 0.0
        %2806 = vmatpush2.xpose.msra.mxu0 0.0
        %2807 = vmatprep.subr.mxu0 0.0
        %2808 = vmatpush2.xpose.msra.mxu0 0.0
        %2809 = vmatprep.subr.mxu0 0.0
        %2810 = vmatpush2.xpose.msra.mxu0 0.0
        %2811 = vmatprep.subr.mxu0 0.0
        %2812 = vmatpush2.xpose.msra.mxu0 0.0
        %2813 = vmatprep.subr.mxu0 0.0
        %2814 = vmatpush2.xpose.msra.mxu0 0.0
        %2815 = vmatprep.subr.mxu0 0.0
        %2816 = vmatpush2.xpose.msra.mxu0 0.0
        %2817 = vmatprep.mubr.f32.mxu0 0.0
        %2818 = vmatmul.mubr.f32.gmra.mxu0 %v2749
        %v2819 = vpop.f32.mrf.mxu0
        %v2820 = vadd.f32 %v1226, %v2819
        %v2821 = vpop.f32.mrf.mxu0
        %2822 = vdwg.mxu0
        %v2823 = vsel %vm1328, %v2820, -inf
        %2824 = vmax.xlane.f32.xlu0 %v2823
        %v2825 = vpop.xlane.xlu0 %2824
        %v2826 = vsub.f32 %v2820, %v2825
        %v2827 = vmul.f32 %v2826, 1.442695
        %v2828 = vpow.pop %v2827
        %v2829 = vsel %vm1328, %v2828, 0.0
        %2830 = vadd.xlane.f32.xlu0 %v2829
        %v2831 = vpop.xlane.xlu0 %2830
        %v2832 = vrcp.pop %v2831
        %v2833 = vmul.f32 %v2828, %v2832
        %2834 = vrot.lane.b32.xlu0 %v2403, 48
        %v2835 = vpop.permute.xlu0 %2834
        %v2838 = vsel %vm1328, %v2833, 0
        %2840 = vmatprep.subr.mxu0 0.0
        %2841 = vmatpush1.msra.mxu0 0.0
        %2842 = vmatprep.subr.mxu0 0.0
        %2843 = vmatpush1.msra.mxu0 0.0
        %2844 = vmatprep.subr.mxu0 0.0
        %2845 = vmatpush1.msra.mxu0 0.0
        %2846 = vmatprep.subr.mxu0 0.0
        %2847 = vmatpush1.msra.mxu0 0.0
        %2848 = vmatprep.subr.mxu0 0.0
        %2849 = vmatpush1.msra.mxu0 0.0
        %2850 = vmatprep.subr.mxu0 0.0
        %2851 = vmatpush1.msra.mxu0 0.0
        %2852 = vmatprep.subr.mxu0 0.0
        %2853 = vmatpush1.msra.mxu0 0.0
        %2854 = vmatprep.subr.mxu0 0.0
        %2855 = vmatpush1.msra.mxu0 0.0
        %2856 = vmatprep.subr.mxu0 0.0
        %2857 = vmatpush1.msra.mxu0 0.0
        %2858 = vmatprep.subr.mxu0 0.0
        %2859 = vmatpush1.msra.mxu0 0.0
        %2860 = vmatprep.subr.mxu0 0.0
        %2861 = vmatpush1.msra.mxu0 0.0
        %2862 = vmatprep.subr.mxu0 0.0
        %2863 = vmatpush1.msra.mxu0 0.0
        %2864 = vmatprep.subr.mxu0 0.0
        %2865 = vmatpush1.msra.mxu0 0.0
        %2866 = vmatprep.subr.mxu0 0.0
        %2867 = vmatpush1.msra.mxu0 0.0
        %2868 = vmatprep.subr.mxu0 0.0
        %2869 = vmatpush1.msra.mxu0 0.0
        %2870 = vmatprep.subr.mxu0 0.0
        %2871 = vmatpush1.msra.mxu0 %v2835
        %2872 = vmatprep.subr.mxu0 0.0
        %2873 = vmatpush2.msra.mxu0 0.0
        %2874 = vmatprep.subr.mxu0 0.0
        %2875 = vmatpush2.msra.mxu0 0.0
        %2876 = vmatprep.subr.mxu0 0.0
        %2877 = vmatpush2.msra.mxu0 0.0
        %2878 = vmatprep.subr.mxu0 0.0
        %2879 = vmatpush2.msra.mxu0 0.0
        %2880 = vmatprep.subr.mxu0 0.0
        %2881 = vmatpush2.msra.mxu0 0.0
        %2882 = vmatprep.subr.mxu0 0.0
        %2883 = vmatpush2.msra.mxu0 0.0
        %2884 = vmatprep.subr.mxu0 0.0
        %2885 = vmatpush2.msra.mxu0 0.0
        %2886 = vmatprep.subr.mxu0 0.0
        %2887 = vmatpush2.msra.mxu0 0.0
        %2888 = vmatprep.subr.mxu0 0.0
        %2889 = vmatpush2.msra.mxu0 0.0
        %2890 = vmatprep.subr.mxu0 0.0
        %2891 = vmatpush2.msra.mxu0 0.0
        %2892 = vmatprep.subr.mxu0 0.0
        %2893 = vmatpush2.msra.mxu0 0.0
        %2894 = vmatprep.subr.mxu0 0.0
        %2895 = vmatpush2.msra.mxu0 0.0
        %2896 = vmatprep.subr.mxu0 0.0
        %2897 = vmatpush2.msra.mxu0 0.0
        %2898 = vmatprep.subr.mxu0 0.0
        %2899 = vmatpush2.msra.mxu0 0.0
        %2900 = vmatprep.subr.mxu0 0.0
        %2901 = vmatpush2.msra.mxu0 0.0
        %2902 = vmatprep.subr.mxu0 0.0
        %2903 = vmatpush2.msra.mxu0 0.0
        %2904 = vmatprep.mubr.f32.mxu0 0.0
        %2905 = vmatmul.mubr.f32.gmra.mxu0 %v2838
        %v2906 = vpop.f32.mrf.mxu0
        %v2907 = vadd.f32 0.0, %v2906
        %v2908 = vpop.f32.mrf.mxu0
        %2909 = vdwg.mxu0
        %2911 = vrot.lane.b32.xlu0 %v2907, 16
        %v2912 = vpop.permute.xlu0 %2911
        %2914 = vst.msk [vmem:[#allocation2] sm:$0xff] %vm1832, %v2912
        %2915 = vrot.lane.b32.xlu0 %v2408, 104
        %v2916 = vpop.permute.xlu0 %2915
        %2917 = vrot.lane.b32.xlu0 %v2403, 72
        %v2918 = vpop.permute.xlu0 %2917
        %v2919 = vsel %vm1328, %v2916, 0
        %v2921 = vsel %vm1328, %v2918, 0
        %2923 = vmatprep.subr.mxu0 0.0
        %2924 = vmatpush1.xpose.msra.mxu0 0.0
        %2925 = vmatprep.subr.mxu0 0.0
        %2926 = vmatpush1.xpose.msra.mxu0 0.0
        %2927 = vmatprep.subr.mxu0 0.0
        %2928 = vmatpush1.xpose.msra.mxu0 0.0
        %2929 = vmatprep.subr.mxu0 0.0
        %2930 = vmatpush1.xpose.msra.mxu0 0.0
        %2931 = vmatprep.subr.mxu0 0.0
        %2932 = vmatpush1.xpose.msra.mxu0 0.0
        %2933 = vmatprep.subr.mxu0 0.0
        %2934 = vmatpush1.xpose.msra.mxu0 0.0
        %2935 = vmatprep.subr.mxu0 0.0
        %2936 = vmatpush1.xpose.msra.mxu0 0.0
        %2937 = vmatprep.subr.mxu0 0.0
        %2938 = vmatpush1.xpose.msra.mxu0 0.0
        %2939 = vmatprep.subr.mxu0 0.0
        %2940 = vmatpush1.xpose.msra.mxu0 0.0
        %2941 = vmatprep.subr.mxu0 0.0
        %2942 = vmatpush1.xpose.msra.mxu0 0.0
        %2943 = vmatprep.subr.mxu0 0.0
        %2944 = vmatpush1.xpose.msra.mxu0 0.0
        %2945 = vmatprep.subr.mxu0 0.0
        %2946 = vmatpush1.xpose.msra.mxu0 0.0
        %2947 = vmatprep.subr.mxu0 0.0
        %2948 = vmatpush1.xpose.msra.mxu0 0.0
        %2949 = vmatprep.subr.mxu0 0.0
        %2950 = vmatpush1.xpose.msra.mxu0 0.0
        %2951 = vmatprep.subr.mxu0 0.0
        %2952 = vmatpush1.xpose.msra.mxu0 0.0
        %2953 = vmatprep.subr.mxu0 0.0
        %2954 = vmatpush1.xpose.msra.mxu0 %v2921
        %2955 = vmatprep.subr.mxu0 0.0
        %2956 = vmatpush2.xpose.msra.mxu0 0.0
        %2957 = vmatprep.subr.mxu0 0.0
        %2958 = vmatpush2.xpose.msra.mxu0 0.0
        %2959 = vmatprep.subr.mxu0 0.0
        %2960 = vmatpush2.xpose.msra.mxu0 0.0
        %2961 = vmatprep.subr.mxu0 0.0
        %2962 = vmatpush2.xpose.msra.mxu0 0.0
        %2963 = vmatprep.subr.mxu0 0.0
        %2964 = vmatpush2.xpose.msra.mxu0 0.0
        %2965 = vmatprep.subr.mxu0 0.0
        %2966 = vmatpush2.xpose.msra.mxu0 0.0
        %2967 = vmatprep.subr.mxu0 0.0
        %2968 = vmatpush2.xpose.msra.mxu0 0.0
        %2969 = vmatprep.subr.mxu0 0.0
        %2970 = vmatpush2.xpose.msra.mxu0 0.0
        %2971 = vmatprep.subr.mxu0 0.0
        %2972 = vmatpush2.xpose.msra.mxu0 0.0
        %2973 = vmatprep.subr.mxu0 0.0
        %2974 = vmatpush2.xpose.msra.mxu0 0.0
        %2975 = vmatprep.subr.mxu0 0.0
        %2976 = vmatpush2.xpose.msra.mxu0 0.0
        %2977 = vmatprep.subr.mxu0 0.0
        %2978 = vmatpush2.xpose.msra.mxu0 0.0
        %2979 = vmatprep.subr.mxu0 0.0
        %2980 = vmatpush2.xpose.msra.mxu0 0.0
        %2981 = vmatprep.subr.mxu0 0.0
        %2982 = vmatpush2.xpose.msra.mxu0 0.0
        %2983 = vmatprep.subr.mxu0 0.0
        %2984 = vmatpush2.xpose.msra.mxu0 0.0
        %2985 = vmatprep.subr.mxu0 0.0
        %2986 = vmatpush2.xpose.msra.mxu0 0.0
        %2987 = vmatprep.mubr.f32.mxu0 0.0
        %2988 = vmatmul.mubr.f32.gmra.mxu0 %v2919
        %v2989 = vpop.f32.mrf.mxu0
        %v2990 = vadd.f32 %v1226, %v2989
        %v2991 = vpop.f32.mrf.mxu0
        %2992 = vdwg.mxu0
        %v2993 = vsel %vm1328, %v2990, -inf
        %2994 = vmax.xlane.f32.xlu0 %v2993
        %v2995 = vpop.xlane.xlu0 %2994
        %v2996 = vsub.f32 %v2990, %v2995
        %v2997 = vmul.f32 %v2996, 1.442695
        %v2998 = vpow.pop %v2997
        %v2999 = vsel %vm1328, %v2998, 0.0
        %3000 = vadd.xlane.f32.xlu0 %v2999
        %v3001 = vpop.xlane.xlu0 %3000
        %v3002 = vrcp.pop %v3001
        %v3003 = vmul.f32 %v2998, %v3002
        %3004 = vrot.lane.b32.xlu0 %v2403, 40
        %v3005 = vpop.permute.xlu0 %3004
        %v3008 = vsel %vm1328, %v3003, 0
        %3010 = vmatprep.subr.mxu0 0.0
        %3011 = vmatpush1.msra.mxu0 0.0
        %3012 = vmatprep.subr.mxu0 0.0
        %3013 = vmatpush1.msra.mxu0 0.0
        %3014 = vmatprep.subr.mxu0 0.0
        %3015 = vmatpush1.msra.mxu0 0.0
        %3016 = vmatprep.subr.mxu0 0.0
        %3017 = vmatpush1.msra.mxu0 0.0
        %3018 = vmatprep.subr.mxu0 0.0
        %3019 = vmatpush1.msra.mxu0 0.0
        %3020 = vmatprep.subr.mxu0 0.0
        %3021 = vmatpush1.msra.mxu0 0.0
        %3022 = vmatprep.subr.mxu0 0.0
        %3023 = vmatpush1.msra.mxu0 0.0
        %3024 = vmatprep.subr.mxu0 0.0
        %3025 = vmatpush1.msra.mxu0 0.0
        %3026 = vmatprep.subr.mxu0 0.0
        %3027 = vmatpush1.msra.mxu0 0.0
        %3028 = vmatprep.subr.mxu0 0.0
        %3029 = vmatpush1.msra.mxu0 0.0
        %3030 = vmatprep.subr.mxu0 0.0
        %3031 = vmatpush1.msra.mxu0 0.0
        %3032 = vmatprep.subr.mxu0 0.0
        %3033 = vmatpush1.msra.mxu0 0.0
        %3034 = vmatprep.subr.mxu0 0.0
        %3035 = vmatpush1.msra.mxu0 0.0
        %3036 = vmatprep.subr.mxu0 0.0
        %3037 = vmatpush1.msra.mxu0 0.0
        %3038 = vmatprep.subr.mxu0 0.0
        %3039 = vmatpush1.msra.mxu0 0.0
        %3040 = vmatprep.subr.mxu0 0.0
        %3041 = vmatpush1.msra.mxu0 %v3005
        %3042 = vmatprep.subr.mxu0 0.0
        %3043 = vmatpush2.msra.mxu0 0.0
        %3044 = vmatprep.subr.mxu0 0.0
        %3045 = vmatpush2.msra.mxu0 0.0
        %3046 = vmatprep.subr.mxu0 0.0
        %3047 = vmatpush2.msra.mxu0 0.0
        %3048 = vmatprep.subr.mxu0 0.0
        %3049 = vmatpush2.msra.mxu0 0.0
        %3050 = vmatprep.subr.mxu0 0.0
        %3051 = vmatpush2.msra.mxu0 0.0
        %3052 = vmatprep.subr.mxu0 0.0
        %3053 = vmatpush2.msra.mxu0 0.0
        %3054 = vmatprep.subr.mxu0 0.0
        %3055 = vmatpush2.msra.mxu0 0.0
        %3056 = vmatprep.subr.mxu0 0.0
        %3057 = vmatpush2.msra.mxu0 0.0
        %3058 = vmatprep.subr.mxu0 0.0
        %3059 = vmatpush2.msra.mxu0 0.0
        %3060 = vmatprep.subr.mxu0 0.0
        %3061 = vmatpush2.msra.mxu0 0.0
        %3062 = vmatprep.subr.mxu0 0.0
        %3063 = vmatpush2.msra.mxu0 0.0
        %3064 = vmatprep.subr.mxu0 0.0
        %3065 = vmatpush2.msra.mxu0 0.0
        %3066 = vmatprep.subr.mxu0 0.0
        %3067 = vmatpush2.msra.mxu0 0.0
        %3068 = vmatprep.subr.mxu0 0.0
        %3069 = vmatpush2.msra.mxu0 0.0
        %3070 = vmatprep.subr.mxu0 0.0
        %3071 = vmatpush2.msra.mxu0 0.0
        %3072 = vmatprep.subr.mxu0 0.0
        %3073 = vmatpush2.msra.mxu0 0.0
        %3074 = vmatprep.mubr.f32.mxu0 0.0
        %3075 = vmatmul.mubr.f32.gmra.mxu0 %v3008
        %v3076 = vpop.f32.mrf.mxu0
        %v3077 = vadd.f32 0.0, %v3076
        %v3078 = vpop.f32.mrf.mxu0
        %3079 = vdwg.mxu0
        %3081 = vrot.lane.b32.xlu0 %v3077, 24
        %v3082 = vpop.permute.xlu0 %3081
        %3084 = vst.msk [vmem:[#allocation2] sm:$0xff] %vm2003, %v3082
        %v3085 = vld [vmem:[#allocation2] sm:$0xff]
        %s3086 = scalar_lea.vmem %s11, 16
        %v3087 = vld [vmem:[%s3086] sm:$0xf]
        %v3088 = vld [vmem:[%s3086 + $0x4] sm:$0xf]
        %v3089 = vld [vmem:[%s3086 + $0x8] sm:$0xf]
        %v3090 = vld [vmem:[%s3086 + $0xc] sm:$0xf]
        %v3091 = vpack.c.bf16 %v3085, %v3085
        %s3092 = scalar_lea.vmem %s12, 1
        %v3093 = vld [vmem:[%s3092] sm:$0x1]
        %v3095 = vlaneseq
        %v3096 = vshrl.u32 %v3095, 7
        %v3097 = vsub.s32 0, %v3096
        %v3098 = vrot.slane %v3093, %v3097
        %v3104 = vunpack.c.l.b16 %v3087
        %v3105 = vunpack.c.l.b16 %v3088
        %v3106 = vunpack.c.l.b16 %v3089
        %v3107 = vunpack.c.l.b16 %v3090
        %v3108 = vpack.c.b16 %v3105, %v3104
        %v3109 = vpack.c.b16 %v3107, %v3106
        %v3113 = vsel %vm1213, %v3091, 0
        %3115 = vmatprep.subr.bf16.mxu0 0
        %3116 = vmatpush1.bf16.msra.mxu0 0
        %3117 = vmatprep.subr.bf16.mxu0 0
        %3118 = vmatpush1.bf16.msra.mxu0 0
        %3119 = vmatprep.subr.bf16.mxu0 0
        %3120 = vmatpush1.bf16.msra.mxu0 0
        %3121 = vmatprep.subr.bf16.mxu0 0
        %3122 = vmatpush1.bf16.msra.mxu0 0
        %3123 = vmatprep.subr.bf16.mxu0 0
        %3124 = vmatpush1.bf16.msra.mxu0 0
        %3125 = vmatprep.subr.bf16.mxu0 0
        %3126 = vmatpush1.bf16.msra.mxu0 0
        %3127 = vmatprep.subr.bf16.mxu0 0
        %3128 = vmatpush1.bf16.msra.mxu0 %v3109
        %3129 = vmatprep.subr.bf16.mxu0 0
        %3130 = vmatpush1.bf16.msra.mxu0 %v3108
        %3131 = vmatprep.subr.bf16.mxu0 0
        %3132 = vmatpush2.bf16.msra.mxu0 0
        %3133 = vmatprep.subr.bf16.mxu0 0
        %3134 = vmatpush2.bf16.msra.mxu0 0
        %3135 = vmatprep.subr.bf16.mxu0 0
        %3136 = vmatpush2.bf16.msra.mxu0 0
        %3137 = vmatprep.subr.bf16.mxu0 0
        %3138 = vmatpush2.bf16.msra.mxu0 0
        %3139 = vmatprep.subr.bf16.mxu0 0
        %3140 = vmatpush2.bf16.msra.mxu0 0
        %3141 = vmatprep.subr.bf16.mxu0 0
        %3142 = vmatpush2.bf16.msra.mxu0 0
        %3143 = vmatprep.subr.bf16.mxu0 0
        %3144 = vmatpush2.bf16.msra.mxu0 0
        %3145 = vmatprep.subr.bf16.mxu0 0
        %3146 = vmatpush2.bf16.msra.mxu0 0
        %3147 = vmatprep.mubr.bf16.mxu0 0
        %3148 = vmatmul.mubr.bf16.gmra.mxu0 %v3113
        %v3149 = vpop.f32.mrf.mxu0
        %v3150 = vadd.f32 %v3098, %v3149
        %v3151 = vpop.f32.mrf.mxu0
        %v3152 = vpop.f32.mrf.mxu0
        %v3153 = vpop.f32.mrf.mxu0
        %3154 = vdwg.mxu0
        %s3155 = scalar_lea.vmem %s13, 1
        %v3156 = vld [vmem:[%s3155] sm:$0x1]
        %v3158 = vlaneseq
        %v3159 = vshrl.u32 %v3158, 7
        %v3160 = vsub.s32 0, %v3159
        %v3161 = vrot.slane %v3156, %v3160
        %v3163 = vmul.f32 %v3161, %v3150
        %v3164 = vadd.f32 %v2307, %v3163
        %s3165 = scalar_lea.vmem %s14, 1
        %v3166 = vld [vmem:[%s3165] sm:$0x1]
        %s3167 = scalar_lea.vmem %s15, 1
        %v3168 = vld [vmem:[%s3167] sm:$0x1]
        %v3169 = vsel %vm1213, %v3164, 0.0
        %3170 = vadd.xlane.f32.xlu0 %v3169
        %v3171 = vpop.xlane.xlu0 %3170
        %v3172 = vmul.f32 %v3171, %v1232
        %v3173 = vsub.f32 %v3164, %v3172
        %v3174 = vmul.f32 %v3173, %v3173
        %v3175 = vsel %vm1213, %v3174, 0.0
        %3176 = vadd.xlane.f32.xlu0 %v3175
        %v3177 = vpop.xlane.xlu0 %3176
        %v3178 = vmul.f32 %v3177, %v1232
        %v3179 = vadd.f32 %v3178, 1e-06
        %v3180 = vrsqrt.pop %v3179
        %v3181 = vmul.f32 %v3173, %v3180
        %v3183 = vlaneseq
        %v3184 = vshrl.u32 %v3183, 7
        %v3185 = vsub.s32 0, %v3184
        %v3186 = vrot.slane %v3166, %v3185
        %v3188 = vmul.f32 %v3181, %v3186
        %v3190 = vlaneseq
        %v3191 = vshrl.u32 %v3190, 7
        %v3192 = vsub.s32 0, %v3191
        %v3193 = vrot.slane %v3168, %v3192
        %v3195 = vadd.f32 %v3188, %v3193
        %s3196 = scalar_lea.vmem %s16, 16
        %v3197 = vld [vmem:[%s3196] sm:$0xf]
        %v3198 = vld [vmem:[%s3196 + $0x4] sm:$0xf]
        %v3199 = vld [vmem:[%s3196 + $0x8] sm:$0xf]
        %v3200 = vld [vmem:[%s3196 + $0xc] sm:$0xf]
        %v3201 = vpack.c.bf16 %v3195, %v3195
        %s3202 = scalar_lea.vmem %s17, 1
        %v3203 = vld [vmem:[%s3202] sm:$0x1]
        %v3205 = vlaneseq
        %v3206 = vshrl.u32 %v3205, 7
        %v3207 = vsub.s32 0, %v3206
        %v3208 = vrot.slane %v3203, %v3207
        %v3214 = vunpack.c.l.b16 %v3197
        %v3215 = vunpack.c.l.b16 %v3198
        %v3216 = vunpack.c.l.b16 %v3199
        %v3217 = vunpack.c.l.b16 %v3200
        %v3218 = vpack.c.b16 %v3215, %v3214
        %v3219 = vpack.c.b16 %v3217, %v3216
        %v3223 = vsel %vm1213, %v3201, 0
        %3225 = vmatprep.subr.bf16.mxu0 0
        %3226 = vmatpush1.bf16.msra.mxu0 0
        %3227 = vmatprep.subr.bf16.mxu0 0
        %3228 = vmatpush1.bf16.msra.mxu0 0
        %3229 = vmatprep.subr.bf16.mxu0 0
        %3230 = vmatpush1.bf16.msra.mxu0 0
        %3231 = vmatprep.subr.bf16.mxu0 0
        %3232 = vmatpush1.bf16.msra.mxu0 0
        %3233 = vmatprep.subr.bf16.mxu0 0
        %3234 = vmatpush1.bf16.msra.mxu0 0
        %3235 = vmatprep.subr.bf16.mxu0 0
        %3236 = vmatpush1.bf16.msra.mxu0 0
        %3237 = vmatprep.subr.bf16.mxu0 0
        %3238 = vmatpush1.bf16.msra.mxu0 %v3219
        %3239 = vmatprep.subr.bf16.mxu0 0
        %3240 = vmatpush1.bf16.msra.mxu0 %v3218
        %3241 = vmatprep.subr.bf16.mxu0 0
        %3242 = vmatpush2.bf16.msra.mxu0 0
        %3243 = vmatprep.subr.bf16.mxu0 0
        %3244 = vmatpush2.bf16.msra.mxu0 0
        %3245 = vmatprep.subr.bf16.mxu0 0
        %3246 = vmatpush2.bf16.msra.mxu0 0
        %3247 = vmatprep.subr.bf16.mxu0 0
        %3248 = vmatpush2.bf16.msra.mxu0 0
        %3249 = vmatprep.subr.bf16.mxu0 0
        %3250 = vmatpush2.bf16.msra.mxu0 0
        %3251 = vmatprep.subr.bf16.mxu0 0
        %3252 = vmatpush2.bf16.msra.mxu0 0
        %3253 = vmatprep.subr.bf16.mxu0 0
        %3254 = vmatpush2.bf16.msra.mxu0 0
        %3255 = vmatprep.subr.bf16.mxu0 0
        %3256 = vmatpush2.bf16.msra.mxu0 0
        %3257 = vmatprep.mubr.bf16.mxu0 0
        %3258 = vmatmul.mubr.bf16.gmra.mxu0 %v3223
        %v3259 = vpop.f32.mrf.mxu0
        %v3260 = vadd.f32 %v3208, %v3259
        %v3261 = vpop.f32.mrf.mxu0
        %v3262 = vpop.f32.mrf.mxu0
        %v3263 = vpop.f32.mrf.mxu0
        %3264 = vdwg.mxu0
        %v3265 = vmul.f32 %v3260, %v3260
        %v3266 = vmul.f32 %v3260, %v3265
        %v3267 = vmul.f32 %v3266, 0.044715
        %v3268 = vadd.f32 %v3260, %v3267
        %v3269 = vmul.f32 %v3268, 0.7978846
        %v3270 = vtanh.pop %v3269
        %v3271 = vadd.f32 %v3270, 1.0
        %v3272 = vmul.f32 %v3271, 0.5
        %v3273 = vmul.f32 %v3260, %v3272
        %s3274 = scalar_lea.vmem %s18, 64
        %v3275 = vld [vmem:[%s3274] sm:$0xf]
        %v3276 = vld [vmem:[%s3274 + $0x4] sm:$0xf]
        %v3277 = vld [vmem:[%s3274 + $0x8] sm:$0xf]
        %v3278 = vld [vmem:[%s3274 + $0xc] sm:$0xf]
        %v3279 = vld [vmem:[%s3274 + $0x10] sm:$0xf]
        %v3280 = vld [vmem:[%s3274 + $0x14] sm:$0xf]
        %v3281 = vld [vmem:[%s3274 + $0x18] sm:$0xf]
        %v3282 = vld [vmem:[%s3274 + $0x1c] sm:$0xf]
        %v3283 = vld [vmem:[%s3274 + $0x20] sm:$0xf]
        %v3284 = vld [vmem:[%s3274 + $0x24] sm:$0xf]
        %v3285 = vld [vmem:[%s3274 + $0x28] sm:$0xf]
        %v3286 = vld [vmem:[%s3274 + $0x2c] sm:$0xf]
        %v3287 = vld [vmem:[%s3274 + $0x30] sm:$0xf]
        %v3288 = vld [vmem:[%s3274 + $0x34] sm:$0xf]
        %v3289 = vld [vmem:[%s3274 + $0x38] sm:$0xf]
        %v3290 = vld [vmem:[%s3274 + $0x3c] sm:$0xf]
        %v3291 = vpack.c.bf16 %v3273, %v3273
        %s3292 = scalar_lea.vmem %s19, 1
        %v3293 = vld [vmem:[%s3292] sm:$0x1]
        %v3295 = vlaneseq
        %v3296 = vshrl.u32 %v3295, 7
        %v3297 = vsub.s32 0, %v3296
        %v3298 = vrot.slane %v3293, %v3297
        %v3316 = vunpack.c.l.b16 %v3275
        %v3317 = vunpack.c.l.b16 %v3276
        %v3318 = vunpack.c.l.b16 %v3277
        %v3319 = vunpack.c.l.b16 %v3278
        %v3320 = vunpack.c.l.b16 %v3279
        %v3321 = vunpack.c.l.b16 %v3280
        %v3322 = vunpack.c.l.b16 %v3281
        %v3323 = vunpack.c.l.b16 %v3282
        %v3324 = vunpack.c.l.b16 %v3283
        %v3325 = vunpack.c.l.b16 %v3284
        %v3326 = vunpack.c.l.b16 %v3285
        %v3327 = vunpack.c.l.b16 %v3286
        %v3328 = vunpack.c.l.b16 %v3287
        %v3329 = vunpack.c.l.b16 %v3288
        %v3330 = vunpack.c.l.b16 %v3289
        %v3331 = vunpack.c.l.b16 %v3290
        %v3332 = vpack.c.b16 %v3317, %v3316
        %v3333 = vpack.c.b16 %v3319, %v3318
        %v3334 = vpack.c.b16 %v3321, %v3320
        %v3335 = vpack.c.b16 %v3323, %v3322
        %v3336 = vpack.c.b16 %v3325, %v3324
        %v3337 = vpack.c.b16 %v3327, %v3326
        %v3338 = vpack.c.b16 %v3329, %v3328
        %v3339 = vpack.c.b16 %v3331, %v3330
        %3348 = vmatprep.subr.bf16.mxu0 0
        %3349 = vmatpush1.bf16.msra.mxu0 %v3339
        %3350 = vmatprep.subr.bf16.mxu0 0
        %3351 = vmatpush1.bf16.msra.mxu0 %v3338
        %3352 = vmatprep.subr.bf16.mxu0 0
        %3353 = vmatpush1.bf16.msra.mxu0 %v3337
        %3354 = vmatprep.subr.bf16.mxu0 0
        %3355 = vmatpush1.bf16.msra.mxu0 %v3336
        %3356 = vmatprep.subr.bf16.mxu0 0
        %3357 = vmatpush1.bf16.msra.mxu0 %v3335
        %3358 = vmatprep.subr.bf16.mxu0 0
        %3359 = vmatpush1.bf16.msra.mxu0 %v3334
        %3360 = vmatprep.subr.bf16.mxu0 0
        %3361 = vmatpush1.bf16.msra.mxu0 %v3333
        %3362 = vmatprep.subr.bf16.mxu0 0
        %3363 = vmatpush1.bf16.msra.mxu0 %v3332
        %3364 = vmatprep.subr.bf16.mxu0 0
        %3365 = vmatpush2.bf16.msra.mxu0 0
        %3366 = vmatprep.subr.bf16.mxu0 0
        %3367 = vmatpush2.bf16.msra.mxu0 0
        %3368 = vmatprep.subr.bf16.mxu0 0
        %3369 = vmatpush2.bf16.msra.mxu0 0
        %3370 = vmatprep.subr.bf16.mxu0 0
        %3371 = vmatpush2.bf16.msra.mxu0 0
        %3372 = vmatprep.subr.bf16.mxu0 0
        %3373 = vmatpush2.bf16.msra.mxu0 0
        %3374 = vmatprep.subr.bf16.mxu0 0
        %3375 = vmatpush2.bf16.msra.mxu0 0
        %3376 = vmatprep.subr.bf16.mxu0 0
        %3377 = vmatpush2.bf16.msra.mxu0 0
        %3378 = vmatprep.subr.bf16.mxu0 0
        %3379 = vmatpush2.bf16.msra.mxu0 0
        %3380 = vmatprep.mubr.bf16.mxu0 0
        %3381 = vmatmul.mubr.bf16.gmra.mxu0 %v3291
        %v3382 = vpop.f32.mrf.mxu0
        %v3383 = vadd.f32 %v3298, %v3382
        %v3384 = vpop.f32.mrf.mxu0
        %v3385 = vpop.f32.mrf.mxu0
        %v3386 = vpop.f32.mrf.mxu0
        %3387 = vdwg.mxu0
        %s3388 = scalar_lea.vmem %s20, 1
        %v3389 = vld [vmem:[%s3388] sm:$0x1]
        %v3391 = vlaneseq
        %v3392 = vshrl.u32 %v3391, 7
        %v3393 = vsub.s32 0, %v3392
        %v3394 = vrot.slane %v3389, %v3393
        %v3396 = vmul.f32 %v3394, %v3383
        %v3397 = vadd.f32 %v3164, %v3396
        %v3398 = vld [vmem:[%s21] sm:$0x1]
        %v3399 = vld [vmem:[%s22] sm:$0x1]
        %v3400 = vsel %vm1216, %v3397, 0.0
        %3401 = vadd.xlane.f32.xlu0 %v3400
        %v3402 = vpop.xlane.xlu0 %3401
        %v3403 = vmul.f32 %v3402, %v1232
        %v3404 = vsub.f32 %v3397, %v3403
        %v3405 = vmul.f32 %v3404, %v3404
        %v3406 = vsel %vm1216, %v3405, 0.0
        %3407 = vadd.xlane.f32.xlu0 %v3406
        %v3408 = vpop.xlane.xlu0 %3407
        %v3409 = vmul.f32 %v3408, %v1232
        %v3410 = vadd.f32 %v3409, 1e-06
        %v3411 = vrsqrt.pop %v3410
        %v3412 = vmul.f32 %v3404, %v3411
        %v3413 = vmul.f32 %v3412, %v3398
        %v3414 = vadd.f32 %v3413, %v3399
        %3415 = vst.msk [vmem:[%s702] sm:$0x1] %vm1216, %v3414
        %s3416 = sand.u32 %s533, 1
        %s3417 = scalar_lea.sflag [#allocation4], %s3416
        %s3418 = sand.u32 %s533, 1
        %s3419 = scalar_lea.vmem [#allocation3], %s3418
        // Predicated region
        $region113: #{dinov2_forward.1} parent=111 // pred_check
          %p3420 = pneg %p543
        $region114: #{dinov2_forward.1} parent=111 // pred_check_branch
          %3422 = sbr.rel (%p3420) target = $region116
        $region115: #{dinov2_forward.1} parent=111 // pred_region
          %s3424 = ssub.s32 16, 16
          %3425 = vsyncadd %s3417, %s3424
          %s3426 = smul.addr %s37, 16
          %s3427 = scalar_lea.hbm %s23, %s3426
          %s3429 = sshll.u32 %s3419, 4
          %s3430 = int_to_ptr.vmem [resolvable:$true] %s3429
          %3432 = dma.vmem_to_hbm [thread:$0]  %s3430, 16, %s3427, %s3417
        $region116: #{dinov2_forward.1} parent=111 // pred_fallthru
          _
      $region112: #{dinov2_forward.1} parent=5 // pred_fallthru
        _
      %p3433 = scmp.le.s32.totalorder 2, %s32
      // Predicated region
      $region117: #{dinov2_forward.1} parent=5 // pred_check
        %p3434 = pneg %p3433
      $region118: #{dinov2_forward.1} parent=5 // pred_check_branch
        %3436 = sbr.rel (%p3434) target = $region120
      $region119: #{dinov2_forward.1} parent=5 // pred_region
        %s3437 = ssub.s32 %s32, 2
        // Predicated region
        $region121: #{dinov2_forward.1} parent=119 // pred_check
          %p3438 = pneg %p549
        $region122: #{dinov2_forward.1} parent=119 // pred_check_branch
          %3440 = sbr.rel (%p3438) target = $region124
        $region123: #{dinov2_forward.1} parent=119 // pred_region
          %s3441 = sand.u32 %s534, 1
          %s3442 = scalar_lea.sflag [#allocation4], %s3441
          %s3443 = sand.u32 %s534, 1
          %s3444 = scalar_lea.vmem [#allocation3], %s3443
          %3445 = dma.done %s3442, 16
        $region124: #{dinov2_forward.1} parent=119 // pred_fallthru
          _
      $region120: #{dinov2_forward.1} parent=5 // pred_fallthru
        _
    $region6: #{dinov2_forward.1} parent=1 // loop_footer
      %s36 = sadd.s32 1, %s32
    $region7: #{dinov2_forward.1} parent=1 // loop_footer_branch
      %31 = sbr.rel target = $region3
    $region8: #{dinov2_forward.1} parent=1 // loop_exit
      _
    %3446 = vsyncpa [#allocation4], 1
    %s3447 = scalar_lea.sflag [#allocation4], 1
    %3448 = vsyncpa %s3447, 1

</llo_original>
